<compile_context>
chip_gen: v6e
topology: v6e:2x2x1
jax: 0.10.0
libtpu: 0.0.40
codegen_flags: <defaults>
</compile_context>

<pallas_src>
import functools

import jax
import jax.numpy as jnp
from jax.experimental import pallas as pl
from jax.experimental.pallas import tpu as pltpu

NUM_CLASSES = 21
LAST_CH = 279            # last_inp_channels for UHRNet_W18_Small
C_HID = 384              # LAST_CH padded to a lane-friendly width (3 * 128)
C_CLS = 32               # NUM_CLASSES padded to a sublane-friendly width
STRIDE = 4               # backbone output stride (features at 1/4 resolution)
BN_EPS = 1e-5


# ----------------------------------------------------------------------------
# Hardware query / VMEM budgeting
# ----------------------------------------------------------------------------
def _vmem_capacity_bytes():
    try:
        return int(pltpu.get_tpu_info().vmem_capacity_bytes)
    except Exception:
        return 64 << 20   # conservative default (v7x per-TC VMEM)


def _head_vmem_budget(p_dim, thw):
    bf, f32 = 2, 4
    x_blk = p_dim * thw * bf
    out_blk = C_CLS * thw * bf
    weights = (C_HID * p_dim + C_HID * C_HID + C_CLS * C_HID) * bf \
              + (2 * C_HID + C_CLS) * f32
    inter = 2 * C_HID * thw * (f32 + bf)      # feat & hid (f32 + bf16 copies)
    return 2 * (x_blk + out_blk + weights) + inter + (8 << 20)


def _upsample_vmem_budget(h, w, h_full, wb, cg, out_bytes):
    bf, f32 = 2, 4
    lg_blk = cg * h * w * bf
    out_blk = cg * h_full * wb * out_bytes
    weights = w * wb * bf + h_full * h * bf
    inter = 2 * h * wb * (f32 + bf)           # per-class row-interp intermediate
    return 2 * (lg_blk + out_blk + weights) + inter + (8 << 20)


def _pick_spatial_tile(hw, vmem_capacity):
    """Head spatial tile + padded hw. 8192 on 128 MiB chips, 4096 on v7x (64 MiB)."""
    max_tile = 8192 if vmem_capacity >= (100 << 20) else 4096
    if hw <= max_tile:
        return hw, hw
    tile = max_tile                                   # multiple of 128
    hw_pad = ((hw + tile - 1) // tile) * tile
    return tile, hw_pad


def _pick_upsample_tiling(h, w, h_full, w_full, out_bytes, vmem_capacity):
    """Pick (classes-per-step, W tile) that fits VMEM with lane-dense stores."""
    if w_full % 128 == 0:
        wb_opts = [wb for wb in (1024, 768, 512, 384, 256, 128)
                   if w_full % wb == 0 and wb < w_full]
    else:
        wb_opts = []
    wb_opts = wb_opts or [w_full]
    budget_cap = int(vmem_capacity * 0.9)
    for cg in (7, 3, 1):                              # divisors of 21
        for wb in wb_opts:
            if _upsample_vmem_budget(h, w, h_full, wb, cg, out_bytes) <= budget_cap:
                return cg, wb
    return 1, wb_opts[-1]


# ----------------------------------------------------------------------------
# Kernel 1: head (projection + ConvBnReLU + cls) in channel-major layout.
#   activations are (C, spatial) so the lane dim is the (large) spatial axis.
# ----------------------------------------------------------------------------
def _head_kernel(x_ref, wp_ref, bp_ref, w1_ref, b1_ref, w2_ref, b2_ref, o_ref):
    x = x_ref[0]                                                   # (P, thw) bf16
    feat = jnp.dot(wp_ref[...], x, preferred_element_type=jnp.float32) + bp_ref[...]
    feat = jnp.maximum(feat, 0.0).astype(jnp.bfloat16)             # (384, thw)
    hid = jnp.dot(w1_ref[...], feat, preferred_element_type=jnp.float32) + b1_ref[...]
    hid = jnp.maximum(hid, 0.0).astype(jnp.bfloat16)               # (384, thw)
    logits = jnp.dot(w2_ref[...], hid, preferred_element_type=jnp.float32) + b2_ref[...]
    o_ref[0] = logits.astype(jnp.bfloat16)                         # (32, thw)


# ----------------------------------------------------------------------------
# Kernel 2: separable align_corners bilinear upsample.
#   One (batch, class-group, W-tile) per grid step; per class two rank-2 matmuls
#   (h,w)@(w,Wb) then (H,h)@(h,Wb), written directly in NCHW layout.
# ----------------------------------------------------------------------------
def _upsample_kernel(lg_ref, wxT_ref, wy_ref, o_ref, *, cg):
    wxT = wxT_ref[...]                                             # (w, Wb) bf16
    wy = wy_ref[...]                                               # (H, h) bf16
    for c in range(cg):
        a = jnp.dot(lg_ref[0, c], wxT, preferred_element_type=jnp.float32)   # (h, Wb)
        o_ref[0, c] = jnp.dot(wy, a.astype(jnp.bfloat16),
                              preferred_element_type=jnp.float32
                              ).astype(o_ref.dtype)                # (H, Wb)


# ----------------------------------------------------------------------------
# Bilinear (align_corners=True) 1-D interpolation matrix.
# ----------------------------------------------------------------------------
def _bilinear_axis_matrix(out_size, in_size):
    if out_size == 1 or in_size == 1:
        # TODO(synk): degenerate-size semantics of F.interpolate not fully matched.
        return jnp.zeros((out_size, in_size), jnp.float32).at[:, 0].set(1.0)
    src = jnp.arange(out_size, dtype=jnp.float32) * (in_size - 1) / (out_size - 1)
    i0 = jnp.clip(jnp.floor(src).astype(jnp.int32), 0, in_size - 2)
    frac = src - i0.astype(jnp.float32)
    rows = jnp.arange(out_size)
    mat = jnp.zeros((out_size, in_size), jnp.float32)
    mat = mat.at[rows, i0].add(1.0 - frac)
    mat = mat.at[rows, i0 + 1].add(frac)
    return mat


# ----------------------------------------------------------------------------
# Parameters (deterministic synthetic init; BatchNorm folded into conv_1).
# ----------------------------------------------------------------------------
def init_params(key, c_in):
    ks = jax.random.split(key, 10)
    wp = 0.10 * jax.random.normal(ks[0], (c_in, LAST_CH), jnp.float32)
    bp = 0.10 * jax.random.normal(ks[1], (LAST_CH,), jnp.float32)

    w1 = 0.05 * jax.random.normal(ks[2], (LAST_CH, LAST_CH), jnp.float32)
    b1 = 0.05 * jax.random.normal(ks[3], (LAST_CH,), jnp.float32)
    gamma = 1.0 + 0.10 * jax.random.normal(ks[4], (LAST_CH,), jnp.float32)
    beta = 0.10 * jax.random.normal(ks[5], (LAST_CH,), jnp.float32)
    rmean = 0.10 * jax.random.normal(ks[6], (LAST_CH,), jnp.float32)
    rvar = jnp.abs(jax.random.normal(ks[7], (LAST_CH,), jnp.float32)) + 0.5

    scale = gamma / jnp.sqrt(rvar + BN_EPS)
    w1_folded = w1 * scale[None, :]
    b1_folded = (b1 - rmean) * scale + beta

    w2 = 0.05 * jax.random.normal(ks[8], (LAST_CH, NUM_CLASSES), jnp.float32)
    b2 = 0.05 * jax.random.normal(ks[9], (NUM_CLASSES,), jnp.float32)

    return dict(wp=wp, bp=bp, w1=w1_folded, b1=b1_folded, w2=w2, b2=b2)


def _pad_to(a, shape):
    return jnp.pad(a, [(0, s - d) for s, d in zip(shape, a.shape)])


def _pack_params(params, c_in):
    """Transpose, fold the 4x4 avg-pool into wp, pad channels, cast to bf16."""
    pp = STRIDE * STRIDE
    p_dim = pp * c_in
    # patch layout is (ci, dy, dx) flattened -> each of the 16 positions gets wp/16.
    wp_t = jnp.repeat(params["wp"].T / float(pp), pp, axis=1)          # (279, 16*c_in)
    wp_t = _pad_to(wp_t, (C_HID, p_dim)).astype(jnp.bfloat16)
    bp = _pad_to(params["bp"], (C_HID,)).reshape(C_HID, 1).astype(jnp.float32)
    w1_t = _pad_to(params["w1"].T, (C_HID, C_HID)).astype(jnp.bfloat16)
    b1 = _pad_to(params["b1"], (C_HID,)).reshape(C_HID, 1).astype(jnp.float32)
    w2_t = _pad_to(params["w2"].T, (C_CLS, C_HID)).astype(jnp.bfloat16)
    b2 = _pad_to(params["b2"], (C_CLS,)).reshape(C_CLS, 1).astype(jnp.float32)
    return wp_t, bp, w1_t, b1, w2_t, b2


# ----------------------------------------------------------------------------
# Forward wrapper (NCHW in, NCHW out — no full-resolution transposes).
# ----------------------------------------------------------------------------
def uhrnet_forward(x_nchw, params, out_dtype=jnp.bfloat16):
    n, c_in, h_full, w_full = x_nchw.shape
    assert h_full % STRIDE == 0 and w_full % STRIDE == 0
    h, w = h_full // STRIDE, w_full // STRIDE
    hw = h * w
    p_dim = c_in * STRIDE * STRIDE

    vmem_cap = _vmem_capacity_bytes()

    # Space-to-depth patches, channel-major, spatial last (lane-dense).  Cast to bf16
    # BEFORE the transpose to halve its HBM traffic; the 4x4 average pool is folded
    # into wp, so no separate pooling pass over HBM.
    xp = x_nchw.astype(jnp.bfloat16).reshape(n, c_in, h, STRIDE, w, STRIDE)
    xp = jnp.transpose(xp, (0, 1, 3, 5, 2, 4)).reshape(n, p_dim, hw)

    thw, hw_pad = _pick_spatial_tile(hw, vmem_cap)
    if hw_pad != hw:
        xp = jnp.pad(xp, ((0, 0), (0, 0), (0, hw_pad - hw)))
    n_t = hw_pad // thw

    wp_t, bp, w1_t, b1, w2_t, b2 = _pack_params(params, c_in)

    head_vmem = int(max(16 << 20, min(_head_vmem_budget(p_dim, thw), vmem_cap)))

    logits = pl.pallas_call(
        _head_kernel,
        out_shape=jax.ShapeDtypeStruct((n, C_CLS, hw_pad), jnp.bfloat16),
        grid_spec=pltpu.PrefetchScalarGridSpec(
            num_scalar_prefetch=0,
            grid=(n, n_t),
            in_specs=[
                pl.BlockSpec((1, p_dim, thw), lambda b, t: (b, 0, t)),
                pl.BlockSpec((C_HID, p_dim), lambda b, t: (0, 0)),
                pl.BlockSpec((C_HID, 1), lambda b, t: (0, 0)),
                pl.BlockSpec((C_HID, C_HID), lambda b, t: (0, 0)),
                pl.BlockSpec((C_HID, 1), lambda b, t: (0, 0)),
                pl.BlockSpec((C_CLS, C_HID), lambda b, t: (0, 0)),
                pl.BlockSpec((C_CLS, 1), lambda b, t: (0, 0)),
            ],
            out_specs=pl.BlockSpec((1, C_CLS, thw), lambda b, t: (b, 0, t)),
        ),
        compiler_params=pltpu.CompilerParams(
            dimension_semantics=("parallel", "parallel"),
            vmem_limit_bytes=head_vmem),
    )(xp, wp_t, bp, w1_t, b1, w2_t, b2)

    if hw_pad != hw:
        logits = logits[:, :, :hw]
    # Free metadata reshape for the upsample kernel's 2-D spatial view.
    lg4 = logits.reshape(n, C_CLS, h, w)

    wy = _bilinear_axis_matrix(h_full, h).astype(jnp.bfloat16)     # (H, h)
    wxT = _bilinear_axis_matrix(w_full, w).T.astype(jnp.bfloat16)  # (w, W)

    out_bytes = jnp.dtype(out_dtype).itemsize
    cg, wb = _pick_upsample_tiling(h, w, h_full, w_full, out_bytes, vmem_cap)
    n_g = NUM_CLASSES // cg
    n_wt = w_full // wb
    up_vmem = int(max(16 << 20,
                      min(_upsample_vmem_budget(h, w, h_full, wb, cg, out_bytes),
                          vmem_cap)))

    out = pl.pallas_call(
        functools.partial(_upsample_kernel, cg=cg),
        out_shape=jax.ShapeDtypeStruct((n, NUM_CLASSES, h_full, w_full), out_dtype),
        grid_spec=pltpu.PrefetchScalarGridSpec(
            num_scalar_prefetch=0,
            grid=(n, n_g, n_wt),
            in_specs=[
                pl.BlockSpec((1, cg, h, w), lambda b, g, wt: (b, g, 0, 0)),
                pl.BlockSpec((w, wb), lambda b, g, wt: (0, wt)),
                pl.BlockSpec((h_full, h), lambda b, g, wt: (0, 0)),
            ],
            out_specs=pl.BlockSpec((1, cg, h_full, wb),
                                   lambda b, g, wt: (b, g, 0, wt)),
        ),
        compiler_params=pltpu.CompilerParams(
            dimension_semantics=("parallel", "parallel", "parallel"),
            vmem_limit_bytes=up_vmem),
    )(lg4, wxT, wy)

    return out  # already NCHW


# ----------------------------------------------------------------------------
# Pure-JAX f32 reference of the same computation (sanity check).
# ----------------------------------------------------------------------------
def _reference_forward(x_nchw, params):
    n, c_in, h_full, w_full = x_nchw.shape
    h, w = h_full // STRIDE, w_full // STRIDE
    x = x_nchw.astype(jnp.float32)
    pooled = x.reshape(n, c_in, h, STRIDE, w, STRIDE).mean(axis=(3, 5))
    xp = jnp.transpose(pooled.reshape(n, c_in, h * w), (0, 2, 1))      # (n, hw, c)
    feat = jnp.maximum(xp @ params["wp"] + params["bp"], 0.0)
    hid = jnp.maximum(feat @ params["w1"] + params["b1"], 0.0)
    logits = hid @ params["w2"] + params["b2"]                          # (n, hw, 21)
    lg = jnp.transpose(logits, (0, 2, 1)).reshape(n, NUM_CLASSES, h, w)
    wy = _bilinear_axis_matrix(h_full, h)
    wx = _bilinear_axis_matrix(w_full, w)
    return jnp.einsum("Yy,ncyx,Xx->ncYX", wy, lg, wx,
                      precision=jax.lax.Precision.HIGHEST)


if __name__ == "__main__":
    key = jax.random.PRNGKey(0)
    k_x, k_p = jax.random.split(key)

    x = jax.random.normal(k_x, (2, 4, 16, 16), jnp.float32)   # NCHW
    params = init_params(k_p, c_in=4)

    fwd = jax.jit(uhrnet_forward)
    y = jax.block_until_ready(fwd(x, params))
    assert y.shape == (2, NUM_CLASSES, 16, 16), y.shape

    y_ref = jax.block_until_ready(_reference_forward(x, params))
    max_err = float(jnp.max(jnp.abs(y.astype(jnp.float32) - y_ref)))
    assert jnp.allclose(y.astype(jnp.float32), y_ref, rtol=3e-2, atol=3e-2), max_err

    print("KERNEL_OK")
</pallas_src>

<mosaic_0001>
module attributes {stable_mosaic.version = 11 : i64} {
  func.func private @main(%arg0: i32) attributes {dimension_semantics = [#tpu.dimension_semantics<core_parallel>], iteration_bounds = array<i64: 2>, tpu.core_type = #tpu.core_type<sc_scalar_subcore>, window_params = []} {
    return
  }
}

module attributes {stable_mosaic.version = 11 : i64} {
  func.func private @main(%arg0: i32) attributes {dimension_semantics = [#tpu.dimension_semantics<core_parallel>], iteration_bounds = array<i64: 2>, tpu.core_type = #tpu.core_type<sc_scalar_subcore>, window_params = []} {
    return
  }
}

module attributes {stable_mosaic.version = 11 : i64} {
  func.func @_head_kernel(%arg0: i32, %arg1: i32, %arg2: memref<1x64x16xbf16, #tpu.memory_space<vmem>>, %arg3: memref<384x64xbf16, #tpu.memory_space<vmem>>, %arg4: memref<384x1xf32, #tpu.memory_space<vmem>>, %arg5: memref<384x384xbf16, #tpu.memory_space<vmem>>, %arg6: memref<384x1xf32, #tpu.memory_space<vmem>>, %arg7: memref<32x384xbf16, #tpu.memory_space<vmem>>, %arg8: memref<32x1xf32, #tpu.memory_space<vmem>>, %arg9: memref<1x32x16xbf16, #tpu.memory_space<vmem>>) attributes {dimension_semantics = [#tpu.dimension_semantics<parallel>, #tpu.dimension_semantics<parallel>], iteration_bounds = array<i64: 2, 1>, scalar_prefetch = 0 : i64, scratch_operands = 0 : i64, tpu.core_type = #tpu.core_type<tc>, window_params = [{transform_indices = @transform_0, window_bounds = array<i64: 1, 64, 16>}, {pipeline_mode = #tpu.pipeline_mode<synchronous>, transform_indices = @transform_1, window_bounds = array<i64: 384, 64>}, {pipeline_mode = #tpu.pipeline_mode<synchronous>, transform_indices = @transform_2, window_bounds = array<i64: 384, 1>}, {pipeline_mode = #tpu.pipeline_mode<synchronous>, transform_indices = @transform_3, window_bounds = array<i64: 384, 384>}, {pipeline_mode = #tpu.pipeline_mode<synchronous>, transform_indices = @transform_4, window_bounds = array<i64: 384, 1>}, {pipeline_mode = #tpu.pipeline_mode<synchronous>, transform_indices = @transform_5, window_bounds = array<i64: 32, 384>}, {pipeline_mode = #tpu.pipeline_mode<synchronous>, transform_indices = @transform_6, window_bounds = array<i64: 32, 1>}, {transform_indices = @transform_7, window_bounds = array<i64: 1, 32, 16>}]} {
    %c0 = arith.constant 0 : index
    %c0_0 = arith.constant 0 : index
    %c0_1 = arith.constant 0 : index
    %0 = vector.load %arg2[%c0, %c0_0, %c0_1] : memref<1x64x16xbf16, #tpu.memory_space<vmem>>, vector<1x64x16xbf16>
    %1 = vector.shape_cast %0 : vector<1x64x16xbf16> to vector<64x16xbf16>
    %c0_2 = arith.constant 0 : index
    %c0_3 = arith.constant 0 : index
    %2 = vector.load %arg3[%c0_2, %c0_3] : memref<384x64xbf16, #tpu.memory_space<vmem>>, vector<384x64xbf16>
    %cst = arith.constant dense<0.000000e+00> : vector<384x16xf32>
    %3 = tpu.matmul %2, %1, %cst {dimension_numbers = #tpu.dot_dimension_numbers<[1], [0], [0], [1], [0, 0, 1, 1], [], []>} : vector<384x64xbf16>, vector<64x16xbf16>, vector<384x16xf32> -> vector<384x16xf32>
    %c0_4 = arith.constant 0 : index
    %c0_5 = arith.constant 0 : index
    %4 = vector.load %arg4[%c0_4, %c0_5] : memref<384x1xf32, #tpu.memory_space<vmem>>, vector<384x1xf32>
    %5 = vector.broadcast %4 : vector<384x1xf32> to vector<384x16xf32>
    %6 = arith.addf %3, %5 : vector<384x16xf32>
    %cst_6 = arith.constant 0.000000e+00 : f32
    %7 = vector.broadcast %cst_6 : f32 to vector<384x16xf32>
    %8 = arith.maximumf %6, %7 : vector<384x16xf32>
    %9 = arith.truncf %8 : vector<384x16xf32> to vector<384x16xbf16>
    %c0_7 = arith.constant 0 : index
    %c0_8 = arith.constant 0 : index
    %10 = vector.load %arg5[%c0_7, %c0_8] : memref<384x384xbf16, #tpu.memory_space<vmem>>, vector<384x384xbf16>
    %cst_9 = arith.constant dense<0.000000e+00> : vector<384x16xf32>
    %11 = tpu.matmul %10, %9, %cst_9 {dimension_numbers = #tpu.dot_dimension_numbers<[1], [0], [0], [1], [0, 0, 1, 1], [], []>} : vector<384x384xbf16>, vector<384x16xbf16>, vector<384x16xf32> -> vector<384x16xf32>
    %c0_10 = arith.constant 0 : index
    %c0_11 = arith.constant 0 : index
    %12 = vector.load %arg6[%c0_10, %c0_11] : memref<384x1xf32, #tpu.memory_space<vmem>>, vector<384x1xf32>
    %13 = vector.broadcast %12 : vector<384x1xf32> to vector<384x16xf32>
    %14 = arith.addf %11, %13 : vector<384x16xf32>
    %cst_12 = arith.constant 0.000000e+00 : f32
    %15 = vector.broadcast %cst_12 : f32 to vector<384x16xf32>
    %16 = arith.maximumf %14, %15 : vector<384x16xf32>
    %17 = arith.truncf %16 : vector<384x16xf32> to vector<384x16xbf16>
    %c0_13 = arith.constant 0 : index
    %c0_14 = arith.constant 0 : index
    %18 = vector.load %arg7[%c0_13, %c0_14] : memref<32x384xbf16, #tpu.memory_space<vmem>>, vector<32x384xbf16>
    %cst_15 = arith.constant dense<0.000000e+00> : vector<32x16xf32>
    %19 = tpu.matmul %18, %17, %cst_15 {dimension_numbers = #tpu.dot_dimension_numbers<[1], [0], [0], [1], [0, 0, 1, 1], [], []>} : vector<32x384xbf16>, vector<384x16xbf16>, vector<32x16xf32> -> vector<32x16xf32>
    %c0_16 = arith.constant 0 : index
    %c0_17 = arith.constant 0 : index
    %20 = vector.load %arg8[%c0_16, %c0_17] : memref<32x1xf32, #tpu.memory_space<vmem>>, vector<32x1xf32>
    %21 = vector.broadcast %20 : vector<32x1xf32> to vector<32x16xf32>
    %22 = arith.addf %19, %21 : vector<32x16xf32>
    %23 = arith.truncf %22 : vector<32x16xf32> to vector<32x16xbf16>
    %c0_18 = arith.constant 0 : index
    %c0_19 = arith.constant 0 : index
    %c0_20 = arith.constant 0 : index
    %24 = vector.load %arg9[%c0_18, %c0_19, %c0_20] : memref<1x32x16xbf16, #tpu.memory_space<vmem>>, vector<1x32x16xbf16>
    %25 = vector.shape_cast %24 : vector<1x32x16xbf16> to vector<32x16xbf16>
    %26 = vector.shape_cast %23 : vector<32x16xbf16> to vector<1x32x16xbf16>
    tpu.vector_store %arg9[%c0_18, %c0_19, %c0_20], %26 {strides = array<i32>} : memref<1x32x16xbf16, #tpu.memory_space<vmem>>, vector<1x32x16xbf16>,
    return
  }
  func.func @transform_0(%arg0: i32, %arg1: i32) -> (i32, i32, i32) {
    %c0_i32 = arith.constant 0 : i32
    %c0_i32_0 = arith.constant 0 : i32
    return %arg0, %c0_i32, %arg1 : i32, i32, i32
  }
  func.func @transform_1(%arg0: i32, %arg1: i32) -> (i32, i32) {
    %c0_i32 = arith.constant 0 : i32
    %c0_i32_0 = arith.constant 0 : i32
    %c0_i32_1 = arith.constant 0 : i32
    return %c0_i32, %c0_i32_0 : i32, i32
  }
  func.func @transform_2(%arg0: i32, %arg1: i32) -> (i32, i32) {
    %c0_i32 = arith.constant 0 : i32
    %c0_i32_0 = arith.constant 0 : i32
    %c0_i32_1 = arith.constant 0 : i32
    return %c0_i32, %c0_i32_0 : i32, i32
  }
  func.func @transform_3(%arg0: i32, %arg1: i32) -> (i32, i32) {
    %c0_i32 = arith.constant 0 : i32
    %c0_i32_0 = arith.constant 0 : i32
    %c0_i32_1 = arith.constant 0 : i32
    return %c0_i32, %c0_i32_0 : i32, i32
  }
  func.func @transform_4(%arg0: i32, %arg1: i32) -> (i32, i32) {
    %c0_i32 = arith.constant 0 : i32
    %c0_i32_0 = arith.constant 0 : i32
    %c0_i32_1 = arith.constant 0 : i32
    return %c0_i32, %c0_i32_0 : i32, i32
  }
  func.func @transform_5(%arg0: i32, %arg1: i32) -> (i32, i32) {
    %c0_i32 = arith.constant 0 : i32
    %c0_i32_0 = arith.constant 0 : i32
    %c0_i32_1 = arith.constant 0 : i32
    return %c0_i32, %c0_i32_0 : i32, i32
  }
  func.func @transform_6(%arg0: i32, %arg1: i32) -> (i32, i32) {
    %c0_i32 = arith.constant 0 : i32
    %c0_i32_0 = arith.constant 0 : i32
    %c0_i32_1 = arith.constant 0 : i32
    return %c0_i32, %c0_i32_0 : i32, i32
  }
  func.func @transform_7(%arg0: i32, %arg1: i32) -> (i32, i32, i32) {
    %c0_i32 = arith.constant 0 : i32
    %c0_i32_0 = arith.constant 0 : i32
    return %arg0, %c0_i32, %arg1 : i32, i32, i32
  }
}

module attributes {stable_mosaic.version = 11 : i64} {
  func.func @_upsample_kernel(%arg0: i32, %arg1: i32, %arg2: i32, %arg3: memref<1x7x4x4xbf16, #tpu.memory_space<vmem>>, %arg4: memref<4x16xbf16, #tpu.memory_space<vmem>>, %arg5: memref<16x4xbf16, #tpu.memory_space<vmem>>, %arg6: memref<1x7x16x16xbf16, #tpu.memory_space<vmem>>) attributes {dimension_semantics = [#tpu.dimension_semantics<parallel>, #tpu.dimension_semantics<parallel>, #tpu.dimension_semantics<parallel>], iteration_bounds = array<i64: 2, 3, 1>, scalar_prefetch = 0 : i64, scratch_operands = 0 : i64, tpu.core_type = #tpu.core_type<tc>, window_params = [{transform_indices = @transform_0, window_bounds = array<i64: 1, 7, 4, 4>}, {transform_indices = @transform_1, window_bounds = array<i64: 4, 16>}, {pipeline_mode = #tpu.pipeline_mode<synchronous>, transform_indices = @transform_2, window_bounds = array<i64: 16, 4>}, {transform_indices = @transform_3, window_bounds = array<i64: 1, 7, 16, 16>}]} {
    %c0 = arith.constant 0 : index
    %c0_0 = arith.constant 0 : index
    %0 = vector.load %arg4[%c0, %c0_0] : memref<4x16xbf16, #tpu.memory_space<vmem>>, vector<4x16xbf16>
    %c0_1 = arith.constant 0 : index
    %c0_2 = arith.constant 0 : index
    %1 = vector.load %arg5[%c0_1, %c0_2] : memref<16x4xbf16, #tpu.memory_space<vmem>>, vector<16x4xbf16>
    %c0_3 = arith.constant 0 : index
    %c0_4 = arith.constant 0 : index
    %c0_5 = arith.constant 0 : index
    %c0_6 = arith.constant 0 : index
    %2 = vector.load %arg3[%c0_3, %c0_4, %c0_5, %c0_6] : memref<1x7x4x4xbf16, #tpu.memory_space<vmem>>, vector<1x1x4x4xbf16>
    %3 = vector.shape_cast %2 : vector<1x1x4x4xbf16> to vector<4x4xbf16>
    %cst = arith.constant dense<0.000000e+00> : vector<4x16xf32>
    %4 = tpu.matmul %3, %0, %cst {dimension_numbers = #tpu.dot_dimension_numbers<[1], [0], [0], [1], [0, 0, 1, 1], [], []>} : vector<4x4xbf16>, vector<4x16xbf16>, vector<4x16xf32> -> vector<4x16xf32>
    %5 = arith.truncf %4 : vector<4x16xf32> to vector<4x16xbf16>
    %cst_7 = arith.constant dense<0.000000e+00> : vector<16x16xf32>
    %6 = tpu.matmul %1, %5, %cst_7 {dimension_numbers = #tpu.dot_dimension_numbers<[1], [0], [0], [1], [0, 0, 1, 1], [], []>} : vector<16x4xbf16>, vector<4x16xbf16>, vector<16x16xf32> -> vector<16x16xf32>
    %7 = arith.truncf %6 : vector<16x16xf32> to vector<16x16xbf16>
    %c0_8 = arith.constant 0 : index
    %c0_9 = arith.constant 0 : index
    %c0_10 = arith.constant 0 : index
    %c0_11 = arith.constant 0 : index
    %8 = vector.load %arg6[%c0_8, %c0_9, %c0_10, %c0_11] : memref<1x7x16x16xbf16, #tpu.memory_space<vmem>>, vector<1x1x16x16xbf16>
    %9 = vector.shape_cast %8 : vector<1x1x16x16xbf16> to vector<16x16xbf16>
    %10 = vector.shape_cast %7 : vector<16x16xbf16> to vector<1x1x16x16xbf16>
    tpu.vector_store %arg6[%c0_8, %c0_9, %c0_10, %c0_11], %10 {strides = array<i32>} : memref<1x7x16x16xbf16, #tpu.memory_space<vmem>>, vector<1x1x16x16xbf16>,
    %c0_12 = arith.constant 0 : index
    %c1 = arith.constant 1 : index
    %c0_13 = arith.constant 0 : index
    %c0_14 = arith.constant 0 : index
    %11 = vector.load %arg3[%c0_12, %c1, %c0_13, %c0_14] : memref<1x7x4x4xbf16, #tpu.memory_space<vmem>>, vector<1x1x4x4xbf16>
    %12 = vector.shape_cast %11 : vector<1x1x4x4xbf16> to vector<4x4xbf16>
    %cst_15 = arith.constant dense<0.000000e+00> : vector<4x16xf32>
    %13 = tpu.matmul %12, %0, %cst_15 {dimension_numbers = #tpu.dot_dimension_numbers<[1], [0], [0], [1], [0, 0, 1, 1], [], []>} : vector<4x4xbf16>, vector<4x16xbf16>, vector<4x16xf32> -> vector<4x16xf32>
    %14 = arith.truncf %13 : vector<4x16xf32> to vector<4x16xbf16>
    %cst_16 = arith.constant dense<0.000000e+00> : vector<16x16xf32>
    %15 = tpu.matmul %1, %14, %cst_16 {dimension_numbers = #tpu.dot_dimension_numbers<[1], [0], [0], [1], [0, 0, 1, 1], [], []>} : vector<16x4xbf16>, vector<4x16xbf16>, vector<16x16xf32> -> vector<16x16xf32>
    %16 = arith.truncf %15 : vector<16x16xf32> to vector<16x16xbf16>
    %c0_17 = arith.constant 0 : index
    %c1_18 = arith.constant 1 : index
    %c0_19 = arith.constant 0 : index
    %c0_20 = arith.constant 0 : index
    %17 = vector.load %arg6[%c0_17, %c1_18, %c0_19, %c0_20] : memref<1x7x16x16xbf16, #tpu.memory_space<vmem>>, vector<1x1x16x16xbf16>
    %18 = vector.shape_cast %17 : vector<1x1x16x16xbf16> to vector<16x16xbf16>
    %19 = vector.shape_cast %16 : vector<16x16xbf16> to vector<1x1x16x16xbf16>
    tpu.vector_store %arg6[%c0_17, %c1_18, %c0_19, %c0_20], %19 {strides = array<i32>} : memref<1x7x16x16xbf16, #tpu.memory_space<vmem>>, vector<1x1x16x16xbf16>,
    %c0_21 = arith.constant 0 : index
    %c2 = arith.constant 2 : index
    %c0_22 = arith.constant 0 : index
    %c0_23 = arith.constant 0 : index
    %20 = vector.load %arg3[%c0_21, %c2, %c0_22, %c0_23] : memref<1x7x4x4xbf16, #tpu.memory_space<vmem>>, vector<1x1x4x4xbf16>
    %21 = vector.shape_cast %20 : vector<1x1x4x4xbf16> to vector<4x4xbf16>
    %cst_24 = arith.constant dense<0.000000e+00> : vector<4x16xf32>
    %22 = tpu.matmul %21, %0, %cst_24 {dimension_numbers = #tpu.dot_dimension_numbers<[1], [0], [0], [1], [0, 0, 1, 1], [], []>} : vector<4x4xbf16>, vector<4x16xbf16>, vector<4x16xf32> -> vector<4x16xf32>
    %23 = arith.truncf %22 : vector<4x16xf32> to vector<4x16xbf16>
    %cst_25 = arith.constant dense<0.000000e+00> : vector<16x16xf32>
    %24 = tpu.matmul %1, %23, %cst_25 {dimension_numbers = #tpu.dot_dimension_numbers<[1], [0], [0], [1], [0, 0, 1, 1], [], []>} : vector<16x4xbf16>, vector<4x16xbf16>, vector<16x16xf32> -> vector<16x16xf32>
    %25 = arith.truncf %24 : vector<16x16xf32> to vector<16x16xbf16>
    %c0_26 = arith.constant 0 : index
    %c2_27 = arith.constant 2 : index
    %c0_28 = arith.constant 0 : index
    %c0_29 = arith.constant 0 : index
    %26 = vector.load %arg6[%c0_26, %c2_27, %c0_28, %c0_29] : memref<1x7x16x16xbf16, #tpu.memory_space<vmem>>, vector<1x1x16x16xbf16>
    %27 = vector.shape_cast %26 : vector<1x1x16x16xbf16> to vector<16x16xbf16>
    %28 = vector.shape_cast %25 : vector<16x16xbf16> to vector<1x1x16x16xbf16>
    tpu.vector_store %arg6[%c0_26, %c2_27, %c0_28, %c0_29], %28 {strides = array<i32>} : memref<1x7x16x16xbf16, #tpu.memory_space<vmem>>, vector<1x1x16x16xbf16>,
    %c0_30 = arith.constant 0 : index
    %c3 = arith.constant 3 : index
    %c0_31 = arith.constant 0 : index
    %c0_32 = arith.constant 0 : index
    %29 = vector.load %arg3[%c0_30, %c3, %c0_31, %c0_32] : memref<1x7x4x4xbf16, #tpu.memory_space<vmem>>, vector<1x1x4x4xbf16>
    %30 = vector.shape_cast %29 : vector<1x1x4x4xbf16> to vector<4x4xbf16>
    %cst_33 = arith.constant dense<0.000000e+00> : vector<4x16xf32>
    %31 = tpu.matmul %30, %0, %cst_33 {dimension_numbers = #tpu.dot_dimension_numbers<[1], [0], [0], [1], [0, 0, 1, 1], [], []>} : vector<4x4xbf16>, vector<4x16xbf16>, vector<4x16xf32> -> vector<4x16xf32>
    %32 = arith.truncf %31 : vector<4x16xf32> to vector<4x16xbf16>
    %cst_34 = arith.constant dense<0.000000e+00> : vector<16x16xf32>
    %33 = tpu.matmul %1, %32, %cst_34 {dimension_numbers = #tpu.dot_dimension_numbers<[1], [0], [0], [1], [0, 0, 1, 1], [], []>} : vector<16x4xbf16>, vector<4x16xbf16>, vector<16x16xf32> -> vector<16x16xf32>
    %34 = arith.truncf %33 : vector<16x16xf32> to vector<16x16xbf16>
    %c0_35 = arith.constant 0 : index
    %c3_36 = arith.constant 3 : index
    %c0_37 = arith.constant 0 : index
    %c0_38 = arith.constant 0 : index
    %35 = vector.load %arg6[%c0_35, %c3_36, %c0_37, %c0_38] : memref<1x7x16x16xbf16, #tpu.memory_space<vmem>>, vector<1x1x16x16xbf16>
    %36 = vector.shape_cast %35 : vector<1x1x16x16xbf16> to vector<16x16xbf16>
    %37 = vector.shape_cast %34 : vector<16x16xbf16> to vector<1x1x16x16xbf16>
    tpu.vector_store %arg6[%c0_35, %c3_36, %c0_37, %c0_38], %37 {strides = array<i32>} : memref<1x7x16x16xbf16, #tpu.memory_space<vmem>>, vector<1x1x16x16xbf16>,
    %c0_39 = arith.constant 0 : index
    %c4 = arith.constant 4 : index
    %c0_40 = arith.constant 0 : index
    %c0_41 = arith.constant 0 : index
    %38 = vector.load %arg3[%c0_39, %c4, %c0_40, %c0_41] : memref<1x7x4x4xbf16, #tpu.memory_space<vmem>>, vector<1x1x4x4xbf16>
    %39 = vector.shape_cast %38 : vector<1x1x4x4xbf16> to vector<4x4xbf16>
    %cst_42 = arith.constant dense<0.000000e+00> : vector<4x16xf32>
    %40 = tpu.matmul %39, %0, %cst_42 {dimension_numbers = #tpu.dot_dimension_numbers<[1], [0], [0], [1], [0, 0, 1, 1], [], []>} : vector<4x4xbf16>, vector<4x16xbf16>, vector<4x16xf32> -> vector<4x16xf32>
    %41 = arith.truncf %40 : vector<4x16xf32> to vector<4x16xbf16>
    %cst_43 = arith.constant dense<0.000000e+00> : vector<16x16xf32>
    %42 = tpu.matmul %1, %41, %cst_43 {dimension_numbers = #tpu.dot_dimension_numbers<[1], [0], [0], [1], [0, 0, 1, 1], [], []>} : vector<16x4xbf16>, vector<4x16xbf16>, vector<16x16xf32> -> vector<16x16xf32>
    %43 = arith.truncf %42 : vector<16x16xf32> to vector<16x16xbf16>
    %c0_44 = arith.constant 0 : index
    %c4_45 = arith.constant 4 : index
    %c0_46 = arith.constant 0 : index
    %c0_47 = arith.constant 0 : index
    %44 = vector.load %arg6[%c0_44, %c4_45, %c0_46, %c0_47] : memref<1x7x16x16xbf16, #tpu.memory_space<vmem>>, vector<1x1x16x16xbf16>
    %45 = vector.shape_cast %44 : vector<1x1x16x16xbf16> to vector<16x16xbf16>
    %46 = vector.shape_cast %43 : vector<16x16xbf16> to vector<1x1x16x16xbf16>
    tpu.vector_store %arg6[%c0_44, %c4_45, %c0_46, %c0_47], %46 {strides = array<i32>} : memref<1x7x16x16xbf16, #tpu.memory_space<vmem>>, vector<1x1x16x16xbf16>,
    %c0_48 = arith.constant 0 : index
    %c5 = arith.constant 5 : index
    %c0_49 = arith.constant 0 : index
    %c0_50 = arith.constant 0 : index
    %47 = vector.load %arg3[%c0_48, %c5, %c0_49, %c0_50] : memref<1x7x4x4xbf16, #tpu.memory_space<vmem>>, vector<1x1x4x4xbf16>
    %48 = vector.shape_cast %47 : vector<1x1x4x4xbf16> to vector<4x4xbf16>
    %cst_51 = arith.constant dense<0.000000e+00> : vector<4x16xf32>
    %49 = tpu.matmul %48, %0, %cst_51 {dimension_numbers = #tpu.dot_dimension_numbers<[1], [0], [0], [1], [0, 0, 1, 1], [], []>} : vector<4x4xbf16>, vector<4x16xbf16>, vector<4x16xf32> -> vector<4x16xf32>
    %50 = arith.truncf %49 : vector<4x16xf32> to vector<4x16xbf16>
    %cst_52 = arith.constant dense<0.000000e+00> : vector<16x16xf32>
    %51 = tpu.matmul %1, %50, %cst_52 {dimension_numbers = #tpu.dot_dimension_numbers<[1], [0], [0], [1], [0, 0, 1, 1], [], []>} : vector<16x4xbf16>, vector<4x16xbf16>, vector<16x16xf32> -> vector<16x16xf32>
    %52 = arith.truncf %51 : vector<16x16xf32> to vector<16x16xbf16>
    %c0_53 = arith.constant 0 : index
    %c5_54 = arith.constant 5 : index
    %c0_55 = arith.constant 0 : index
    %c0_56 = arith.constant 0 : index
    %53 = vector.load %arg6[%c0_53, %c5_54, %c0_55, %c0_56] : memref<1x7x16x16xbf16, #tpu.memory_space<vmem>>, vector<1x1x16x16xbf16>
    %54 = vector.shape_cast %53 : vector<1x1x16x16xbf16> to vector<16x16xbf16>
    %55 = vector.shape_cast %52 : vector<16x16xbf16> to vector<1x1x16x16xbf16>
    tpu.vector_store %arg6[%c0_53, %c5_54, %c0_55, %c0_56], %55 {strides = array<i32>} : memref<1x7x16x16xbf16, #tpu.memory_space<vmem>>, vector<1x1x16x16xbf16>,
    %c0_57 = arith.constant 0 : index
    %c6 = arith.constant 6 : index
    %c0_58 = arith.constant 0 : index
    %c0_59 = arith.constant 0 : index
    %56 = vector.load %arg3[%c0_57, %c6, %c0_58, %c0_59] : memref<1x7x4x4xbf16, #tpu.memory_space<vmem>>, vector<1x1x4x4xbf16>
    %57 = vector.shape_cast %56 : vector<1x1x4x4xbf16> to vector<4x4xbf16>
    %cst_60 = arith.constant dense<0.000000e+00> : vector<4x16xf32>
    %58 = tpu.matmul %57, %0, %cst_60 {dimension_numbers = #tpu.dot_dimension_numbers<[1], [0], [0], [1], [0, 0, 1, 1], [], []>} : vector<4x4xbf16>, vector<4x16xbf16>, vector<4x16xf32> -> vector<4x16xf32>
    %59 = arith.truncf %58 : vector<4x16xf32> to vector<4x16xbf16>
    %cst_61 = arith.constant dense<0.000000e+00> : vector<16x16xf32>
    %60 = tpu.matmul %1, %59, %cst_61 {dimension_numbers = #tpu.dot_dimension_numbers<[1], [0], [0], [1], [0, 0, 1, 1], [], []>} : vector<16x4xbf16>, vector<4x16xbf16>, vector<16x16xf32> -> vector<16x16xf32>
    %61 = arith.truncf %60 : vector<16x16xf32> to vector<16x16xbf16>
    %c0_62 = arith.constant 0 : index
    %c6_63 = arith.constant 6 : index
    %c0_64 = arith.constant 0 : index
    %c0_65 = arith.constant 0 : index
    %62 = vector.load %arg6[%c0_62, %c6_63, %c0_64, %c0_65] : memref<1x7x16x16xbf16, #tpu.memory_space<vmem>>, vector<1x1x16x16xbf16>
    %63 = vector.shape_cast %62 : vector<1x1x16x16xbf16> to vector<16x16xbf16>
    %64 = vector.shape_cast %61 : vector<16x16xbf16> to vector<1x1x16x16xbf16>
    tpu.vector_store %arg6[%c0_62, %c6_63, %c0_64, %c0_65], %64 {strides = array<i32>} : memref<1x7x16x16xbf16, #tpu.memory_space<vmem>>, vector<1x1x16x16xbf16>,
    return
  }
  func.func @transform_0(%arg0: i32, %arg1: i32, %arg2: i32) -> (i32, i32, i32, i32) {
    %c0_i32 = arith.constant 0 : i32
    %c0_i32_0 = arith.constant 0 : i32
    %c0_i32_1 = arith.constant 0 : i32
    return %arg0, %arg1, %c0_i32, %c0_i32_0 : i32, i32, i32, i32
  }
  func.func @transform_1(%arg0: i32, %arg1: i32, %arg2: i32) -> (i32, i32) {
    %c0_i32 = arith.constant 0 : i32
    %c0_i32_0 = arith.constant 0 : i32
    return %c0_i32, %arg2 : i32, i32
  }
  func.func @transform_2(%arg0: i32, %arg1: i32, %arg2: i32) -> (i32, i32) {
    %c0_i32 = arith.constant 0 : i32
    %c0_i32_0 = arith.constant 0 : i32
    %c0_i32_1 = arith.constant 0 : i32
    return %c0_i32, %c0_i32_0 : i32, i32
  }
  func.func @transform_3(%arg0: i32, %arg1: i32, %arg2: i32) -> (i32, i32, i32, i32) {
    %c0_i32 = arith.constant 0 : i32
    %c0_i32_0 = arith.constant 0 : i32
    return %arg0, %arg1, %c0_i32, %arg2 : i32, i32, i32, i32
  }
}

</mosaic_0001>

<llo_original>
// kernel: uhrnet_forward.3
$region0: #{uhrnet_forward.3}
  #allocation0 [shape = 'u32[]', space=smem, size = 0x4, offset = 0x4, fixed_abs, tag = 'smem constant byte address 0x4 - core index']
  #allocation1 [shape = 'u32[144,128]{1,0:T(1,128)}', space=vmem, size = 0x12000, scoped, tag = 'internal scratch']
  %s0 = inlined_call_operand.vmem [shape: bf16[2,32,4,4], index: 0, kind: input, shape index: {}]
  %s1 = inlined_call_operand.vmem [shape: bf16[4,16], index: 1, kind: input, shape index: {}]
  %s2 = inlined_call_operand.vmem [shape: bf16[16,4], index: 2, kind: input, shape index: {}]
  %s3 = inlined_call_operand.vmem [shape: bf16[2,21,16,16], index: 3, kind: output, shape index: {}]
  %s4 = sld [smem:[#allocation0]]
  $region45: #{uhrnet_forward.3} parent=0
    _
  %s6 = ssub.s32 1, %s4
  %s7 = scalar_select 0, %s6, %s4
  loop: start=0, step=1, limit=8
  $region2: #{uhrnet_forward.3} parent=0 // loop_pre_header
    _
  $region3: #{uhrnet_forward.3} parent=0 // loop_header
    %s9 = sphi 0, %s13
    %p10 = scmp.ge.s32.totalorder %s9, 8
    %s16 = sphi 0, %s35
    %s17 = sphi 0, %s31
    %s18 = sphi 0, %s27
    %s19 = sphi 0, %s16
    %s20 = sphi 0, %s17
    %s21 = sphi 0, %s18
    %s22 = sphi 0, %s19
    %s23 = sphi 0, %s20
    %s24 = sphi 0, %s21
    %s40 = sphi 0, %s42
    %s43 = sphi 0, %s40
    %s44 = sphi 0, %s43
    %s60 = sphi 0, %s44
    %s66 = sphi 0, %s68
    %s69 = sphi 0, %s66
    %s70 = sphi 0, %s69
    %s86 = sphi 0, %s70
    %s90 = sphi 0, %s90
    %s92 = sphi 0, %s90
    %s93 = sphi 0, %s92
    %s107 = sphi 0, %s93
    %s117 = sphi 0, %s119
    %s120 = sphi 0, %s117
    %s121 = sphi 0, %s120
    %s137 = sphi 0, %s121
  $region4: #{uhrnet_forward.3} parent=0 // loop_header_branch
    %12 = sbr.rel (%p10) target = $region8
  $region5: #{uhrnet_forward.3} parent=0 // loop_body
    %s14 = ssub.s32 %s9, 1
    %s15 = ssub.s32 %s9, 2
    %s25 = sadd.s32 1, %s18
    %p26 = scmp.ge.s32.totalorder %s25, 1
    %s27 = scalar_select %p26, 0, %s25
    %s28 = sadd.s32 1, %s17
    %s29 = scalar_select %p26, %s28, %s17
    %p30 = scmp.ge.s32.totalorder %s29, 3
    %s31 = scalar_select %p30, 0, %s29
    %s32 = sadd.s32 1, %s16
    %s33 = scalar_select %p30, %s32, %s16
    %p34 = scmp.ge.s32.totalorder %s33, 2
    %s35 = scalar_select %p34, 0, %s33
    %s36 = ssub.s32 %s16, %s35
    %s37 = ssub.s32 %s17, %s31
    %s38 = sor.u32 %s36, %s37
    %p39 = scmp.eq.s32.totalorder %s38, 0
    %s41 = sadd.s32 %s40, 1
    %s42 = scalar_select %p39, %s40, %s41
    %p45 = pneg %p39
    %p46 = scmp.eq.s32.totalorder %s9, 5
    %p47 = por %p45, %p46
    %p48 = scmp.ne.s32.totalorder %s40, %s43
    %p49 = scmp.eq.s32.totalorder %s9, 0
    %p50 = por %p48, %p49
    %p51 = scmp.ne.s32.totalorder %s40, %s43
    %p52 = scmp.eq.s32.totalorder %s14, 5
    %p53 = por %p51, %p52
    %p54 = scmp.ne.s32.totalorder %s43, %s44
    %p55 = scmp.eq.s32.totalorder %s14, 0
    %p56 = por %p54, %p55
    %p57 = scmp.ne.s32.totalorder %s43, %s44
    %p58 = scmp.eq.s32.totalorder %s15, 5
    %p59 = por %p57, %p58
    %p61 = scmp.ne.s32.totalorder %s44, %s60
    %p62 = scmp.eq.s32.totalorder %s15, 0
    %p63 = por %p61, %p62
    %s64 = ssub.s32 %s18, %s27
    %p65 = scmp.eq.s32.totalorder %s64, 0
    %s67 = sadd.s32 %s66, 1
    %s68 = scalar_select %p65, %s66, %s67
    %p71 = pneg %p65
    %p72 = scmp.eq.s32.totalorder %s9, 5
    %p73 = por %p71, %p72
    %p74 = scmp.ne.s32.totalorder %s66, %s69
    %p75 = scmp.eq.s32.totalorder %s9, 0
    %p76 = por %p74, %p75
    %p77 = scmp.ne.s32.totalorder %s66, %s69
    %p78 = scmp.eq.s32.totalorder %s14, 5
    %p79 = por %p77, %p78
    %p80 = scmp.ne.s32.totalorder %s69, %s70
    %p81 = scmp.eq.s32.totalorder %s14, 0
    %p82 = por %p80, %p81
    %p83 = scmp.ne.s32.totalorder %s69, %s70
    %p84 = scmp.eq.s32.totalorder %s15, 5
    %p85 = por %p83, %p84
    %p87 = scmp.ne.s32.totalorder %s70, %s86
    %p88 = scmp.eq.s32.totalorder %s15, 0
    %p89 = por %p87, %p88
    %s91 = sadd.s32 %s90, 1
    %p94 = scmp.eq.s32.totalorder %s9, 5
    %p95 = scmp.ne.s32.totalorder %s90, %s92
    %p96 = scmp.eq.s32.totalorder %s9, 0
    %p97 = por %p95, %p96
    %p98 = scmp.ne.s32.totalorder %s90, %s92
    %p99 = scmp.eq.s32.totalorder %s14, 5
    %p100 = por %p98, %p99
    %p101 = scmp.ne.s32.totalorder %s92, %s93
    %p102 = scmp.eq.s32.totalorder %s14, 0
    %p103 = por %p101, %p102
    %p104 = scmp.ne.s32.totalorder %s92, %s93
    %p105 = scmp.eq.s32.totalorder %s15, 5
    %p106 = por %p104, %p105
    %p108 = scmp.ne.s32.totalorder %s93, %s107
    %p109 = scmp.eq.s32.totalorder %s15, 0
    %p110 = por %p108, %p109
    %s111 = ssub.s32 %s16, %s35
    %s112 = ssub.s32 %s17, %s31
    %s113 = sor.u32 %s111, %s112
    %s114 = ssub.s32 %s18, %s27
    %s115 = sor.u32 %s113, %s114
    %p116 = scmp.eq.s32.totalorder %s115, 0
    %s118 = sadd.s32 %s117, 1
    %s119 = scalar_select %p116, %s117, %s118
    %p122 = pneg %p116
    %p123 = scmp.eq.s32.totalorder %s9, 5
    %p124 = por %p122, %p123
    %p125 = scmp.ne.s32.totalorder %s117, %s120
    %p126 = scmp.eq.s32.totalorder %s9, 0
    %p127 = por %p125, %p126
    %p128 = scmp.ne.s32.totalorder %s117, %s120
    %p129 = scmp.eq.s32.totalorder %s14, 5
    %p130 = por %p128, %p129
    %p131 = scmp.ne.s32.totalorder %s120, %s121
    %p132 = scmp.eq.s32.totalorder %s14, 0
    %p133 = por %p131, %p132
    %p134 = scmp.ne.s32.totalorder %s120, %s121
    %p135 = scmp.eq.s32.totalorder %s15, 5
    %p136 = por %p134, %p135
    %p138 = scmp.ne.s32.totalorder %s121, %s137
    %p139 = scmp.eq.s32.totalorder %s15, 0
    %p140 = por %p138, %p139
    %p141 = scmp.le.s32.totalorder 1, %s9
    %p142 = scmp.lt.s32.totalorder %s9, 7
    %p143 = pnand %p141, %p142
    %p144 = pneg %p143
    // Predicated region
    $region9: #{uhrnet_forward.3} parent=5 // pred_check
      _
    $region10: #{uhrnet_forward.3} parent=5 // pred_check_branch
      %146 = sbr.rel (%p143) target = $region12
    $region11: #{uhrnet_forward.3} parent=5 // pred_region
      %s147 = ssub.s32 %s9, 1
      // Predicated region
      $region13: #{uhrnet_forward.3} parent=11 // pred_check
        %p148 = pneg %p82
      $region14: #{uhrnet_forward.3} parent=11 // pred_check_branch
        %150 = sbr.rel (%p148) target = $region16
      $region15: #{uhrnet_forward.3} parent=11 // pred_region
        %p151 = scmp.lt.s32.totalorder %s21, 0
        %s152 = scalar_select %p151, %s21, 0
        %s153 = smul.addr %s152, 2
        %s154 = scalar_lea.vmem %s1, %s153
      $region16: #{uhrnet_forward.3} parent=11 // pred_fallthru
        _
      // Predicated region
      $region17: #{uhrnet_forward.3} parent=11 // pred_check
        %p155 = pneg %p103
      $region18: #{uhrnet_forward.3} parent=11 // pred_check_branch
        %157 = sbr.rel (%p155) target = $region20
      $region19: #{uhrnet_forward.3} parent=11 // pred_region
        _
      $region20: #{uhrnet_forward.3} parent=11 // pred_fallthru
        _
    $region12: #{uhrnet_forward.3} parent=5 // pred_fallthru
      _
    %p158 = scmp.lt.s32.totalorder %s9, 6
    // Predicated region
    $region21: #{uhrnet_forward.3} parent=5 // pred_check
      %p159 = pneg %p158
    $region22: #{uhrnet_forward.3} parent=5 // pred_check_branch
      %161 = sbr.rel (%p159) target = $region24
    $region23: #{uhrnet_forward.3} parent=5 // pred_region
      // Predicated region
      $region25: #{uhrnet_forward.3} parent=23 // pred_check
        %p162 = pneg %p50
      $region26: #{uhrnet_forward.3} parent=23 // pred_check_branch
        %164 = sbr.rel (%p162) target = $region28
      $region27: #{uhrnet_forward.3} parent=23 // pred_region
        %s165 = smul.u32 7, %s17
        %s166 = ssub.s32 32, %s165
        %p167 = scmp.lt.s32.totalorder %s166, 7
        %s168 = scalar_select %p167, %s166, 7
        %s169 = smul.u32 32, %s168
        %p170 = scmp.lt.s32.totalorder %s16, 1
        %s171 = scalar_select %p170, %s16, 1
        %p172 = scmp.lt.s32.totalorder %s165, 31
        %s173 = scalar_select %p172, %s165, 31
        %s174 = smul.addr %s171, 32
        %s175 = sadd.s32 %s173, %s174
        %s176 = smul.addr %s175, 2
        %s177 = scalar_lea.vmem %s0, %s176
        %s178 = smul.u32 7, %s17
        %s179 = ssub.s32 32, %s178
        %p180 = scmp.lt.s32.totalorder %s179, 7
        %s181 = scalar_select %p180, %s179, 7
        %s182 = smul.u32 32, %s181
      $region28: #{uhrnet_forward.3} parent=23 // pred_fallthru
        _
    $region24: #{uhrnet_forward.3} parent=5 // pred_fallthru
      _
    %p183 = scmp.le.s32.totalorder 1, %s9
    %p184 = scmp.lt.s32.totalorder %s9, 7
    %p185 = pnand %p183, %p184
    %p186 = pneg %p185
    // Predicated region
    $region29: #{uhrnet_forward.3} parent=5 // pred_check
      _
    $region30: #{uhrnet_forward.3} parent=5 // pred_check_branch
      %188 = sbr.rel (%p185) target = $region32
    $region31: #{uhrnet_forward.3} parent=5 // pred_region
      %s189 = ssub.s32 %s9, 1
      %s190 = smul.u32 7, %s20
      %s191 = ssub.s32 32, %s190
      %p192 = scmp.lt.s32.totalorder %s191, 7
      %s193 = scalar_select %p192, %s191, 7
      %s194 = smul.u32 32, %s193
      %p195 = scmp.lt.s32.totalorder %s19, 1
      %s196 = scalar_select %p195, %s19, 1
      %p197 = scmp.lt.s32.totalorder %s190, 31
      %s198 = scalar_select %p197, %s190, 31
      %s199 = smul.addr %s196, 32
      %s200 = sadd.s32 %s198, %s199
      %s201 = smul.addr %s200, 2
      %s202 = scalar_lea.vmem %s0, %s201
      %p203 = pneg %p56
      %p204 = pneg %p53
      %p205 = scmp.lt.s32.totalorder %s21, 0
      %s206 = scalar_select %p205, %s21, 0
      %s207 = smul.addr %s206, 2
      %s208 = scalar_lea.vmem %s1, %s207
      %p209 = pneg %p82
      %p210 = pneg %p79
      %p211 = pneg %p103
      %p212 = pneg %p100
      %p213 = pneg %p133
      %p214 = pneg %p130
      %s215 = smul.u32 7, %s20
      %p216 = scmp.lt.s32.totalorder %s19, 1
      %s217 = scalar_select %p216, %s19, 1
      %p218 = scmp.lt.s32.totalorder %s215, 20
      %s219 = scalar_select %p218, %s215, 20
      %p220 = scmp.lt.s32.totalorder %s21, 0
      %s221 = scalar_select %p220, %s21, 0
      %s222 = smul.addr %s219, 2
      %s223 = sadd.s32 %s221, %s222
      %s224 = smul.addr %s217, 42
      %s225 = sadd.s32 %s223, %s224
      %s226 = smul.addr %s225, 4
      %s227 = scalar_lea.vmem %s3, %s226
      %s228 = smul.u32 7, %s20
      %s229 = ssub.s32 32, %s228
      %p230 = scmp.lt.s32.totalorder %s229, 7
      %s231 = scalar_select %p230, %s229, 7
      %s232 = smul.u32 32, %s231
      %p233 = scmp.lt.s32.totalorder %s19, 1
      %s234 = scalar_select %p233, %s19, 1
      %p235 = scmp.lt.s32.totalorder %s228, 31
      %s236 = scalar_select %p235, %s228, 31
      %s237 = smul.addr %s234, 32
      %s238 = sadd.s32 %s236, %s237
      %s239 = smul.addr %s238, 2
      %s240 = scalar_lea.vmem %s0, %s239
      %s241 = smul.u32 7, %s20
      %s242 = ssub.s32 32, %s241
      %p243 = scmp.lt.s32.totalorder %s242, 7
      %s244 = scalar_select %p243, %s242, 7
      %s245 = smul.u32 32, %s244
      %p246 = scmp.lt.s32.totalorder %s21, 0
      %s247 = scalar_select %p246, %s21, 0
      %s248 = smul.addr %s247, 2
      %s249 = scalar_lea.vmem %s1, %s248
      %s250 = smul.u32 7, %s20
      %p251 = scmp.lt.s32.totalorder %s19, 1
      %s252 = scalar_select %p251, %s19, 1
      %p253 = scmp.lt.s32.totalorder %s250, 20
      %s254 = scalar_select %p253, %s250, 20
      %p255 = scmp.lt.s32.totalorder %s21, 0
      %s256 = scalar_select %p255, %s21, 0
      %s257 = smul.addr %s254, 2
      %s258 = sadd.s32 %s256, %s257
      %s259 = smul.addr %s252, 42
      %s260 = sadd.s32 %s258, %s259
      %s261 = smul.addr %s260, 4
      %s262 = scalar_lea.vmem %s3, %s261
      %s263 = smul.u32 7, %s20
      %v265 = vld [vmem:[%s249] sm:$0x3]
      %v266 = vld [vmem:[%s2] sm:$0xf]
      %v267 = vld [vmem:[%s2 + $0x4] sm:$0xf]
      %v268 = vld [vmem:[%s240] sm:$0x3]
      %vm269 = vcmask 31744
      %v271 = vsel %vm269, %v268, 0
      %vm273 = vcmask 1041408
      %v275 = vsel %vm273, %v265, 0
      %277 = vmatprep.subr.bf16.mxu0 0
      %278 = vmatpush1.bf16.msra.mxu0 0
      %279 = vmatprep.subr.bf16.mxu0 0
      %280 = vmatpush1.bf16.msra.mxu0 0
      %281 = vmatprep.subr.bf16.mxu0 0
      %282 = vmatpush1.bf16.msra.mxu0 0
      %283 = vmatprep.subr.bf16.mxu0 0
      %284 = vmatpush1.bf16.msra.mxu0 0
      %285 = vmatprep.subr.bf16.mxu0 0
      %286 = vmatpush1.bf16.msra.mxu0 0
      %287 = vmatprep.subr.bf16.mxu0 0
      %288 = vmatpush1.bf16.msra.mxu0 0
      %289 = vmatprep.subr.bf16.mxu0 0
      %290 = vmatpush1.bf16.msra.mxu0 0
      %291 = vmatprep.subr.bf16.mxu0 0
      %292 = vmatpush1.bf16.msra.mxu0 %v275
      %293 = vmatprep.subr.bf16.mxu0 0
      %294 = vmatpush2.bf16.msra.mxu0 0
      %295 = vmatprep.subr.bf16.mxu0 0
      %296 = vmatpush2.bf16.msra.mxu0 0
      %297 = vmatprep.subr.bf16.mxu0 0
      %298 = vmatpush2.bf16.msra.mxu0 0
      %299 = vmatprep.subr.bf16.mxu0 0
      %300 = vmatpush2.bf16.msra.mxu0 0
      %301 = vmatprep.subr.bf16.mxu0 0
      %302 = vmatpush2.bf16.msra.mxu0 0
      %303 = vmatprep.subr.bf16.mxu0 0
      %304 = vmatpush2.bf16.msra.mxu0 0
      %305 = vmatprep.subr.bf16.mxu0 0
      %306 = vmatpush2.bf16.msra.mxu0 0
      %307 = vmatprep.subr.bf16.mxu0 0
      %308 = vmatpush2.bf16.msra.mxu0 0
      %309 = vmatprep.mubr.bf16.mxu0 0
      %310 = vmatmul.mubr.bf16.gmra.mxu0 %v271
      %v311 = vpop.f32.mrf.mxu0
      %v312 = vadd.f32 0.0, %v311
      %v313 = vpop.f32.mrf.mxu0
      %v314 = vpop.f32.mrf.mxu0
      %v315 = vpop.f32.mrf.mxu0
      %316 = vdwg.mxu0
      %v317 = vpack.c.bf16 %v312, %v312
      %v320 = vunpack.c.l.b16 %v266
      %v321 = vunpack.c.l.b16 %v267
      %v322 = vpack.c.b16 %v321, %v320
      %v324 = vsel %vm269, %v322, 0
      %v327 = vsel %vm273, %v317, 0
      %329 = vmatprep.subr.bf16.mxu0 0
      %330 = vmatpush1.bf16.msra.mxu0 0
      %331 = vmatprep.subr.bf16.mxu0 0
      %332 = vmatpush1.bf16.msra.mxu0 0
      %333 = vmatprep.subr.bf16.mxu0 0
      %334 = vmatpush1.bf16.msra.mxu0 0
      %335 = vmatprep.subr.bf16.mxu0 0
      %336 = vmatpush1.bf16.msra.mxu0 0
      %337 = vmatprep.subr.bf16.mxu0 0
      %338 = vmatpush1.bf16.msra.mxu0 0
      %339 = vmatprep.subr.bf16.mxu0 0
      %340 = vmatpush1.bf16.msra.mxu0 0
      %341 = vmatprep.subr.bf16.mxu0 0
      %342 = vmatpush1.bf16.msra.mxu0 0
      %343 = vmatprep.subr.bf16.mxu0 0
      %344 = vmatpush1.bf16.msra.mxu0 %v327
      %345 = vmatprep.subr.bf16.mxu0 0
      %346 = vmatpush2.bf16.msra.mxu0 0
      %347 = vmatprep.subr.bf16.mxu0 0
      %348 = vmatpush2.bf16.msra.mxu0 0
      %349 = vmatprep.subr.bf16.mxu0 0
      %350 = vmatpush2.bf16.msra.mxu0 0
      %351 = vmatprep.subr.bf16.mxu0 0
      %352 = vmatpush2.bf16.msra.mxu0 0
      %353 = vmatprep.subr.bf16.mxu0 0
      %354 = vmatpush2.bf16.msra.mxu0 0
      %355 = vmatprep.subr.bf16.mxu0 0
      %356 = vmatpush2.bf16.msra.mxu0 0
      %357 = vmatprep.subr.bf16.mxu0 0
      %358 = vmatpush2.bf16.msra.mxu0 0
      %359 = vmatprep.subr.bf16.mxu0 0
      %360 = vmatpush2.bf16.msra.mxu0 0
      %361 = vmatprep.mubr.bf16.mxu0 0
      %362 = vmatmul.mubr.bf16.gmra.mxu0 %v324
      %v363 = vpop.f32.mrf.mxu0
      %v364 = vadd.f32 0.0, %v363
      %v365 = vpop.f32.mrf.mxu0
      %v366 = vpop.f32.mrf.mxu0
      %v367 = vadd.f32 0.0, %v366
      %v368 = vpop.f32.mrf.mxu0
      %369 = vdwg.mxu0
      %v370 = vpack.c.bf16 %v367, %v364
      %v372 = vunpack.c.l.b16 %v370
      %v373 = vunpack.c.h.b16 %v370
      %v374 = vpack.c.b16 %v372, %v372
      %v375 = vpack.c.b16 %v373, %v373
      %vm378 = vcmask 125952
      %379 = vst.msk [vmem:[%s262] sm:$0xf] %vm378, %v374
      %380 = vst.msk [vmem:[%s262 + $0x4] sm:$0xf] %vm378, %v375
      %s381 = scalar_lea.vmem %s240, 2
      %v382 = vld [vmem:[%s381] sm:$0x3]
      %v384 = vsel %vm269, %v382, 0
      %386 = vmatprep.subr.bf16.mxu0 0
      %387 = vmatpush1.bf16.msra.mxu0 0
      %388 = vmatprep.subr.bf16.mxu0 0
      %389 = vmatpush1.bf16.msra.mxu0 0
      %390 = vmatprep.subr.bf16.mxu0 0
      %391 = vmatpush1.bf16.msra.mxu0 0
      %392 = vmatprep.subr.bf16.mxu0 0
      %393 = vmatpush1.bf16.msra.mxu0 0
      %394 = vmatprep.subr.bf16.mxu0 0
      %395 = vmatpush1.bf16.msra.mxu0 0
      %396 = vmatprep.subr.bf16.mxu0 0
      %397 = vmatpush1.bf16.msra.mxu0 0
      %398 = vmatprep.subr.bf16.mxu0 0
      %399 = vmatpush1.bf16.msra.mxu0 0
      %400 = vmatprep.subr.bf16.mxu0 0
      %401 = vmatpush1.bf16.msra.mxu0 %v275
      %402 = vmatprep.subr.bf16.mxu0 0
      %403 = vmatpush2.bf16.msra.mxu0 0
      %404 = vmatprep.subr.bf16.mxu0 0
      %405 = vmatpush2.bf16.msra.mxu0 0
      %406 = vmatprep.subr.bf16.mxu0 0
      %407 = vmatpush2.bf16.msra.mxu0 0
      %408 = vmatprep.subr.bf16.mxu0 0
      %409 = vmatpush2.bf16.msra.mxu0 0
      %410 = vmatprep.subr.bf16.mxu0 0
      %411 = vmatpush2.bf16.msra.mxu0 0
      %412 = vmatprep.subr.bf16.mxu0 0
      %413 = vmatpush2.bf16.msra.mxu0 0
      %414 = vmatprep.subr.bf16.mxu0 0
      %415 = vmatpush2.bf16.msra.mxu0 0
      %416 = vmatprep.subr.bf16.mxu0 0
      %417 = vmatpush2.bf16.msra.mxu0 0
      %418 = vmatprep.mubr.bf16.mxu0 0
      %419 = vmatmul.mubr.bf16.gmra.mxu0 %v384
      %v420 = vpop.f32.mrf.mxu0
      %v421 = vadd.f32 0.0, %v420
      %v422 = vpop.f32.mrf.mxu0
      %v423 = vpop.f32.mrf.mxu0
      %v424 = vpop.f32.mrf.mxu0
      %425 = vdwg.mxu0
      %v426 = vpack.c.bf16 %v421, %v421
      %v428 = vsel %vm273, %v426, 0
      %430 = vmatprep.subr.bf16.mxu0 0
      %431 = vmatpush1.bf16.msra.mxu0 0
      %432 = vmatprep.subr.bf16.mxu0 0
      %433 = vmatpush1.bf16.msra.mxu0 0
      %434 = vmatprep.subr.bf16.mxu0 0
      %435 = vmatpush1.bf16.msra.mxu0 0
      %436 = vmatprep.subr.bf16.mxu0 0
      %437 = vmatpush1.bf16.msra.mxu0 0
      %438 = vmatprep.subr.bf16.mxu0 0
      %439 = vmatpush1.bf16.msra.mxu0 0
      %440 = vmatprep.subr.bf16.mxu0 0
      %441 = vmatpush1.bf16.msra.mxu0 0
      %442 = vmatprep.subr.bf16.mxu0 0
      %443 = vmatpush1.bf16.msra.mxu0 0
      %444 = vmatprep.subr.bf16.mxu0 0
      %445 = vmatpush1.bf16.msra.mxu0 %v428
      %446 = vmatprep.subr.bf16.mxu0 0
      %447 = vmatpush2.bf16.msra.mxu0 0
      %448 = vmatprep.subr.bf16.mxu0 0
      %449 = vmatpush2.bf16.msra.mxu0 0
      %450 = vmatprep.subr.bf16.mxu0 0
      %451 = vmatpush2.bf16.msra.mxu0 0
      %452 = vmatprep.subr.bf16.mxu0 0
      %453 = vmatpush2.bf16.msra.mxu0 0
      %454 = vmatprep.subr.bf16.mxu0 0
      %455 = vmatpush2.bf16.msra.mxu0 0
      %456 = vmatprep.subr.bf16.mxu0 0
      %457 = vmatpush2.bf16.msra.mxu0 0
      %458 = vmatprep.subr.bf16.mxu0 0
      %459 = vmatpush2.bf16.msra.mxu0 0
      %460 = vmatprep.subr.bf16.mxu0 0
      %461 = vmatpush2.bf16.msra.mxu0 0
      %462 = vmatprep.mubr.bf16.mxu0 0
      %463 = vmatmul.mubr.bf16.gmra.mxu0 %v324
      %v464 = vpop.f32.mrf.mxu0
      %v465 = vadd.f32 0.0, %v464
      %v466 = vpop.f32.mrf.mxu0
      %v467 = vpop.f32.mrf.mxu0
      %v468 = vadd.f32 0.0, %v467
      %v469 = vpop.f32.mrf.mxu0
      %470 = vdwg.mxu0
      %v471 = vpack.c.bf16 %v468, %v465
      %v473 = vunpack.c.l.b16 %v471
      %v474 = vunpack.c.h.b16 %v471
      %v475 = vpack.c.b16 %v473, %v473
      %v476 = vpack.c.b16 %v474, %v474
      %s479 = scalar_lea.vmem %s262, 8
      %480 = vst.msk [vmem:[%s479] sm:$0xf] %vm378, %v475
      %481 = vst.msk [vmem:[%s479 + $0x4] sm:$0xf] %vm378, %v476
      %s482 = scalar_lea.vmem %s240, 4
      %v483 = vld [vmem:[%s482] sm:$0x3]
      %v485 = vsel %vm269, %v483, 0
      %487 = vmatprep.subr.bf16.mxu0 0
      %488 = vmatpush1.bf16.msra.mxu0 0
      %489 = vmatprep.subr.bf16.mxu0 0
      %490 = vmatpush1.bf16.msra.mxu0 0
      %491 = vmatprep.subr.bf16.mxu0 0
      %492 = vmatpush1.bf16.msra.mxu0 0
      %493 = vmatprep.subr.bf16.mxu0 0
      %494 = vmatpush1.bf16.msra.mxu0 0
      %495 = vmatprep.subr.bf16.mxu0 0
      %496 = vmatpush1.bf16.msra.mxu0 0
      %497 = vmatprep.subr.bf16.mxu0 0
      %498 = vmatpush1.bf16.msra.mxu0 0
      %499 = vmatprep.subr.bf16.mxu0 0
      %500 = vmatpush1.bf16.msra.mxu0 0
      %501 = vmatprep.subr.bf16.mxu0 0
      %502 = vmatpush1.bf16.msra.mxu0 %v275
      %503 = vmatprep.subr.bf16.mxu0 0
      %504 = vmatpush2.bf16.msra.mxu0 0
      %505 = vmatprep.subr.bf16.mxu0 0
      %506 = vmatpush2.bf16.msra.mxu0 0
      %507 = vmatprep.subr.bf16.mxu0 0
      %508 = vmatpush2.bf16.msra.mxu0 0
      %509 = vmatprep.subr.bf16.mxu0 0
      %510 = vmatpush2.bf16.msra.mxu0 0
      %511 = vmatprep.subr.bf16.mxu0 0
      %512 = vmatpush2.bf16.msra.mxu0 0
      %513 = vmatprep.subr.bf16.mxu0 0
      %514 = vmatpush2.bf16.msra.mxu0 0
      %515 = vmatprep.subr.bf16.mxu0 0
      %516 = vmatpush2.bf16.msra.mxu0 0
      %517 = vmatprep.subr.bf16.mxu0 0
      %518 = vmatpush2.bf16.msra.mxu0 0
      %519 = vmatprep.mubr.bf16.mxu0 0
      %520 = vmatmul.mubr.bf16.gmra.mxu0 %v485
      %v521 = vpop.f32.mrf.mxu0
      %v522 = vadd.f32 0.0, %v521
      %v523 = vpop.f32.mrf.mxu0
      %v524 = vpop.f32.mrf.mxu0
      %v525 = vpop.f32.mrf.mxu0
      %526 = vdwg.mxu0
      %v527 = vpack.c.bf16 %v522, %v522
      %v529 = vsel %vm273, %v527, 0
      %531 = vmatprep.subr.bf16.mxu0 0
      %532 = vmatpush1.bf16.msra.mxu0 0
      %533 = vmatprep.subr.bf16.mxu0 0
      %534 = vmatpush1.bf16.msra.mxu0 0
      %535 = vmatprep.subr.bf16.mxu0 0
      %536 = vmatpush1.bf16.msra.mxu0 0
      %537 = vmatprep.subr.bf16.mxu0 0
      %538 = vmatpush1.bf16.msra.mxu0 0
      %539 = vmatprep.subr.bf16.mxu0 0
      %540 = vmatpush1.bf16.msra.mxu0 0
      %541 = vmatprep.subr.bf16.mxu0 0
      %542 = vmatpush1.bf16.msra.mxu0 0
      %543 = vmatprep.subr.bf16.mxu0 0
      %544 = vmatpush1.bf16.msra.mxu0 0
      %545 = vmatprep.subr.bf16.mxu0 0
      %546 = vmatpush1.bf16.msra.mxu0 %v529
      %547 = vmatprep.subr.bf16.mxu0 0
      %548 = vmatpush2.bf16.msra.mxu0 0
      %549 = vmatprep.subr.bf16.mxu0 0
      %550 = vmatpush2.bf16.msra.mxu0 0
      %551 = vmatprep.subr.bf16.mxu0 0
      %552 = vmatpush2.bf16.msra.mxu0 0
      %553 = vmatprep.subr.bf16.mxu0 0
      %554 = vmatpush2.bf16.msra.mxu0 0
      %555 = vmatprep.subr.bf16.mxu0 0
      %556 = vmatpush2.bf16.msra.mxu0 0
      %557 = vmatprep.subr.bf16.mxu0 0
      %558 = vmatpush2.bf16.msra.mxu0 0
      %559 = vmatprep.subr.bf16.mxu0 0
      %560 = vmatpush2.bf16.msra.mxu0 0
      %561 = vmatprep.subr.bf16.mxu0 0
      %562 = vmatpush2.bf16.msra.mxu0 0
      %563 = vmatprep.mubr.bf16.mxu0 0
      %564 = vmatmul.mubr.bf16.gmra.mxu0 %v324
      %v565 = vpop.f32.mrf.mxu0
      %v566 = vadd.f32 0.0, %v565
      %v567 = vpop.f32.mrf.mxu0
      %v568 = vpop.f32.mrf.mxu0
      %v569 = vadd.f32 0.0, %v568
      %v570 = vpop.f32.mrf.mxu0
      %571 = vdwg.mxu0
      %v572 = vpack.c.bf16 %v569, %v566
      %v574 = vunpack.c.l.b16 %v572
      %v575 = vunpack.c.h.b16 %v572
      %v576 = vpack.c.b16 %v574, %v574
      %v577 = vpack.c.b16 %v575, %v575
      %s580 = scalar_lea.vmem %s262, 16
      %581 = vst.msk [vmem:[%s580] sm:$0xf] %vm378, %v576
      %582 = vst.msk [vmem:[%s580 + $0x4] sm:$0xf] %vm378, %v577
      %s583 = scalar_lea.vmem %s240, 6
      %v584 = vld [vmem:[%s583] sm:$0x3]
      %v586 = vsel %vm269, %v584, 0
      %588 = vmatprep.subr.bf16.mxu0 0
      %589 = vmatpush1.bf16.msra.mxu0 0
      %590 = vmatprep.subr.bf16.mxu0 0
      %591 = vmatpush1.bf16.msra.mxu0 0
      %592 = vmatprep.subr.bf16.mxu0 0
      %593 = vmatpush1.bf16.msra.mxu0 0
      %594 = vmatprep.subr.bf16.mxu0 0
      %595 = vmatpush1.bf16.msra.mxu0 0
      %596 = vmatprep.subr.bf16.mxu0 0
      %597 = vmatpush1.bf16.msra.mxu0 0
      %598 = vmatprep.subr.bf16.mxu0 0
      %599 = vmatpush1.bf16.msra.mxu0 0
      %600 = vmatprep.subr.bf16.mxu0 0
      %601 = vmatpush1.bf16.msra.mxu0 0
      %602 = vmatprep.subr.bf16.mxu0 0
      %603 = vmatpush1.bf16.msra.mxu0 %v275
      %604 = vmatprep.subr.bf16.mxu0 0
      %605 = vmatpush2.bf16.msra.mxu0 0
      %606 = vmatprep.subr.bf16.mxu0 0
      %607 = vmatpush2.bf16.msra.mxu0 0
      %608 = vmatprep.subr.bf16.mxu0 0
      %609 = vmatpush2.bf16.msra.mxu0 0
      %610 = vmatprep.subr.bf16.mxu0 0
      %611 = vmatpush2.bf16.msra.mxu0 0
      %612 = vmatprep.subr.bf16.mxu0 0
      %613 = vmatpush2.bf16.msra.mxu0 0
      %614 = vmatprep.subr.bf16.mxu0 0
      %615 = vmatpush2.bf16.msra.mxu0 0
      %616 = vmatprep.subr.bf16.mxu0 0
      %617 = vmatpush2.bf16.msra.mxu0 0
      %618 = vmatprep.subr.bf16.mxu0 0
      %619 = vmatpush2.bf16.msra.mxu0 0
      %620 = vmatprep.mubr.bf16.mxu0 0
      %621 = vmatmul.mubr.bf16.gmra.mxu0 %v586
      %v622 = vpop.f32.mrf.mxu0
      %v623 = vadd.f32 0.0, %v622
      %v624 = vpop.f32.mrf.mxu0
      %v625 = vpop.f32.mrf.mxu0
      %v626 = vpop.f32.mrf.mxu0
      %627 = vdwg.mxu0
      %v628 = vpack.c.bf16 %v623, %v623
      %v630 = vsel %vm273, %v628, 0
      %632 = vmatprep.subr.bf16.mxu0 0
      %633 = vmatpush1.bf16.msra.mxu0 0
      %634 = vmatprep.subr.bf16.mxu0 0
      %635 = vmatpush1.bf16.msra.mxu0 0
      %636 = vmatprep.subr.bf16.mxu0 0
      %637 = vmatpush1.bf16.msra.mxu0 0
      %638 = vmatprep.subr.bf16.mxu0 0
      %639 = vmatpush1.bf16.msra.mxu0 0
      %640 = vmatprep.subr.bf16.mxu0 0
      %641 = vmatpush1.bf16.msra.mxu0 0
      %642 = vmatprep.subr.bf16.mxu0 0
      %643 = vmatpush1.bf16.msra.mxu0 0
      %644 = vmatprep.subr.bf16.mxu0 0
      %645 = vmatpush1.bf16.msra.mxu0 0
      %646 = vmatprep.subr.bf16.mxu0 0
      %647 = vmatpush1.bf16.msra.mxu0 %v630
      %648 = vmatprep.subr.bf16.mxu0 0
      %649 = vmatpush2.bf16.msra.mxu0 0
      %650 = vmatprep.subr.bf16.mxu0 0
      %651 = vmatpush2.bf16.msra.mxu0 0
      %652 = vmatprep.subr.bf16.mxu0 0
      %653 = vmatpush2.bf16.msra.mxu0 0
      %654 = vmatprep.subr.bf16.mxu0 0
      %655 = vmatpush2.bf16.msra.mxu0 0
      %656 = vmatprep.subr.bf16.mxu0 0
      %657 = vmatpush2.bf16.msra.mxu0 0
      %658 = vmatprep.subr.bf16.mxu0 0
      %659 = vmatpush2.bf16.msra.mxu0 0
      %660 = vmatprep.subr.bf16.mxu0 0
      %661 = vmatpush2.bf16.msra.mxu0 0
      %662 = vmatprep.subr.bf16.mxu0 0
      %663 = vmatpush2.bf16.msra.mxu0 0
      %664 = vmatprep.mubr.bf16.mxu0 0
      %665 = vmatmul.mubr.bf16.gmra.mxu0 %v324
      %v666 = vpop.f32.mrf.mxu0
      %v667 = vadd.f32 0.0, %v666
      %v668 = vpop.f32.mrf.mxu0
      %v669 = vpop.f32.mrf.mxu0
      %v670 = vadd.f32 0.0, %v669
      %v671 = vpop.f32.mrf.mxu0
      %672 = vdwg.mxu0
      %v673 = vpack.c.bf16 %v670, %v667
      %v675 = vunpack.c.l.b16 %v673
      %v676 = vunpack.c.h.b16 %v673
      %v677 = vpack.c.b16 %v675, %v675
      %v678 = vpack.c.b16 %v676, %v676
      %s681 = scalar_lea.vmem %s262, 24
      %682 = vst.msk [vmem:[%s681] sm:$0xf] %vm378, %v677
      %683 = vst.msk [vmem:[%s681 + $0x4] sm:$0xf] %vm378, %v678
      %s684 = scalar_lea.vmem %s240, 8
      %v685 = vld [vmem:[%s684] sm:$0x3]
      %v687 = vsel %vm269, %v685, 0
      %689 = vmatprep.subr.bf16.mxu0 0
      %690 = vmatpush1.bf16.msra.mxu0 0
      %691 = vmatprep.subr.bf16.mxu0 0
      %692 = vmatpush1.bf16.msra.mxu0 0
      %693 = vmatprep.subr.bf16.mxu0 0
      %694 = vmatpush1.bf16.msra.mxu0 0
      %695 = vmatprep.subr.bf16.mxu0 0
      %696 = vmatpush1.bf16.msra.mxu0 0
      %697 = vmatprep.subr.bf16.mxu0 0
      %698 = vmatpush1.bf16.msra.mxu0 0
      %699 = vmatprep.subr.bf16.mxu0 0
      %700 = vmatpush1.bf16.msra.mxu0 0
      %701 = vmatprep.subr.bf16.mxu0 0
      %702 = vmatpush1.bf16.msra.mxu0 0
      %703 = vmatprep.subr.bf16.mxu0 0
      %704 = vmatpush1.bf16.msra.mxu0 %v275
      %705 = vmatprep.subr.bf16.mxu0 0
      %706 = vmatpush2.bf16.msra.mxu0 0
      %707 = vmatprep.subr.bf16.mxu0 0
      %708 = vmatpush2.bf16.msra.mxu0 0
      %709 = vmatprep.subr.bf16.mxu0 0
      %710 = vmatpush2.bf16.msra.mxu0 0
      %711 = vmatprep.subr.bf16.mxu0 0
      %712 = vmatpush2.bf16.msra.mxu0 0
      %713 = vmatprep.subr.bf16.mxu0 0
      %714 = vmatpush2.bf16.msra.mxu0 0
      %715 = vmatprep.subr.bf16.mxu0 0
      %716 = vmatpush2.bf16.msra.mxu0 0
      %717 = vmatprep.subr.bf16.mxu0 0
      %718 = vmatpush2.bf16.msra.mxu0 0
      %719 = vmatprep.subr.bf16.mxu0 0
      %720 = vmatpush2.bf16.msra.mxu0 0
      %721 = vmatprep.mubr.bf16.mxu0 0
      %722 = vmatmul.mubr.bf16.gmra.mxu0 %v687
      %v723 = vpop.f32.mrf.mxu0
      %v724 = vadd.f32 0.0, %v723
      %v725 = vpop.f32.mrf.mxu0
      %v726 = vpop.f32.mrf.mxu0
      %v727 = vpop.f32.mrf.mxu0
      %728 = vdwg.mxu0
      %v729 = vpack.c.bf16 %v724, %v724
      %v731 = vsel %vm273, %v729, 0
      %733 = vmatprep.subr.bf16.mxu0 0
      %734 = vmatpush1.bf16.msra.mxu0 0
      %735 = vmatprep.subr.bf16.mxu0 0
      %736 = vmatpush1.bf16.msra.mxu0 0
      %737 = vmatprep.subr.bf16.mxu0 0
      %738 = vmatpush1.bf16.msra.mxu0 0
      %739 = vmatprep.subr.bf16.mxu0 0
      %740 = vmatpush1.bf16.msra.mxu0 0
      %741 = vmatprep.subr.bf16.mxu0 0
      %742 = vmatpush1.bf16.msra.mxu0 0
      %743 = vmatprep.subr.bf16.mxu0 0
      %744 = vmatpush1.bf16.msra.mxu0 0
      %745 = vmatprep.subr.bf16.mxu0 0
      %746 = vmatpush1.bf16.msra.mxu0 0
      %747 = vmatprep.subr.bf16.mxu0 0
      %748 = vmatpush1.bf16.msra.mxu0 %v731
      %749 = vmatprep.subr.bf16.mxu0 0
      %750 = vmatpush2.bf16.msra.mxu0 0
      %751 = vmatprep.subr.bf16.mxu0 0
      %752 = vmatpush2.bf16.msra.mxu0 0
      %753 = vmatprep.subr.bf16.mxu0 0
      %754 = vmatpush2.bf16.msra.mxu0 0
      %755 = vmatprep.subr.bf16.mxu0 0
      %756 = vmatpush2.bf16.msra.mxu0 0
      %757 = vmatprep.subr.bf16.mxu0 0
      %758 = vmatpush2.bf16.msra.mxu0 0
      %759 = vmatprep.subr.bf16.mxu0 0
      %760 = vmatpush2.bf16.msra.mxu0 0
      %761 = vmatprep.subr.bf16.mxu0 0
      %762 = vmatpush2.bf16.msra.mxu0 0
      %763 = vmatprep.subr.bf16.mxu0 0
      %764 = vmatpush2.bf16.msra.mxu0 0
      %765 = vmatprep.mubr.bf16.mxu0 0
      %766 = vmatmul.mubr.bf16.gmra.mxu0 %v324
      %v767 = vpop.f32.mrf.mxu0
      %v768 = vadd.f32 0.0, %v767
      %v769 = vpop.f32.mrf.mxu0
      %v770 = vpop.f32.mrf.mxu0
      %v771 = vadd.f32 0.0, %v770
      %v772 = vpop.f32.mrf.mxu0
      %773 = vdwg.mxu0
      %v774 = vpack.c.bf16 %v771, %v768
      %v776 = vunpack.c.l.b16 %v774
      %v777 = vunpack.c.h.b16 %v774
      %v778 = vpack.c.b16 %v776, %v776
      %v779 = vpack.c.b16 %v777, %v777
      %s782 = scalar_lea.vmem %s262, 32
      %783 = vst.msk [vmem:[%s782] sm:$0xf] %vm378, %v778
      %784 = vst.msk [vmem:[%s782 + $0x4] sm:$0xf] %vm378, %v779
      %s785 = scalar_lea.vmem %s240, 10
      %v786 = vld [vmem:[%s785] sm:$0x3]
      %v788 = vsel %vm269, %v786, 0
      %790 = vmatprep.subr.bf16.mxu0 0
      %791 = vmatpush1.bf16.msra.mxu0 0
      %792 = vmatprep.subr.bf16.mxu0 0
      %793 = vmatpush1.bf16.msra.mxu0 0
      %794 = vmatprep.subr.bf16.mxu0 0
      %795 = vmatpush1.bf16.msra.mxu0 0
      %796 = vmatprep.subr.bf16.mxu0 0
      %797 = vmatpush1.bf16.msra.mxu0 0
      %798 = vmatprep.subr.bf16.mxu0 0
      %799 = vmatpush1.bf16.msra.mxu0 0
      %800 = vmatprep.subr.bf16.mxu0 0
      %801 = vmatpush1.bf16.msra.mxu0 0
      %802 = vmatprep.subr.bf16.mxu0 0
      %803 = vmatpush1.bf16.msra.mxu0 0
      %804 = vmatprep.subr.bf16.mxu0 0
      %805 = vmatpush1.bf16.msra.mxu0 %v275
      %806 = vmatprep.subr.bf16.mxu0 0
      %807 = vmatpush2.bf16.msra.mxu0 0
      %808 = vmatprep.subr.bf16.mxu0 0
      %809 = vmatpush2.bf16.msra.mxu0 0
      %810 = vmatprep.subr.bf16.mxu0 0
      %811 = vmatpush2.bf16.msra.mxu0 0
      %812 = vmatprep.subr.bf16.mxu0 0
      %813 = vmatpush2.bf16.msra.mxu0 0
      %814 = vmatprep.subr.bf16.mxu0 0
      %815 = vmatpush2.bf16.msra.mxu0 0
      %816 = vmatprep.subr.bf16.mxu0 0
      %817 = vmatpush2.bf16.msra.mxu0 0
      %818 = vmatprep.subr.bf16.mxu0 0
      %819 = vmatpush2.bf16.msra.mxu0 0
      %820 = vmatprep.subr.bf16.mxu0 0
      %821 = vmatpush2.bf16.msra.mxu0 0
      %822 = vmatprep.mubr.bf16.mxu0 0
      %823 = vmatmul.mubr.bf16.gmra.mxu0 %v788
      %v824 = vpop.f32.mrf.mxu0
      %v825 = vadd.f32 0.0, %v824
      %v826 = vpop.f32.mrf.mxu0
      %v827 = vpop.f32.mrf.mxu0
      %v828 = vpop.f32.mrf.mxu0
      %829 = vdwg.mxu0
      %v830 = vpack.c.bf16 %v825, %v825
      %v832 = vsel %vm273, %v830, 0
      %834 = vmatprep.subr.bf16.mxu0 0
      %835 = vmatpush1.bf16.msra.mxu0 0
      %836 = vmatprep.subr.bf16.mxu0 0
      %837 = vmatpush1.bf16.msra.mxu0 0
      %838 = vmatprep.subr.bf16.mxu0 0
      %839 = vmatpush1.bf16.msra.mxu0 0
      %840 = vmatprep.subr.bf16.mxu0 0
      %841 = vmatpush1.bf16.msra.mxu0 0
      %842 = vmatprep.subr.bf16.mxu0 0
      %843 = vmatpush1.bf16.msra.mxu0 0
      %844 = vmatprep.subr.bf16.mxu0 0
      %845 = vmatpush1.bf16.msra.mxu0 0
      %846 = vmatprep.subr.bf16.mxu0 0
      %847 = vmatpush1.bf16.msra.mxu0 0
      %848 = vmatprep.subr.bf16.mxu0 0
      %849 = vmatpush1.bf16.msra.mxu0 %v832
      %850 = vmatprep.subr.bf16.mxu0 0
      %851 = vmatpush2.bf16.msra.mxu0 0
      %852 = vmatprep.subr.bf16.mxu0 0
      %853 = vmatpush2.bf16.msra.mxu0 0
      %854 = vmatprep.subr.bf16.mxu0 0
      %855 = vmatpush2.bf16.msra.mxu0 0
      %856 = vmatprep.subr.bf16.mxu0 0
      %857 = vmatpush2.bf16.msra.mxu0 0
      %858 = vmatprep.subr.bf16.mxu0 0
      %859 = vmatpush2.bf16.msra.mxu0 0
      %860 = vmatprep.subr.bf16.mxu0 0
      %861 = vmatpush2.bf16.msra.mxu0 0
      %862 = vmatprep.subr.bf16.mxu0 0
      %863 = vmatpush2.bf16.msra.mxu0 0
      %864 = vmatprep.subr.bf16.mxu0 0
      %865 = vmatpush2.bf16.msra.mxu0 0
      %866 = vmatprep.mubr.bf16.mxu0 0
      %867 = vmatmul.mubr.bf16.gmra.mxu0 %v324
      %v868 = vpop.f32.mrf.mxu0
      %v869 = vadd.f32 0.0, %v868
      %v870 = vpop.f32.mrf.mxu0
      %v871 = vpop.f32.mrf.mxu0
      %v872 = vadd.f32 0.0, %v871
      %v873 = vpop.f32.mrf.mxu0
      %874 = vdwg.mxu0
      %v875 = vpack.c.bf16 %v872, %v869
      %v877 = vunpack.c.l.b16 %v875
      %v878 = vunpack.c.h.b16 %v875
      %v879 = vpack.c.b16 %v877, %v877
      %v880 = vpack.c.b16 %v878, %v878
      %s883 = scalar_lea.vmem %s262, 40
      %884 = vst.msk [vmem:[%s883] sm:$0xf] %vm378, %v879
      %885 = vst.msk [vmem:[%s883 + $0x4] sm:$0xf] %vm378, %v880
      %s886 = scalar_lea.vmem %s240, 12
      %v887 = vld [vmem:[%s886] sm:$0x3]
      %v889 = vsel %vm269, %v887, 0
      %891 = vmatprep.subr.bf16.mxu0 0
      %892 = vmatpush1.bf16.msra.mxu0 0
      %893 = vmatprep.subr.bf16.mxu0 0
      %894 = vmatpush1.bf16.msra.mxu0 0
      %895 = vmatprep.subr.bf16.mxu0 0
      %896 = vmatpush1.bf16.msra.mxu0 0
      %897 = vmatprep.subr.bf16.mxu0 0
      %898 = vmatpush1.bf16.msra.mxu0 0
      %899 = vmatprep.subr.bf16.mxu0 0
      %900 = vmatpush1.bf16.msra.mxu0 0
      %901 = vmatprep.subr.bf16.mxu0 0
      %902 = vmatpush1.bf16.msra.mxu0 0
      %903 = vmatprep.subr.bf16.mxu0 0
      %904 = vmatpush1.bf16.msra.mxu0 0
      %905 = vmatprep.subr.bf16.mxu0 0
      %906 = vmatpush1.bf16.msra.mxu0 %v275
      %907 = vmatprep.subr.bf16.mxu0 0
      %908 = vmatpush2.bf16.msra.mxu0 0
      %909 = vmatprep.subr.bf16.mxu0 0
      %910 = vmatpush2.bf16.msra.mxu0 0
      %911 = vmatprep.subr.bf16.mxu0 0
      %912 = vmatpush2.bf16.msra.mxu0 0
      %913 = vmatprep.subr.bf16.mxu0 0
      %914 = vmatpush2.bf16.msra.mxu0 0
      %915 = vmatprep.subr.bf16.mxu0 0
      %916 = vmatpush2.bf16.msra.mxu0 0
      %917 = vmatprep.subr.bf16.mxu0 0
      %918 = vmatpush2.bf16.msra.mxu0 0
      %919 = vmatprep.subr.bf16.mxu0 0
      %920 = vmatpush2.bf16.msra.mxu0 0
      %921 = vmatprep.subr.bf16.mxu0 0
      %922 = vmatpush2.bf16.msra.mxu0 0
      %923 = vmatprep.mubr.bf16.mxu0 0
      %924 = vmatmul.mubr.bf16.gmra.mxu0 %v889
      %v925 = vpop.f32.mrf.mxu0
      %v926 = vadd.f32 0.0, %v925
      %v927 = vpop.f32.mrf.mxu0
      %v928 = vpop.f32.mrf.mxu0
      %v929 = vpop.f32.mrf.mxu0
      %930 = vdwg.mxu0
      %v931 = vpack.c.bf16 %v926, %v926
      %v933 = vsel %vm273, %v931, 0
      %935 = vmatprep.subr.bf16.mxu0 0
      %936 = vmatpush1.bf16.msra.mxu0 0
      %937 = vmatprep.subr.bf16.mxu0 0
      %938 = vmatpush1.bf16.msra.mxu0 0
      %939 = vmatprep.subr.bf16.mxu0 0
      %940 = vmatpush1.bf16.msra.mxu0 0
      %941 = vmatprep.subr.bf16.mxu0 0
      %942 = vmatpush1.bf16.msra.mxu0 0
      %943 = vmatprep.subr.bf16.mxu0 0
      %944 = vmatpush1.bf16.msra.mxu0 0
      %945 = vmatprep.subr.bf16.mxu0 0
      %946 = vmatpush1.bf16.msra.mxu0 0
      %947 = vmatprep.subr.bf16.mxu0 0
      %948 = vmatpush1.bf16.msra.mxu0 0
      %949 = vmatprep.subr.bf16.mxu0 0
      %950 = vmatpush1.bf16.msra.mxu0 %v933
      %951 = vmatprep.subr.bf16.mxu0 0
      %952 = vmatpush2.bf16.msra.mxu0 0
      %953 = vmatprep.subr.bf16.mxu0 0
      %954 = vmatpush2.bf16.msra.mxu0 0
      %955 = vmatprep.subr.bf16.mxu0 0
      %956 = vmatpush2.bf16.msra.mxu0 0
      %957 = vmatprep.subr.bf16.mxu0 0
      %958 = vmatpush2.bf16.msra.mxu0 0
      %959 = vmatprep.subr.bf16.mxu0 0
      %960 = vmatpush2.bf16.msra.mxu0 0
      %961 = vmatprep.subr.bf16.mxu0 0
      %962 = vmatpush2.bf16.msra.mxu0 0
      %963 = vmatprep.subr.bf16.mxu0 0
      %964 = vmatpush2.bf16.msra.mxu0 0
      %965 = vmatprep.subr.bf16.mxu0 0
      %966 = vmatpush2.bf16.msra.mxu0 0
      %967 = vmatprep.mubr.bf16.mxu0 0
      %968 = vmatmul.mubr.bf16.gmra.mxu0 %v324
      %v969 = vpop.f32.mrf.mxu0
      %v970 = vadd.f32 0.0, %v969
      %v971 = vpop.f32.mrf.mxu0
      %v972 = vpop.f32.mrf.mxu0
      %v973 = vadd.f32 0.0, %v972
      %v974 = vpop.f32.mrf.mxu0
      %975 = vdwg.mxu0
      %v976 = vpack.c.bf16 %v973, %v970
      %v978 = vunpack.c.l.b16 %v976
      %v979 = vunpack.c.h.b16 %v976
      %v980 = vpack.c.b16 %v978, %v978
      %v981 = vpack.c.b16 %v979, %v979
      %s984 = scalar_lea.vmem %s262, 48
      %985 = vst.msk [vmem:[%s984] sm:$0xf] %vm378, %v980
      %986 = vst.msk [vmem:[%s984 + $0x4] sm:$0xf] %vm378, %v981
      %s987 = smul.u32 7, %s20
      %p988 = scmp.lt.s32.totalorder %s19, 1
      %s989 = scalar_select %p988, %s19, 1
      %p990 = scmp.lt.s32.totalorder %s987, 20
      %s991 = scalar_select %p990, %s987, 20
      %p992 = scmp.lt.s32.totalorder %s21, 0
      %s993 = scalar_select %p992, %s21, 0
      %s994 = smul.addr %s991, 2
      %s995 = sadd.s32 %s993, %s994
      %s996 = smul.addr %s989, 42
      %s997 = sadd.s32 %s995, %s996
      %s998 = smul.addr %s997, 4
      %s999 = scalar_lea.vmem %s3, %s998
      // Predicated region
      $region33: #{uhrnet_forward.3} parent=31 // pred_check
        %p1000 = pneg %p130
      $region34: #{uhrnet_forward.3} parent=31 // pred_check_branch
        %1002 = sbr.rel (%p1000) target = $region36
      $region35: #{uhrnet_forward.3} parent=31 // pred_region
        %s1003 = smul.u32 7, %s20
      $region36: #{uhrnet_forward.3} parent=31 // pred_fallthru
        _
    $region32: #{uhrnet_forward.3} parent=5 // pred_fallthru
      _
    %p1004 = scmp.le.s32.totalorder 2, %s9
    // Predicated region
    $region37: #{uhrnet_forward.3} parent=5 // pred_check
      %p1005 = pneg %p1004
    $region38: #{uhrnet_forward.3} parent=5 // pred_check_branch
      %1007 = sbr.rel (%p1005) target = $region40
    $region39: #{uhrnet_forward.3} parent=5 // pred_region
      %s1008 = ssub.s32 %s9, 2
      // Predicated region
      $region41: #{uhrnet_forward.3} parent=39 // pred_check
        %p1009 = pneg %p136
      $region42: #{uhrnet_forward.3} parent=39 // pred_check_branch
        %1011 = sbr.rel (%p1009) target = $region44
      $region43: #{uhrnet_forward.3} parent=39 // pred_region
        %s1012 = smul.u32 7, %s23
        %p1013 = scmp.lt.s32.totalorder %s22, 1
        %s1014 = scalar_select %p1013, %s22, 1
        %p1015 = scmp.lt.s32.totalorder %s1012, 20
        %s1016 = scalar_select %p1015, %s1012, 20
        %p1017 = scmp.lt.s32.totalorder %s24, 0
        %s1018 = scalar_select %p1017, %s24, 0
        %s1019 = smul.addr %s1016, 2
        %s1020 = sadd.s32 %s1018, %s1019
        %s1021 = smul.addr %s1014, 42
        %s1022 = sadd.s32 %s1020, %s1021
        %s1023 = smul.addr %s1022, 4
        %s1024 = scalar_lea.vmem %s3, %s1023
      $region44: #{uhrnet_forward.3} parent=39 // pred_fallthru
        _
    $region40: #{uhrnet_forward.3} parent=5 // pred_fallthru
      _
  $region6: #{uhrnet_forward.3} parent=0 // loop_footer
    %s13 = sadd.s32 1, %s9
  $region7: #{uhrnet_forward.3} parent=0 // loop_footer_branch
    %8 = sbr.rel target = $region3
  $region8: #{uhrnet_forward.3} parent=0 // loop_exit
    _

// kernel: uhrnet_forward.2
$region0: #{uhrnet_forward.2}
  #allocation0 [shape = 'u32[]', space=smem, size = 0x4, offset = 0x4, fixed_abs, tag = 'smem constant byte address 0x4 - core index']
  #allocation1 [shape = 'u32[144,128]{1,0:T(1,128)}', space=vmem, size = 0x12000, scoped, tag = 'internal scratch']
  %s0 = inlined_call_operand.vmem [shape: bf16[2,64,16], index: 0, kind: input, shape index: {}]
  %s1 = inlined_call_operand.vmem [shape: bf16[384,64], index: 1, kind: input, shape index: {}]
  %s2 = inlined_call_operand.vmem [shape: f32[384,1], index: 2, kind: input, shape index: {}]
  %s3 = inlined_call_operand.vmem [shape: bf16[384,384], index: 3, kind: input, shape index: {}]
  %s4 = inlined_call_operand.vmem [shape: f32[384,1], index: 4, kind: input, shape index: {}]
  %s5 = inlined_call_operand.vmem [shape: bf16[32,384], index: 5, kind: input, shape index: {}]
  %s6 = inlined_call_operand.vmem [shape: f32[32,1], index: 6, kind: input, shape index: {}]
  %s7 = inlined_call_operand.vmem [shape: bf16[2,32,16], index: 7, kind: output, shape index: {}]
  %s8 = sld [smem:[#allocation0]]
  $region61: #{uhrnet_forward.2} parent=0
    _
  %s10 = ssub.s32 1, %s8
  %s11 = scalar_select 0, %s10, %s8
  loop: start=0, step=1, limit=4
  $region2: #{uhrnet_forward.2} parent=0 // loop_pre_header
    _
  $region3: #{uhrnet_forward.2} parent=0 // loop_header
    %s13 = sphi 0, %s17
    %p14 = scmp.ge.s32.totalorder %s13, 4
    %s20 = sphi 0, %s32
    %s21 = sphi 0, %s28
    %s22 = sphi 0, %s20
    %s23 = sphi 0, %s21
    %s24 = sphi 0, %s22
    %s25 = sphi 0, %s23
    %s37 = sphi 0, %s39
    %s40 = sphi 0, %s37
    %s41 = sphi 0, %s40
    %s57 = sphi 0, %s41
    %s61 = sphi 0, %s61
    %s63 = sphi 0, %s61
    %s64 = sphi 0, %s63
    %s78 = sphi 0, %s64
    %s82 = sphi 0, %s82
    %s84 = sphi 0, %s82
    %s85 = sphi 0, %s84
    %s99 = sphi 0, %s85
    %s103 = sphi 0, %s103
    %s105 = sphi 0, %s103
    %s106 = sphi 0, %s105
    %s120 = sphi 0, %s106
    %s124 = sphi 0, %s124
    %s126 = sphi 0, %s124
    %s127 = sphi 0, %s126
    %s141 = sphi 0, %s127
    %s145 = sphi 0, %s145
    %s147 = sphi 0, %s145
    %s148 = sphi 0, %s147
    %s162 = sphi 0, %s148
    %s166 = sphi 0, %s166
    %s168 = sphi 0, %s166
    %s169 = sphi 0, %s168
    %s183 = sphi 0, %s169
    %s191 = sphi 0, %s193
    %s194 = sphi 0, %s191
    %s195 = sphi 0, %s194
    %s211 = sphi 0, %s195
  $region4: #{uhrnet_forward.2} parent=0 // loop_header_branch
    %16 = sbr.rel (%p14) target = $region8
  $region5: #{uhrnet_forward.2} parent=0 // loop_body
    %s18 = ssub.s32 %s13, 1
    %s19 = ssub.s32 %s13, 2
    %s26 = sadd.s32 1, %s21
    %p27 = scmp.ge.s32.totalorder %s26, 1
    %s28 = scalar_select %p27, 0, %s26
    %s29 = sadd.s32 1, %s20
    %s30 = scalar_select %p27, %s29, %s20
    %p31 = scmp.ge.s32.totalorder %s30, 2
    %s32 = scalar_select %p31, 0, %s30
    %s33 = ssub.s32 %s20, %s32
    %s34 = ssub.s32 %s21, %s28
    %s35 = sor.u32 %s33, %s34
    %p36 = scmp.eq.s32.totalorder %s35, 0
    %s38 = sadd.s32 %s37, 1
    %s39 = scalar_select %p36, %s37, %s38
    %p42 = pneg %p36
    %p43 = scmp.eq.s32.totalorder %s13, 1
    %p44 = por %p42, %p43
    %p45 = scmp.ne.s32.totalorder %s37, %s40
    %p46 = scmp.eq.s32.totalorder %s13, 0
    %p47 = por %p45, %p46
    %p48 = scmp.ne.s32.totalorder %s37, %s40
    %p49 = scmp.eq.s32.totalorder %s18, 1
    %p50 = por %p48, %p49
    %p51 = scmp.ne.s32.totalorder %s40, %s41
    %p52 = scmp.eq.s32.totalorder %s18, 0
    %p53 = por %p51, %p52
    %p54 = scmp.ne.s32.totalorder %s40, %s41
    %p55 = scmp.eq.s32.totalorder %s19, 1
    %p56 = por %p54, %p55
    %p58 = scmp.ne.s32.totalorder %s41, %s57
    %p59 = scmp.eq.s32.totalorder %s19, 0
    %p60 = por %p58, %p59
    %s62 = sadd.s32 %s61, 1
    %p65 = scmp.eq.s32.totalorder %s13, 1
    %p66 = scmp.ne.s32.totalorder %s61, %s63
    %p67 = scmp.eq.s32.totalorder %s13, 0
    %p68 = por %p66, %p67
    %p69 = scmp.ne.s32.totalorder %s61, %s63
    %p70 = scmp.eq.s32.totalorder %s18, 1
    %p71 = por %p69, %p70
    %p72 = scmp.ne.s32.totalorder %s63, %s64
    %p73 = scmp.eq.s32.totalorder %s18, 0
    %p74 = por %p72, %p73
    %p75 = scmp.ne.s32.totalorder %s63, %s64
    %p76 = scmp.eq.s32.totalorder %s19, 1
    %p77 = por %p75, %p76
    %p79 = scmp.ne.s32.totalorder %s64, %s78
    %p80 = scmp.eq.s32.totalorder %s19, 0
    %p81 = por %p79, %p80
    %s83 = sadd.s32 %s82, 1
    %p86 = scmp.eq.s32.totalorder %s13, 1
    %p87 = scmp.ne.s32.totalorder %s82, %s84
    %p88 = scmp.eq.s32.totalorder %s13, 0
    %p89 = por %p87, %p88
    %p90 = scmp.ne.s32.totalorder %s82, %s84
    %p91 = scmp.eq.s32.totalorder %s18, 1
    %p92 = por %p90, %p91
    %p93 = scmp.ne.s32.totalorder %s84, %s85
    %p94 = scmp.eq.s32.totalorder %s18, 0
    %p95 = por %p93, %p94
    %p96 = scmp.ne.s32.totalorder %s84, %s85
    %p97 = scmp.eq.s32.totalorder %s19, 1
    %p98 = por %p96, %p97
    %p100 = scmp.ne.s32.totalorder %s85, %s99
    %p101 = scmp.eq.s32.totalorder %s19, 0
    %p102 = por %p100, %p101
    %s104 = sadd.s32 %s103, 1
    %p107 = scmp.eq.s32.totalorder %s13, 1
    %p108 = scmp.ne.s32.totalorder %s103, %s105
    %p109 = scmp.eq.s32.totalorder %s13, 0
    %p110 = por %p108, %p109
    %p111 = scmp.ne.s32.totalorder %s103, %s105
    %p112 = scmp.eq.s32.totalorder %s18, 1
    %p113 = por %p111, %p112
    %p114 = scmp.ne.s32.totalorder %s105, %s106
    %p115 = scmp.eq.s32.totalorder %s18, 0
    %p116 = por %p114, %p115
    %p117 = scmp.ne.s32.totalorder %s105, %s106
    %p118 = scmp.eq.s32.totalorder %s19, 1
    %p119 = por %p117, %p118
    %p121 = scmp.ne.s32.totalorder %s106, %s120
    %p122 = scmp.eq.s32.totalorder %s19, 0
    %p123 = por %p121, %p122
    %s125 = sadd.s32 %s124, 1
    %p128 = scmp.eq.s32.totalorder %s13, 1
    %p129 = scmp.ne.s32.totalorder %s124, %s126
    %p130 = scmp.eq.s32.totalorder %s13, 0
    %p131 = por %p129, %p130
    %p132 = scmp.ne.s32.totalorder %s124, %s126
    %p133 = scmp.eq.s32.totalorder %s18, 1
    %p134 = por %p132, %p133
    %p135 = scmp.ne.s32.totalorder %s126, %s127
    %p136 = scmp.eq.s32.totalorder %s18, 0
    %p137 = por %p135, %p136
    %p138 = scmp.ne.s32.totalorder %s126, %s127
    %p139 = scmp.eq.s32.totalorder %s19, 1
    %p140 = por %p138, %p139
    %p142 = scmp.ne.s32.totalorder %s127, %s141
    %p143 = scmp.eq.s32.totalorder %s19, 0
    %p144 = por %p142, %p143
    %s146 = sadd.s32 %s145, 1
    %p149 = scmp.eq.s32.totalorder %s13, 1
    %p150 = scmp.ne.s32.totalorder %s145, %s147
    %p151 = scmp.eq.s32.totalorder %s13, 0
    %p152 = por %p150, %p151
    %p153 = scmp.ne.s32.totalorder %s145, %s147
    %p154 = scmp.eq.s32.totalorder %s18, 1
    %p155 = por %p153, %p154
    %p156 = scmp.ne.s32.totalorder %s147, %s148
    %p157 = scmp.eq.s32.totalorder %s18, 0
    %p158 = por %p156, %p157
    %p159 = scmp.ne.s32.totalorder %s147, %s148
    %p160 = scmp.eq.s32.totalorder %s19, 1
    %p161 = por %p159, %p160
    %p163 = scmp.ne.s32.totalorder %s148, %s162
    %p164 = scmp.eq.s32.totalorder %s19, 0
    %p165 = por %p163, %p164
    %s167 = sadd.s32 %s166, 1
    %p170 = scmp.eq.s32.totalorder %s13, 1
    %p171 = scmp.ne.s32.totalorder %s166, %s168
    %p172 = scmp.eq.s32.totalorder %s13, 0
    %p173 = por %p171, %p172
    %p174 = scmp.ne.s32.totalorder %s166, %s168
    %p175 = scmp.eq.s32.totalorder %s18, 1
    %p176 = por %p174, %p175
    %p177 = scmp.ne.s32.totalorder %s168, %s169
    %p178 = scmp.eq.s32.totalorder %s18, 0
    %p179 = por %p177, %p178
    %p180 = scmp.ne.s32.totalorder %s168, %s169
    %p181 = scmp.eq.s32.totalorder %s19, 1
    %p182 = por %p180, %p181
    %p184 = scmp.ne.s32.totalorder %s169, %s183
    %p185 = scmp.eq.s32.totalorder %s19, 0
    %p186 = por %p184, %p185
    %s187 = ssub.s32 %s20, %s32
    %s188 = ssub.s32 %s21, %s28
    %s189 = sor.u32 %s187, %s188
    %p190 = scmp.eq.s32.totalorder %s189, 0
    %s192 = sadd.s32 %s191, 1
    %s193 = scalar_select %p190, %s191, %s192
    %p196 = pneg %p190
    %p197 = scmp.eq.s32.totalorder %s13, 1
    %p198 = por %p196, %p197
    %p199 = scmp.ne.s32.totalorder %s191, %s194
    %p200 = scmp.eq.s32.totalorder %s13, 0
    %p201 = por %p199, %p200
    %p202 = scmp.ne.s32.totalorder %s191, %s194
    %p203 = scmp.eq.s32.totalorder %s18, 1
    %p204 = por %p202, %p203
    %p205 = scmp.ne.s32.totalorder %s194, %s195
    %p206 = scmp.eq.s32.totalorder %s18, 0
    %p207 = por %p205, %p206
    %p208 = scmp.ne.s32.totalorder %s194, %s195
    %p209 = scmp.eq.s32.totalorder %s19, 1
    %p210 = por %p208, %p209
    %p212 = scmp.ne.s32.totalorder %s195, %s211
    %p213 = scmp.eq.s32.totalorder %s19, 0
    %p214 = por %p212, %p213
    %p215 = scmp.le.s32.totalorder 1, %s13
    %p216 = scmp.lt.s32.totalorder %s13, 3
    %p217 = pnand %p215, %p216
    %p218 = pneg %p217
    // Predicated region
    $region9: #{uhrnet_forward.2} parent=5 // pred_check
      _
    $region10: #{uhrnet_forward.2} parent=5 // pred_check_branch
      %220 = sbr.rel (%p217) target = $region12
    $region11: #{uhrnet_forward.2} parent=5 // pred_region
      %s221 = ssub.s32 %s13, 1
      // Predicated region
      $region13: #{uhrnet_forward.2} parent=11 // pred_check
        %p222 = pneg %p74
      $region14: #{uhrnet_forward.2} parent=11 // pred_check_branch
        %224 = sbr.rel (%p222) target = $region16
      $region15: #{uhrnet_forward.2} parent=11 // pred_region
        _
      $region16: #{uhrnet_forward.2} parent=11 // pred_fallthru
        _
      // Predicated region
      $region17: #{uhrnet_forward.2} parent=11 // pred_check
        %p225 = pneg %p95
      $region18: #{uhrnet_forward.2} parent=11 // pred_check_branch
        %227 = sbr.rel (%p225) target = $region20
      $region19: #{uhrnet_forward.2} parent=11 // pred_region
        _
      $region20: #{uhrnet_forward.2} parent=11 // pred_fallthru
        _
      // Predicated region
      $region21: #{uhrnet_forward.2} parent=11 // pred_check
        %p228 = pneg %p116
      $region22: #{uhrnet_forward.2} parent=11 // pred_check_branch
        %230 = sbr.rel (%p228) target = $region24
      $region23: #{uhrnet_forward.2} parent=11 // pred_region
        _
      $region24: #{uhrnet_forward.2} parent=11 // pred_fallthru
        _
      // Predicated region
      $region25: #{uhrnet_forward.2} parent=11 // pred_check
        %p231 = pneg %p137
      $region26: #{uhrnet_forward.2} parent=11 // pred_check_branch
        %233 = sbr.rel (%p231) target = $region28
      $region27: #{uhrnet_forward.2} parent=11 // pred_region
        _
      $region28: #{uhrnet_forward.2} parent=11 // pred_fallthru
        _
      // Predicated region
      $region29: #{uhrnet_forward.2} parent=11 // pred_check
        %p234 = pneg %p158
      $region30: #{uhrnet_forward.2} parent=11 // pred_check_branch
        %236 = sbr.rel (%p234) target = $region32
      $region31: #{uhrnet_forward.2} parent=11 // pred_region
        _
      $region32: #{uhrnet_forward.2} parent=11 // pred_fallthru
        _
      // Predicated region
      $region33: #{uhrnet_forward.2} parent=11 // pred_check
        %p237 = pneg %p179
      $region34: #{uhrnet_forward.2} parent=11 // pred_check_branch
        %239 = sbr.rel (%p237) target = $region36
      $region35: #{uhrnet_forward.2} parent=11 // pred_region
        _
      $region36: #{uhrnet_forward.2} parent=11 // pred_fallthru
        _
    $region12: #{uhrnet_forward.2} parent=5 // pred_fallthru
      _
    %p240 = scmp.lt.s32.totalorder %s13, 2
    // Predicated region
    $region37: #{uhrnet_forward.2} parent=5 // pred_check
      %p241 = pneg %p240
    $region38: #{uhrnet_forward.2} parent=5 // pred_check_branch
      %243 = sbr.rel (%p241) target = $region40
    $region39: #{uhrnet_forward.2} parent=5 // pred_region
      // Predicated region
      $region41: #{uhrnet_forward.2} parent=39 // pred_check
        %p244 = pneg %p47
      $region42: #{uhrnet_forward.2} parent=39 // pred_check_branch
        %246 = sbr.rel (%p244) target = $region44
      $region43: #{uhrnet_forward.2} parent=39 // pred_region
        %p247 = scmp.lt.s32.totalorder %s20, 1
        %s248 = scalar_select %p247, %s20, 1
        %p249 = scmp.lt.s32.totalorder %s21, 0
        %s250 = scalar_select %p249, %s21, 0
        %s251 = smul.addr %s248, 8
        %s252 = sadd.s32 %s250, %s251
        %s253 = smul.addr %s252, 4
        %s254 = scalar_lea.vmem %s0, %s253
      $region44: #{uhrnet_forward.2} parent=39 // pred_fallthru
        _
    $region40: #{uhrnet_forward.2} parent=5 // pred_fallthru
      _
    %p255 = scmp.le.s32.totalorder 1, %s13
    %p256 = scmp.lt.s32.totalorder %s13, 3
    %p257 = pnand %p255, %p256
    %p258 = pneg %p257
    // Predicated region
    $region45: #{uhrnet_forward.2} parent=5 // pred_check
      _
    $region46: #{uhrnet_forward.2} parent=5 // pred_check_branch
      %260 = sbr.rel (%p257) target = $region48
    $region47: #{uhrnet_forward.2} parent=5 // pred_region
      %s261 = ssub.s32 %s13, 1
      %p262 = scmp.lt.s32.totalorder %s22, 1
      %s263 = scalar_select %p262, %s22, 1
      %p264 = scmp.lt.s32.totalorder %s23, 0
      %s265 = scalar_select %p264, %s23, 0
      %s266 = smul.addr %s263, 8
      %s267 = sadd.s32 %s265, %s266
      %s268 = smul.addr %s267, 4
      %s269 = scalar_lea.vmem %s0, %s268
      %p270 = pneg %p53
      %p271 = pneg %p50
      %p272 = pneg %p74
      %p273 = pneg %p71
      %p274 = pneg %p95
      %p275 = pneg %p92
      %p276 = pneg %p116
      %p277 = pneg %p113
      %p278 = pneg %p137
      %p279 = pneg %p134
      %p280 = pneg %p158
      %p281 = pneg %p155
      %p282 = pneg %p179
      %p283 = pneg %p176
      %p284 = pneg %p207
      %p285 = pneg %p204
      %p286 = scmp.lt.s32.totalorder %s22, 1
      %s287 = scalar_select %p286, %s22, 1
      %p288 = scmp.lt.s32.totalorder %s23, 0
      %s289 = scalar_select %p288, %s23, 0
      %s290 = smul.addr %s287, 4
      %s291 = sadd.s32 %s289, %s290
      %s292 = smul.addr %s291, 4
      %s293 = scalar_lea.vmem %s7, %s292
      %p294 = scmp.lt.s32.totalorder %s22, 1
      %s295 = scalar_select %p294, %s22, 1
      %p296 = scmp.lt.s32.totalorder %s23, 0
      %s297 = scalar_select %p296, %s23, 0
      %s298 = smul.addr %s295, 8
      %s299 = sadd.s32 %s297, %s298
      %s300 = smul.addr %s299, 4
      %s301 = scalar_lea.vmem %s0, %s300
      %p302 = scmp.lt.s32.totalorder %s22, 1
      %s303 = scalar_select %p302, %s22, 1
      %p304 = scmp.lt.s32.totalorder %s23, 0
      %s305 = scalar_select %p304, %s23, 0
      %s306 = smul.addr %s303, 4
      %s307 = sadd.s32 %s305, %s306
      %s308 = smul.addr %s307, 4
      %s309 = scalar_lea.vmem %s7, %s308
      %v311 = vld [vmem:[%s301] sm:$0xf]
      %v312 = vld [vmem:[%s301 + $0x4] sm:$0xf]
      %v313 = vld [vmem:[%s301 + $0x8] sm:$0xf]
      %v314 = vld [vmem:[%s301 + $0xc] sm:$0xf]
      %v315 = vld [vmem:[%s301 + $0x10] sm:$0xf]
      %v316 = vld [vmem:[%s301 + $0x14] sm:$0xf]
      %v317 = vld [vmem:[%s301 + $0x18] sm:$0xf]
      %v318 = vld [vmem:[%s301 + $0x1c] sm:$0xf]
      %v319 = vld [vmem:[%s1] sm:$0xf]
      %v320 = vld [vmem:[%s1 + $0x4] sm:$0xf]
      %v321 = vld [vmem:[%s1 + $0x8] sm:$0xf]
      %v322 = vld [vmem:[%s1 + $0xc] sm:$0xf]
      %v323 = vld [vmem:[%s1 + $0x10] sm:$0xf]
      %v324 = vld [vmem:[%s1 + $0x14] sm:$0xf]
      %v325 = vld [vmem:[%s1 + $0x18] sm:$0xf]
      %v326 = vld [vmem:[%s1 + $0x1c] sm:$0xf]
      %v327 = vld [vmem:[%s1 + $0x20] sm:$0xf]
      %v328 = vld [vmem:[%s1 + $0x24] sm:$0xf]
      %v329 = vld [vmem:[%s1 + $0x28] sm:$0xf]
      %v330 = vld [vmem:[%s1 + $0x2c] sm:$0xf]
      %v331 = vld [vmem:[%s1 + $0x30] sm:$0xf]
      %v332 = vld [vmem:[%s1 + $0x34] sm:$0xf]
      %v333 = vld [vmem:[%s1 + $0x38] sm:$0xf]
      %v334 = vld [vmem:[%s1 + $0x3c] sm:$0xf]
      %v335 = vld [vmem:[%s1 + $0x40] sm:$0xf]
      %v336 = vld [vmem:[%s1 + $0x44] sm:$0xf]
      %v337 = vld [vmem:[%s1 + $0x48] sm:$0xf]
      %v338 = vld [vmem:[%s1 + $0x4c] sm:$0xf]
      %v339 = vld [vmem:[%s1 + $0x50] sm:$0xf]
      %v340 = vld [vmem:[%s1 + $0x54] sm:$0xf]
      %v341 = vld [vmem:[%s1 + $0x58] sm:$0xf]
      %v342 = vld [vmem:[%s1 + $0x5c] sm:$0xf]
      %v343 = vld [vmem:[%s1 + $0x60] sm:$0xf]
      %v344 = vld [vmem:[%s1 + $0x64] sm:$0xf]
      %v345 = vld [vmem:[%s1 + $0x68] sm:$0xf]
      %v346 = vld [vmem:[%s1 + $0x6c] sm:$0xf]
      %v347 = vld [vmem:[%s1 + $0x70] sm:$0xf]
      %v348 = vld [vmem:[%s1 + $0x74] sm:$0xf]
      %v349 = vld [vmem:[%s1 + $0x78] sm:$0xf]
      %v350 = vld [vmem:[%s1 + $0x7c] sm:$0xf]
      %v351 = vld [vmem:[%s1 + $0x80] sm:$0xf]
      %v352 = vld [vmem:[%s1 + $0x84] sm:$0xf]
      %v353 = vld [vmem:[%s1 + $0x88] sm:$0xf]
      %v354 = vld [vmem:[%s1 + $0x8c] sm:$0xf]
      %v355 = vld [vmem:[%s1 + $0x90] sm:$0xf]
      %v356 = vld [vmem:[%s1 + $0x94] sm:$0xf]
      %v357 = vld [vmem:[%s1 + $0x98] sm:$0xf]
      %v358 = vld [vmem:[%s1 + $0x9c] sm:$0xf]
      %v359 = vld [vmem:[%s1 + $0xa0] sm:$0xf]
      %v360 = vld [vmem:[%s1 + $0xa4] sm:$0xf]
      %v361 = vld [vmem:[%s1 + $0xa8] sm:$0xf]
      %v362 = vld [vmem:[%s1 + $0xac] sm:$0xf]
      %v363 = vld [vmem:[%s1 + $0xb0] sm:$0xf]
      %v364 = vld [vmem:[%s1 + $0xb4] sm:$0xf]
      %v365 = vld [vmem:[%s1 + $0xb8] sm:$0xf]
      %v366 = vld [vmem:[%s1 + $0xbc] sm:$0xf]
      %v367 = vld [vmem:[%s2] sm:$0xff]
      %v368 = vld [vmem:[%s2 + $0x8] sm:$0xff]
      %v369 = vld [vmem:[%s2 + $0x10] sm:$0xff]
      %v370 = vld [vmem:[%s2 + $0x18] sm:$0xff]
      %v371 = vld [vmem:[%s2 + $0x20] sm:$0xff]
      %v372 = vld [vmem:[%s2 + $0x28] sm:$0xff]
      %v373 = vld [vmem:[%s2 + $0x30] sm:$0xff]
      %v374 = vld [vmem:[%s2 + $0x38] sm:$0xff]
      %v375 = vld [vmem:[%s2 + $0x40] sm:$0xff]
      %v376 = vld [vmem:[%s2 + $0x48] sm:$0xff]
      %v377 = vld [vmem:[%s2 + $0x50] sm:$0xff]
      %v378 = vld [vmem:[%s2 + $0x58] sm:$0xff]
      %v379 = vld [vmem:[%s2 + $0x60] sm:$0xff]
      %v380 = vld [vmem:[%s2 + $0x68] sm:$0xff]
      %v381 = vld [vmem:[%s2 + $0x70] sm:$0xff]
      %v382 = vld [vmem:[%s2 + $0x78] sm:$0xff]
      %v383 = vld [vmem:[%s2 + $0x80] sm:$0xff]
      %v384 = vld [vmem:[%s2 + $0x88] sm:$0xff]
      %v385 = vld [vmem:[%s2 + $0x90] sm:$0xff]
      %v386 = vld [vmem:[%s2 + $0x98] sm:$0xff]
      %v387 = vld [vmem:[%s2 + $0xa0] sm:$0xff]
      %v388 = vld [vmem:[%s2 + $0xa8] sm:$0xff]
      %v389 = vld [vmem:[%s2 + $0xb0] sm:$0xff]
      %v390 = vld [vmem:[%s2 + $0xb8] sm:$0xff]
      %v391 = vld [vmem:[%s2 + $0xc0] sm:$0xff]
      %v392 = vld [vmem:[%s2 + $0xc8] sm:$0xff]
      %v393 = vld [vmem:[%s2 + $0xd0] sm:$0xff]
      %v394 = vld [vmem:[%s2 + $0xd8] sm:$0xff]
      %v395 = vld [vmem:[%s2 + $0xe0] sm:$0xff]
      %v396 = vld [vmem:[%s2 + $0xe8] sm:$0xff]
      %v397 = vld [vmem:[%s2 + $0xf0] sm:$0xff]
      %v398 = vld [vmem:[%s2 + $0xf8] sm:$0xff]
      %v399 = vld [vmem:[%s2 + $0x100] sm:$0xff]
      %v400 = vld [vmem:[%s2 + $0x108] sm:$0xff]
      %v401 = vld [vmem:[%s2 + $0x110] sm:$0xff]
      %v402 = vld [vmem:[%s2 + $0x118] sm:$0xff]
      %v403 = vld [vmem:[%s2 + $0x120] sm:$0xff]
      %v404 = vld [vmem:[%s2 + $0x128] sm:$0xff]
      %v405 = vld [vmem:[%s2 + $0x130] sm:$0xff]
      %v406 = vld [vmem:[%s2 + $0x138] sm:$0xff]
      %v407 = vld [vmem:[%s2 + $0x140] sm:$0xff]
      %v408 = vld [vmem:[%s2 + $0x148] sm:$0xff]
      %v409 = vld [vmem:[%s2 + $0x150] sm:$0xff]
      %v410 = vld [vmem:[%s2 + $0x158] sm:$0xff]
      %v411 = vld [vmem:[%s2 + $0x160] sm:$0xff]
      %v412 = vld [vmem:[%s2 + $0x168] sm:$0xff]
      %v413 = vld [vmem:[%s2 + $0x170] sm:$0xff]
      %v414 = vld [vmem:[%s2 + $0x178] sm:$0xff]
      %416 = vset.pattern.permute.xlu0 0
      %417 = vperm.xlu0 %416, %v367
      %v418 = vpop.permute.xlu0 %417
      %421 = vset.pattern.permute.xlu0 0
      %422 = vperm.xlu0 %421, %v368
      %v423 = vpop.permute.xlu0 %422
      %426 = vset.pattern.permute.xlu0 0
      %427 = vperm.xlu0 %426, %v369
      %v428 = vpop.permute.xlu0 %427
      %431 = vset.pattern.permute.xlu0 0
      %432 = vperm.xlu0 %431, %v370
      %v433 = vpop.permute.xlu0 %432
      %436 = vset.pattern.permute.xlu0 0
      %437 = vperm.xlu0 %436, %v371
      %v438 = vpop.permute.xlu0 %437
      %441 = vset.pattern.permute.xlu0 0
      %442 = vperm.xlu0 %441, %v372
      %v443 = vpop.permute.xlu0 %442
      %446 = vset.pattern.permute.xlu0 0
      %447 = vperm.xlu0 %446, %v373
      %v448 = vpop.permute.xlu0 %447
      %451 = vset.pattern.permute.xlu0 0
      %452 = vperm.xlu0 %451, %v374
      %v453 = vpop.permute.xlu0 %452
      %456 = vset.pattern.permute.xlu0 0
      %457 = vperm.xlu0 %456, %v375
      %v458 = vpop.permute.xlu0 %457
      %461 = vset.pattern.permute.xlu0 0
      %462 = vperm.xlu0 %461, %v376
      %v463 = vpop.permute.xlu0 %462
      %466 = vset.pattern.permute.xlu0 0
      %467 = vperm.xlu0 %466, %v377
      %v468 = vpop.permute.xlu0 %467
      %471 = vset.pattern.permute.xlu0 0
      %472 = vperm.xlu0 %471, %v378
      %v473 = vpop.permute.xlu0 %472
      %476 = vset.pattern.permute.xlu0 0
      %477 = vperm.xlu0 %476, %v379
      %v478 = vpop.permute.xlu0 %477
      %481 = vset.pattern.permute.xlu0 0
      %482 = vperm.xlu0 %481, %v380
      %v483 = vpop.permute.xlu0 %482
      %486 = vset.pattern.permute.xlu0 0
      %487 = vperm.xlu0 %486, %v381
      %v488 = vpop.permute.xlu0 %487
      %491 = vset.pattern.permute.xlu0 0
      %492 = vperm.xlu0 %491, %v382
      %v493 = vpop.permute.xlu0 %492
      %496 = vset.pattern.permute.xlu0 0
      %497 = vperm.xlu0 %496, %v383
      %v498 = vpop.permute.xlu0 %497
      %501 = vset.pattern.permute.xlu0 0
      %502 = vperm.xlu0 %501, %v384
      %v503 = vpop.permute.xlu0 %502
      %506 = vset.pattern.permute.xlu0 0
      %507 = vperm.xlu0 %506, %v385
      %v508 = vpop.permute.xlu0 %507
      %511 = vset.pattern.permute.xlu0 0
      %512 = vperm.xlu0 %511, %v386
      %v513 = vpop.permute.xlu0 %512
      %516 = vset.pattern.permute.xlu0 0
      %517 = vperm.xlu0 %516, %v387
      %v518 = vpop.permute.xlu0 %517
      %521 = vset.pattern.permute.xlu0 0
      %522 = vperm.xlu0 %521, %v388
      %v523 = vpop.permute.xlu0 %522
      %526 = vset.pattern.permute.xlu0 0
      %527 = vperm.xlu0 %526, %v389
      %v528 = vpop.permute.xlu0 %527
      %531 = vset.pattern.permute.xlu0 0
      %532 = vperm.xlu0 %531, %v390
      %v533 = vpop.permute.xlu0 %532
      %536 = vset.pattern.permute.xlu0 0
      %537 = vperm.xlu0 %536, %v391
      %v538 = vpop.permute.xlu0 %537
      %541 = vset.pattern.permute.xlu0 0
      %542 = vperm.xlu0 %541, %v392
      %v543 = vpop.permute.xlu0 %542
      %546 = vset.pattern.permute.xlu0 0
      %547 = vperm.xlu0 %546, %v393
      %v548 = vpop.permute.xlu0 %547
      %551 = vset.pattern.permute.xlu0 0
      %552 = vperm.xlu0 %551, %v394
      %v553 = vpop.permute.xlu0 %552
      %556 = vset.pattern.permute.xlu0 0
      %557 = vperm.xlu0 %556, %v395
      %v558 = vpop.permute.xlu0 %557
      %561 = vset.pattern.permute.xlu0 0
      %562 = vperm.xlu0 %561, %v396
      %v563 = vpop.permute.xlu0 %562
      %566 = vset.pattern.permute.xlu0 0
      %567 = vperm.xlu0 %566, %v397
      %v568 = vpop.permute.xlu0 %567
      %571 = vset.pattern.permute.xlu0 0
      %572 = vperm.xlu0 %571, %v398
      %v573 = vpop.permute.xlu0 %572
      %576 = vset.pattern.permute.xlu0 0
      %577 = vperm.xlu0 %576, %v399
      %v578 = vpop.permute.xlu0 %577
      %581 = vset.pattern.permute.xlu0 0
      %582 = vperm.xlu0 %581, %v400
      %v583 = vpop.permute.xlu0 %582
      %586 = vset.pattern.permute.xlu0 0
      %587 = vperm.xlu0 %586, %v401
      %v588 = vpop.permute.xlu0 %587
      %591 = vset.pattern.permute.xlu0 0
      %592 = vperm.xlu0 %591, %v402
      %v593 = vpop.permute.xlu0 %592
      %596 = vset.pattern.permute.xlu0 0
      %597 = vperm.xlu0 %596, %v403
      %v598 = vpop.permute.xlu0 %597
      %601 = vset.pattern.permute.xlu0 0
      %602 = vperm.xlu0 %601, %v404
      %v603 = vpop.permute.xlu0 %602
      %606 = vset.pattern.permute.xlu0 0
      %607 = vperm.xlu0 %606, %v405
      %v608 = vpop.permute.xlu0 %607
      %611 = vset.pattern.permute.xlu0 0
      %612 = vperm.xlu0 %611, %v406
      %v613 = vpop.permute.xlu0 %612
      %616 = vset.pattern.permute.xlu0 0
      %617 = vperm.xlu0 %616, %v407
      %v618 = vpop.permute.xlu0 %617
      %621 = vset.pattern.permute.xlu0 0
      %622 = vperm.xlu0 %621, %v408
      %v623 = vpop.permute.xlu0 %622
      %626 = vset.pattern.permute.xlu0 0
      %627 = vperm.xlu0 %626, %v409
      %v628 = vpop.permute.xlu0 %627
      %631 = vset.pattern.permute.xlu0 0
      %632 = vperm.xlu0 %631, %v410
      %v633 = vpop.permute.xlu0 %632
      %636 = vset.pattern.permute.xlu0 0
      %637 = vperm.xlu0 %636, %v411
      %v638 = vpop.permute.xlu0 %637
      %641 = vset.pattern.permute.xlu0 0
      %642 = vperm.xlu0 %641, %v412
      %v643 = vpop.permute.xlu0 %642
      %646 = vset.pattern.permute.xlu0 0
      %647 = vperm.xlu0 %646, %v413
      %v648 = vpop.permute.xlu0 %647
      %651 = vset.pattern.permute.xlu0 0
      %652 = vperm.xlu0 %651, %v414
      %v653 = vpop.permute.xlu0 %652
      %v703 = vunpack.c.l.b16 %v319
      %v704 = vunpack.c.l.b16 %v320
      %v705 = vunpack.c.l.b16 %v321
      %v706 = vunpack.c.l.b16 %v322
      %v707 = vunpack.c.l.b16 %v323
      %v708 = vunpack.c.l.b16 %v324
      %v709 = vunpack.c.l.b16 %v325
      %v710 = vunpack.c.l.b16 %v326
      %v711 = vunpack.c.l.b16 %v327
      %v712 = vunpack.c.l.b16 %v328
      %v713 = vunpack.c.l.b16 %v329
      %v714 = vunpack.c.l.b16 %v330
      %v715 = vunpack.c.l.b16 %v331
      %v716 = vunpack.c.l.b16 %v332
      %v717 = vunpack.c.l.b16 %v333
      %v718 = vunpack.c.l.b16 %v334
      %v719 = vunpack.c.l.b16 %v335
      %v720 = vunpack.c.l.b16 %v336
      %v721 = vunpack.c.l.b16 %v337
      %v722 = vunpack.c.l.b16 %v338
      %v723 = vunpack.c.l.b16 %v339
      %v724 = vunpack.c.l.b16 %v340
      %v725 = vunpack.c.l.b16 %v341
      %v726 = vunpack.c.l.b16 %v342
      %v727 = vunpack.c.l.b16 %v343
      %v728 = vunpack.c.l.b16 %v344
      %v729 = vunpack.c.l.b16 %v345
      %v730 = vunpack.c.l.b16 %v346
      %v731 = vunpack.c.l.b16 %v347
      %v732 = vunpack.c.l.b16 %v348
      %v733 = vunpack.c.l.b16 %v349
      %v734 = vunpack.c.l.b16 %v350
      %v735 = vunpack.c.l.b16 %v351
      %v736 = vunpack.c.l.b16 %v352
      %v737 = vunpack.c.l.b16 %v353
      %v738 = vunpack.c.l.b16 %v354
      %v739 = vunpack.c.l.b16 %v355
      %v740 = vunpack.c.l.b16 %v356
      %v741 = vunpack.c.l.b16 %v357
      %v742 = vunpack.c.l.b16 %v358
      %v743 = vunpack.c.l.b16 %v359
      %v744 = vunpack.c.l.b16 %v360
      %v745 = vunpack.c.l.b16 %v361
      %v746 = vunpack.c.l.b16 %v362
      %v747 = vunpack.c.l.b16 %v363
      %v748 = vunpack.c.l.b16 %v364
      %v749 = vunpack.c.l.b16 %v365
      %v750 = vunpack.c.l.b16 %v366
      %v751 = vpack.c.b16 %v704, %v703
      %v752 = vpack.c.b16 %v706, %v705
      %v753 = vpack.c.b16 %v708, %v707
      %v754 = vpack.c.b16 %v710, %v709
      %v755 = vpack.c.b16 %v712, %v711
      %v756 = vpack.c.b16 %v714, %v713
      %v757 = vpack.c.b16 %v716, %v715
      %v758 = vpack.c.b16 %v718, %v717
      %v759 = vpack.c.b16 %v720, %v719
      %v760 = vpack.c.b16 %v722, %v721
      %v761 = vpack.c.b16 %v724, %v723
      %v762 = vpack.c.b16 %v726, %v725
      %v763 = vpack.c.b16 %v728, %v727
      %v764 = vpack.c.b16 %v730, %v729
      %v765 = vpack.c.b16 %v732, %v731
      %v766 = vpack.c.b16 %v734, %v733
      %v767 = vpack.c.b16 %v736, %v735
      %v768 = vpack.c.b16 %v738, %v737
      %v769 = vpack.c.b16 %v740, %v739
      %v770 = vpack.c.b16 %v742, %v741
      %v771 = vpack.c.b16 %v744, %v743
      %v772 = vpack.c.b16 %v746, %v745
      %v773 = vpack.c.b16 %v748, %v747
      %v774 = vpack.c.b16 %v750, %v749
      %v783 = vunpack.c.l.b16 %v311
      %v784 = vunpack.c.l.b16 %v312
      %v785 = vunpack.c.l.b16 %v313
      %v786 = vunpack.c.l.b16 %v314
      %v787 = vunpack.c.l.b16 %v315
      %v788 = vunpack.c.l.b16 %v316
      %v789 = vunpack.c.l.b16 %v317
      %v790 = vunpack.c.l.b16 %v318
      %v791 = vpack.c.b16 %v784, %v783
      %v792 = vpack.c.b16 %v786, %v785
      %v793 = vpack.c.b16 %v788, %v787
      %v794 = vpack.c.b16 %v790, %v789
      %vm799 = vcmask 523264
      %v801 = vsel %vm799, %v751, 0
      %v804 = vsel %vm799, %v752, 0
      %v807 = vsel %vm799, %v753, 0
      %v810 = vsel %vm799, %v754, 0
      %v813 = vsel %vm799, %v755, 0
      %v816 = vsel %vm799, %v756, 0
      %v819 = vsel %vm799, %v757, 0
      %v822 = vsel %vm799, %v758, 0
      %v825 = vsel %vm799, %v759, 0
      %v828 = vsel %vm799, %v760, 0
      %v831 = vsel %vm799, %v761, 0
      %v834 = vsel %vm799, %v762, 0
      %v837 = vsel %vm799, %v763, 0
      %v840 = vsel %vm799, %v764, 0
      %v843 = vsel %vm799, %v765, 0
      %v846 = vsel %vm799, %v766, 0
      %v849 = vsel %vm799, %v767, 0
      %v852 = vsel %vm799, %v768, 0
      %v855 = vsel %vm799, %v769, 0
      %v858 = vsel %vm799, %v770, 0
      %v861 = vsel %vm799, %v771, 0
      %v864 = vsel %vm799, %v772, 0
      %v867 = vsel %vm799, %v773, 0
      %v870 = vsel %vm799, %v774, 0
      %872 = vmatprep.subr.bf16.mxu0 0
      %873 = vmatpush1.bf16.msra.mxu0 0
      %874 = vmatprep.subr.bf16.mxu0 0
      %875 = vmatpush1.bf16.msra.mxu0 0
      %876 = vmatprep.subr.bf16.mxu0 0
      %877 = vmatpush1.bf16.msra.mxu0 0
      %878 = vmatprep.subr.bf16.mxu0 0
      %879 = vmatpush1.bf16.msra.mxu0 0
      %880 = vmatprep.subr.bf16.mxu0 0
      %881 = vmatpush1.bf16.msra.mxu0 %v794
      %882 = vmatprep.subr.bf16.mxu0 0
      %883 = vmatpush1.bf16.msra.mxu0 %v793
      %884 = vmatprep.subr.bf16.mxu0 0
      %885 = vmatpush1.bf16.msra.mxu0 %v792
      %886 = vmatprep.subr.bf16.mxu0 0
      %887 = vmatpush1.bf16.msra.mxu0 %v791
      %888 = vmatprep.subr.bf16.mxu0 0
      %889 = vmatpush2.bf16.msra.mxu0 0
      %890 = vmatprep.subr.bf16.mxu0 0
      %891 = vmatpush2.bf16.msra.mxu0 0
      %892 = vmatprep.subr.bf16.mxu0 0
      %893 = vmatpush2.bf16.msra.mxu0 0
      %894 = vmatprep.subr.bf16.mxu0 0
      %895 = vmatpush2.bf16.msra.mxu0 0
      %896 = vmatprep.subr.bf16.mxu0 0
      %897 = vmatpush2.bf16.msra.mxu0 0
      %898 = vmatprep.subr.bf16.mxu0 0
      %899 = vmatpush2.bf16.msra.mxu0 0
      %900 = vmatprep.subr.bf16.mxu0 0
      %901 = vmatpush2.bf16.msra.mxu0 0
      %902 = vmatprep.subr.bf16.mxu0 0
      %903 = vmatpush2.bf16.msra.mxu0 0
      %904 = vmatprep.mubr.bf16.mxu0 0
      %905 = vmatmul.mubr.bf16.gmra.mxu0 %v801
      %v906 = vpop.f32.mrf.mxu0
      %v907 = vadd.f32 %v418, %v906
      %v908 = vpop.f32.mrf.mxu0
      %v909 = vpop.f32.mrf.mxu0
      %v910 = vadd.f32 %v423, %v909
      %v911 = vpop.f32.mrf.mxu0
      %912 = vmatprep.mubr.bf16.mxu0 0
      %913 = vmatmul.mubr.bf16.gmra.mxu0 %v804
      %v914 = vpop.f32.mrf.mxu0
      %v915 = vadd.f32 %v428, %v914
      %v916 = vpop.f32.mrf.mxu0
      %v917 = vpop.f32.mrf.mxu0
      %v918 = vadd.f32 %v433, %v917
      %v919 = vpop.f32.mrf.mxu0
      %920 = vmatprep.mubr.bf16.mxu0 0
      %921 = vmatmul.mubr.bf16.gmra.mxu0 %v807
      %v922 = vpop.f32.mrf.mxu0
      %v923 = vadd.f32 %v438, %v922
      %v924 = vpop.f32.mrf.mxu0
      %v925 = vpop.f32.mrf.mxu0
      %v926 = vadd.f32 %v443, %v925
      %v927 = vpop.f32.mrf.mxu0
      %928 = vmatprep.mubr.bf16.mxu0 0
      %929 = vmatmul.mubr.bf16.gmra.mxu0 %v810
      %v930 = vpop.f32.mrf.mxu0
      %v931 = vadd.f32 %v448, %v930
      %v932 = vpop.f32.mrf.mxu0
      %v933 = vpop.f32.mrf.mxu0
      %v934 = vadd.f32 %v453, %v933
      %v935 = vpop.f32.mrf.mxu0
      %936 = vmatprep.mubr.bf16.mxu0 0
      %937 = vmatmul.mubr.bf16.gmra.mxu0 %v813
      %v938 = vpop.f32.mrf.mxu0
      %v939 = vadd.f32 %v458, %v938
      %v940 = vpop.f32.mrf.mxu0
      %v941 = vpop.f32.mrf.mxu0
      %v942 = vadd.f32 %v463, %v941
      %v943 = vpop.f32.mrf.mxu0
      %944 = vmatprep.mubr.bf16.mxu0 0
      %945 = vmatmul.mubr.bf16.gmra.mxu0 %v816
      %v946 = vpop.f32.mrf.mxu0
      %v947 = vadd.f32 %v468, %v946
      %v948 = vpop.f32.mrf.mxu0
      %v949 = vpop.f32.mrf.mxu0
      %v950 = vadd.f32 %v473, %v949
      %v951 = vpop.f32.mrf.mxu0
      %952 = vmatprep.mubr.bf16.mxu0 0
      %953 = vmatmul.mubr.bf16.gmra.mxu0 %v819
      %v954 = vpop.f32.mrf.mxu0
      %v955 = vadd.f32 %v478, %v954
      %v956 = vpop.f32.mrf.mxu0
      %v957 = vpop.f32.mrf.mxu0
      %v958 = vadd.f32 %v483, %v957
      %v959 = vpop.f32.mrf.mxu0
      %960 = vmatprep.mubr.bf16.mxu0 0
      %961 = vmatmul.mubr.bf16.gmra.mxu0 %v822
      %v962 = vpop.f32.mrf.mxu0
      %v963 = vadd.f32 %v488, %v962
      %v964 = vpop.f32.mrf.mxu0
      %v965 = vpop.f32.mrf.mxu0
      %v966 = vadd.f32 %v493, %v965
      %v967 = vpop.f32.mrf.mxu0
      %968 = vmatprep.mubr.bf16.mxu0 0
      %969 = vmatmul.mubr.bf16.gmra.mxu0 %v825
      %v970 = vpop.f32.mrf.mxu0
      %v971 = vadd.f32 %v498, %v970
      %v972 = vpop.f32.mrf.mxu0
      %v973 = vpop.f32.mrf.mxu0
      %v974 = vadd.f32 %v503, %v973
      %v975 = vpop.f32.mrf.mxu0
      %976 = vmatprep.mubr.bf16.mxu0 0
      %977 = vmatmul.mubr.bf16.gmra.mxu0 %v828
      %v978 = vpop.f32.mrf.mxu0
      %v979 = vadd.f32 %v508, %v978
      %v980 = vpop.f32.mrf.mxu0
      %v981 = vpop.f32.mrf.mxu0
      %v982 = vadd.f32 %v513, %v981
      %v983 = vpop.f32.mrf.mxu0
      %984 = vmatprep.mubr.bf16.mxu0 0
      %985 = vmatmul.mubr.bf16.gmra.mxu0 %v831
      %v986 = vpop.f32.mrf.mxu0
      %v987 = vadd.f32 %v518, %v986
      %v988 = vpop.f32.mrf.mxu0
      %v989 = vpop.f32.mrf.mxu0
      %v990 = vadd.f32 %v523, %v989
      %v991 = vpop.f32.mrf.mxu0
      %992 = vmatprep.mubr.bf16.mxu0 0
      %993 = vmatmul.mubr.bf16.gmra.mxu0 %v834
      %v994 = vpop.f32.mrf.mxu0
      %v995 = vadd.f32 %v528, %v994
      %v996 = vpop.f32.mrf.mxu0
      %v997 = vpop.f32.mrf.mxu0
      %v998 = vadd.f32 %v533, %v997
      %v999 = vpop.f32.mrf.mxu0
      %1000 = vmatprep.mubr.bf16.mxu0 0
      %1001 = vmatmul.mubr.bf16.gmra.mxu0 %v837
      %v1002 = vpop.f32.mrf.mxu0
      %v1003 = vadd.f32 %v538, %v1002
      %v1004 = vpop.f32.mrf.mxu0
      %v1005 = vpop.f32.mrf.mxu0
      %v1006 = vadd.f32 %v543, %v1005
      %v1007 = vpop.f32.mrf.mxu0
      %1008 = vmatprep.mubr.bf16.mxu0 0
      %1009 = vmatmul.mubr.bf16.gmra.mxu0 %v840
      %v1010 = vpop.f32.mrf.mxu0
      %v1011 = vadd.f32 %v548, %v1010
      %v1012 = vpop.f32.mrf.mxu0
      %v1013 = vpop.f32.mrf.mxu0
      %v1014 = vadd.f32 %v553, %v1013
      %v1015 = vpop.f32.mrf.mxu0
      %1016 = vmatprep.mubr.bf16.mxu0 0
      %1017 = vmatmul.mubr.bf16.gmra.mxu0 %v843
      %v1018 = vpop.f32.mrf.mxu0
      %v1019 = vadd.f32 %v558, %v1018
      %v1020 = vpop.f32.mrf.mxu0
      %v1021 = vpop.f32.mrf.mxu0
      %v1022 = vadd.f32 %v563, %v1021
      %v1023 = vpop.f32.mrf.mxu0
      %1024 = vmatprep.mubr.bf16.mxu0 0
      %1025 = vmatmul.mubr.bf16.gmra.mxu0 %v846
      %v1026 = vpop.f32.mrf.mxu0
      %v1027 = vadd.f32 %v568, %v1026
      %v1028 = vpop.f32.mrf.mxu0
      %v1029 = vpop.f32.mrf.mxu0
      %v1030 = vadd.f32 %v573, %v1029
      %v1031 = vpop.f32.mrf.mxu0
      %1032 = vmatprep.mubr.bf16.mxu0 0
      %1033 = vmatmul.mubr.bf16.gmra.mxu0 %v849
      %v1034 = vpop.f32.mrf.mxu0
      %v1035 = vadd.f32 %v578, %v1034
      %v1036 = vpop.f32.mrf.mxu0
      %v1037 = vpop.f32.mrf.mxu0
      %v1038 = vadd.f32 %v583, %v1037
      %v1039 = vpop.f32.mrf.mxu0
      %1040 = vmatprep.mubr.bf16.mxu0 0
      %1041 = vmatmul.mubr.bf16.gmra.mxu0 %v852
      %v1042 = vpop.f32.mrf.mxu0
      %v1043 = vadd.f32 %v588, %v1042
      %v1044 = vpop.f32.mrf.mxu0
      %v1045 = vpop.f32.mrf.mxu0
      %v1046 = vadd.f32 %v593, %v1045
      %v1047 = vpop.f32.mrf.mxu0
      %1048 = vmatprep.mubr.bf16.mxu0 0
      %1049 = vmatmul.mubr.bf16.gmra.mxu0 %v855
      %v1050 = vpop.f32.mrf.mxu0
      %v1051 = vadd.f32 %v598, %v1050
      %v1052 = vpop.f32.mrf.mxu0
      %v1053 = vpop.f32.mrf.mxu0
      %v1054 = vadd.f32 %v603, %v1053
      %v1055 = vpop.f32.mrf.mxu0
      %1056 = vmatprep.mubr.bf16.mxu0 0
      %1057 = vmatmul.mubr.bf16.gmra.mxu0 %v858
      %v1058 = vpop.f32.mrf.mxu0
      %v1059 = vadd.f32 %v608, %v1058
      %v1060 = vpop.f32.mrf.mxu0
      %v1061 = vpop.f32.mrf.mxu0
      %v1062 = vadd.f32 %v613, %v1061
      %v1063 = vpop.f32.mrf.mxu0
      %1064 = vmatprep.mubr.bf16.mxu0 0
      %1065 = vmatmul.mubr.bf16.gmra.mxu0 %v861
      %v1066 = vpop.f32.mrf.mxu0
      %v1067 = vadd.f32 %v618, %v1066
      %v1068 = vpop.f32.mrf.mxu0
      %v1069 = vpop.f32.mrf.mxu0
      %v1070 = vadd.f32 %v623, %v1069
      %v1071 = vpop.f32.mrf.mxu0
      %1072 = vmatprep.mubr.bf16.mxu0 0
      %1073 = vmatmul.mubr.bf16.gmra.mxu0 %v864
      %v1074 = vpop.f32.mrf.mxu0
      %v1075 = vadd.f32 %v628, %v1074
      %v1076 = vpop.f32.mrf.mxu0
      %v1077 = vpop.f32.mrf.mxu0
      %v1078 = vadd.f32 %v633, %v1077
      %v1079 = vpop.f32.mrf.mxu0
      %1080 = vmatprep.mubr.bf16.mxu0 0
      %1081 = vmatmul.mubr.bf16.gmra.mxu0 %v867
      %v1082 = vpop.f32.mrf.mxu0
      %v1083 = vadd.f32 %v638, %v1082
      %v1084 = vpop.f32.mrf.mxu0
      %v1085 = vpop.f32.mrf.mxu0
      %v1086 = vadd.f32 %v643, %v1085
      %v1087 = vpop.f32.mrf.mxu0
      %1088 = vmatprep.mubr.bf16.mxu0 0
      %1089 = vmatmul.mubr.bf16.gmra.mxu0 %v870
      %v1090 = vpop.f32.mrf.mxu0
      %v1091 = vadd.f32 %v648, %v1090
      %v1092 = vpop.f32.mrf.mxu0
      %v1093 = vpop.f32.mrf.mxu0
      %v1094 = vadd.f32 %v653, %v1093
      %v1095 = vpop.f32.mrf.mxu0
      %1096 = vdwg.mxu0
      %v1097 = vmax.f32 %v907, 0.0
      %v1098 = vmax.f32 %v910, 0.0
      %v1099 = vmax.f32 %v915, 0.0
      %v1100 = vmax.f32 %v918, 0.0
      %v1101 = vmax.f32 %v923, 0.0
      %v1102 = vmax.f32 %v926, 0.0
      %v1103 = vmax.f32 %v931, 0.0
      %v1104 = vmax.f32 %v934, 0.0
      %v1105 = vmax.f32 %v939, 0.0
      %v1106 = vmax.f32 %v942, 0.0
      %v1107 = vmax.f32 %v947, 0.0
      %v1108 = vmax.f32 %v950, 0.0
      %v1109 = vmax.f32 %v955, 0.0
      %v1110 = vmax.f32 %v958, 0.0
      %v1111 = vmax.f32 %v963, 0.0
      %v1112 = vmax.f32 %v966, 0.0
      %v1113 = vmax.f32 %v971, 0.0
      %v1114 = vmax.f32 %v974, 0.0
      %v1115 = vmax.f32 %v979, 0.0
      %v1116 = vmax.f32 %v982, 0.0
      %v1117 = vmax.f32 %v987, 0.0
      %v1118 = vmax.f32 %v990, 0.0
      %v1119 = vmax.f32 %v995, 0.0
      %v1120 = vmax.f32 %v998, 0.0
      %v1121 = vmax.f32 %v1003, 0.0
      %v1122 = vmax.f32 %v1006, 0.0
      %v1123 = vmax.f32 %v1011, 0.0
      %v1124 = vmax.f32 %v1014, 0.0
      %v1125 = vmax.f32 %v1019, 0.0
      %v1126 = vmax.f32 %v1022, 0.0
      %v1127 = vmax.f32 %v1027, 0.0
      %v1128 = vmax.f32 %v1030, 0.0
      %v1129 = vmax.f32 %v1035, 0.0
      %v1130 = vmax.f32 %v1038, 0.0
      %v1131 = vmax.f32 %v1043, 0.0
      %v1132 = vmax.f32 %v1046, 0.0
      %v1133 = vmax.f32 %v1051, 0.0
      %v1134 = vmax.f32 %v1054, 0.0
      %v1135 = vmax.f32 %v1059, 0.0
      %v1136 = vmax.f32 %v1062, 0.0
      %v1137 = vmax.f32 %v1067, 0.0
      %v1138 = vmax.f32 %v1070, 0.0
      %v1139 = vmax.f32 %v1075, 0.0
      %v1140 = vmax.f32 %v1078, 0.0
      %v1141 = vmax.f32 %v1083, 0.0
      %v1142 = vmax.f32 %v1086, 0.0
      %v1143 = vmax.f32 %v1091, 0.0
      %v1144 = vmax.f32 %v1094, 0.0
      %v1145 = vpack.c.bf16 %v1098, %v1097
      %v1146 = vpack.c.bf16 %v1100, %v1099
      %v1147 = vpack.c.bf16 %v1102, %v1101
      %v1148 = vpack.c.bf16 %v1104, %v1103
      %v1149 = vpack.c.bf16 %v1106, %v1105
      %v1150 = vpack.c.bf16 %v1108, %v1107
      %v1151 = vpack.c.bf16 %v1110, %v1109
      %v1152 = vpack.c.bf16 %v1112, %v1111
      %v1153 = vpack.c.bf16 %v1114, %v1113
      %v1154 = vpack.c.bf16 %v1116, %v1115
      %v1155 = vpack.c.bf16 %v1118, %v1117
      %v1156 = vpack.c.bf16 %v1120, %v1119
      %v1157 = vpack.c.bf16 %v1122, %v1121
      %v1158 = vpack.c.bf16 %v1124, %v1123
      %v1159 = vpack.c.bf16 %v1126, %v1125
      %v1160 = vpack.c.bf16 %v1128, %v1127
      %v1161 = vpack.c.bf16 %v1130, %v1129
      %v1162 = vpack.c.bf16 %v1132, %v1131
      %v1163 = vpack.c.bf16 %v1134, %v1133
      %v1164 = vpack.c.bf16 %v1136, %v1135
      %v1165 = vpack.c.bf16 %v1138, %v1137
      %v1166 = vpack.c.bf16 %v1140, %v1139
      %v1167 = vpack.c.bf16 %v1142, %v1141
      %v1168 = vpack.c.bf16 %v1144, %v1143
      %v1169 = vld [vmem:[%s3] sm:$0xff]
      %v1170 = vld [vmem:[%s3 + $0x8] sm:$0xf]
      %v1171 = vld [vmem:[%s3 + $0xc] sm:$0xff]
      %v1172 = vld [vmem:[%s3 + $0x14] sm:$0xf]
      %v1173 = vld [vmem:[%s3 + $0x18] sm:$0xff]
      %v1174 = vld [vmem:[%s3 + $0x20] sm:$0xf]
      %v1175 = vld [vmem:[%s3 + $0x24] sm:$0xff]
      %v1176 = vld [vmem:[%s3 + $0x2c] sm:$0xf]
      %v1177 = vld [vmem:[%s3 + $0x30] sm:$0xff]
      %v1178 = vld [vmem:[%s3 + $0x38] sm:$0xf]
      %v1179 = vld [vmem:[%s3 + $0x3c] sm:$0xff]
      %v1180 = vld [vmem:[%s3 + $0x44] sm:$0xf]
      %v1181 = vld [vmem:[%s3 + $0x48] sm:$0xff]
      %v1182 = vld [vmem:[%s3 + $0x50] sm:$0xf]
      %v1183 = vld [vmem:[%s3 + $0x54] sm:$0xff]
      %v1184 = vld [vmem:[%s3 + $0x5c] sm:$0xf]
      %v1185 = vld [vmem:[%s3 + $0x60] sm:$0xff]
      %v1186 = vld [vmem:[%s3 + $0x68] sm:$0xf]
      %v1187 = vld [vmem:[%s3 + $0x6c] sm:$0xff]
      %v1188 = vld [vmem:[%s3 + $0x74] sm:$0xf]
      %v1189 = vld [vmem:[%s3 + $0x78] sm:$0xff]
      %v1190 = vld [vmem:[%s3 + $0x80] sm:$0xf]
      %v1191 = vld [vmem:[%s3 + $0x84] sm:$0xff]
      %v1192 = vld [vmem:[%s3 + $0x8c] sm:$0xf]
      %v1193 = vld [vmem:[%s3 + $0x90] sm:$0xff]
      %v1194 = vld [vmem:[%s3 + $0x98] sm:$0xf]
      %v1195 = vld [vmem:[%s3 + $0x9c] sm:$0xff]
      %v1196 = vld [vmem:[%s3 + $0xa4] sm:$0xf]
      %v1197 = vld [vmem:[%s3 + $0xa8] sm:$0xff]
      %v1198 = vld [vmem:[%s3 + $0xb0] sm:$0xf]
      %v1199 = vld [vmem:[%s3 + $0xb4] sm:$0xff]
      %v1200 = vld [vmem:[%s3 + $0xbc] sm:$0xf]
      %v1201 = vld [vmem:[%s3 + $0xc0] sm:$0xff]
      %v1202 = vld [vmem:[%s3 + $0xc8] sm:$0xf]
      %v1203 = vld [vmem:[%s3 + $0xcc] sm:$0xff]
      %v1204 = vld [vmem:[%s3 + $0xd4] sm:$0xf]
      %v1205 = vld [vmem:[%s3 + $0xd8] sm:$0xff]
      %v1206 = vld [vmem:[%s3 + $0xe0] sm:$0xf]
      %v1207 = vld [vmem:[%s3 + $0xe4] sm:$0xff]
      %v1208 = vld [vmem:[%s3 + $0xec] sm:$0xf]
      %v1209 = vld [vmem:[%s3 + $0xf0] sm:$0xff]
      %v1210 = vld [vmem:[%s3 + $0xf8] sm:$0xf]
      %v1211 = vld [vmem:[%s3 + $0xfc] sm:$0xff]
      %v1212 = vld [vmem:[%s3 + $0x104] sm:$0xf]
      %v1213 = vld [vmem:[%s3 + $0x108] sm:$0xff]
      %v1214 = vld [vmem:[%s3 + $0x110] sm:$0xf]
      %v1215 = vld [vmem:[%s3 + $0x114] sm:$0xff]
      %v1216 = vld [vmem:[%s3 + $0x11c] sm:$0xf]
      %v1217 = vld [vmem:[%s3 + $0x120] sm:$0xff]
      %v1218 = vld [vmem:[%s3 + $0x128] sm:$0xf]
      %v1219 = vld [vmem:[%s3 + $0x12c] sm:$0xff]
      %v1220 = vld [vmem:[%s3 + $0x134] sm:$0xf]
      %v1221 = vld [vmem:[%s3 + $0x138] sm:$0xff]
      %v1222 = vld [vmem:[%s3 + $0x140] sm:$0xf]
      %v1223 = vld [vmem:[%s3 + $0x144] sm:$0xff]
      %v1224 = vld [vmem:[%s3 + $0x14c] sm:$0xf]
      %v1225 = vld [vmem:[%s3 + $0x150] sm:$0xff]
      %v1226 = vld [vmem:[%s3 + $0x158] sm:$0xf]
      %v1227 = vld [vmem:[%s3 + $0x15c] sm:$0xff]
      %v1228 = vld [vmem:[%s3 + $0x164] sm:$0xf]
      %v1229 = vld [vmem:[%s3 + $0x168] sm:$0xff]
      %v1230 = vld [vmem:[%s3 + $0x170] sm:$0xf]
      %v1231 = vld [vmem:[%s3 + $0x174] sm:$0xff]
      %v1232 = vld [vmem:[%s3 + $0x17c] sm:$0xf]
      %v1233 = vld [vmem:[%s3 + $0x180] sm:$0xff]
      %v1234 = vld [vmem:[%s3 + $0x188] sm:$0xf]
      %v1235 = vld [vmem:[%s3 + $0x18c] sm:$0xff]
      %v1236 = vld [vmem:[%s3 + $0x194] sm:$0xf]
      %v1237 = vld [vmem:[%s3 + $0x198] sm:$0xff]
      %v1238 = vld [vmem:[%s3 + $0x1a0] sm:$0xf]
      %v1239 = vld [vmem:[%s3 + $0x1a4] sm:$0xff]
      %v1240 = vld [vmem:[%s3 + $0x1ac] sm:$0xf]
      %v1241 = vld [vmem:[%s3 + $0x1b0] sm:$0xff]
      %v1242 = vld [vmem:[%s3 + $0x1b8] sm:$0xf]
      %v1243 = vld [vmem:[%s3 + $0x1bc] sm:$0xff]
      %v1244 = vld [vmem:[%s3 + $0x1c4] sm:$0xf]
      %v1245 = vld [vmem:[%s3 + $0x1c8] sm:$0xff]
      %v1246 = vld [vmem:[%s3 + $0x1d0] sm:$0xf]
      %v1247 = vld [vmem:[%s3 + $0x1d4] sm:$0xff]
      %v1248 = vld [vmem:[%s3 + $0x1dc] sm:$0xf]
      %v1249 = vld [vmem:[%s3 + $0x1e0] sm:$0xff]
      %v1250 = vld [vmem:[%s3 + $0x1e8] sm:$0xf]
      %v1251 = vld [vmem:[%s3 + $0x1ec] sm:$0xff]
      %v1252 = vld [vmem:[%s3 + $0x1f4] sm:$0xf]
      %v1253 = vld [vmem:[%s3 + $0x1f8] sm:$0xff]
      %v1254 = vld [vmem:[%s3 + $0x200] sm:$0xf]
      %v1255 = vld [vmem:[%s3 + $0x204] sm:$0xff]
      %v1256 = vld [vmem:[%s3 + $0x20c] sm:$0xf]
      %v1257 = vld [vmem:[%s3 + $0x210] sm:$0xff]
      %v1258 = vld [vmem:[%s3 + $0x218] sm:$0xf]
      %v1259 = vld [vmem:[%s3 + $0x21c] sm:$0xff]
      %v1260 = vld [vmem:[%s3 + $0x224] sm:$0xf]
      %v1261 = vld [vmem:[%s3 + $0x228] sm:$0xff]
      %v1262 = vld [vmem:[%s3 + $0x230] sm:$0xf]
      %v1263 = vld [vmem:[%s3 + $0x234] sm:$0xff]
      %v1264 = vld [vmem:[%s3 + $0x23c] sm:$0xf]
      %v1265 = vld [vmem:[%s4] sm:$0xff]
      %v1266 = vld [vmem:[%s4 + $0x8] sm:$0xff]
      %v1267 = vld [vmem:[%s4 + $0x10] sm:$0xff]
      %v1268 = vld [vmem:[%s4 + $0x18] sm:$0xff]
      %v1269 = vld [vmem:[%s4 + $0x20] sm:$0xff]
      %v1270 = vld [vmem:[%s4 + $0x28] sm:$0xff]
      %v1271 = vld [vmem:[%s4 + $0x30] sm:$0xff]
      %v1272 = vld [vmem:[%s4 + $0x38] sm:$0xff]
      %v1273 = vld [vmem:[%s4 + $0x40] sm:$0xff]
      %v1274 = vld [vmem:[%s4 + $0x48] sm:$0xff]
      %v1275 = vld [vmem:[%s4 + $0x50] sm:$0xff]
      %v1276 = vld [vmem:[%s4 + $0x58] sm:$0xff]
      %v1277 = vld [vmem:[%s4 + $0x60] sm:$0xff]
      %v1278 = vld [vmem:[%s4 + $0x68] sm:$0xff]
      %v1279 = vld [vmem:[%s4 + $0x70] sm:$0xff]
      %v1280 = vld [vmem:[%s4 + $0x78] sm:$0xff]
      %v1281 = vld [vmem:[%s4 + $0x80] sm:$0xff]
      %v1282 = vld [vmem:[%s4 + $0x88] sm:$0xff]
      %v1283 = vld [vmem:[%s4 + $0x90] sm:$0xff]
      %v1284 = vld [vmem:[%s4 + $0x98] sm:$0xff]
      %v1285 = vld [vmem:[%s4 + $0xa0] sm:$0xff]
      %v1286 = vld [vmem:[%s4 + $0xa8] sm:$0xff]
      %v1287 = vld [vmem:[%s4 + $0xb0] sm:$0xff]
      %v1288 = vld [vmem:[%s4 + $0xb8] sm:$0xff]
      %v1289 = vld [vmem:[%s4 + $0xc0] sm:$0xff]
      %v1290 = vld [vmem:[%s4 + $0xc8] sm:$0xff]
      %v1291 = vld [vmem:[%s4 + $0xd0] sm:$0xff]
      %v1292 = vld [vmem:[%s4 + $0xd8] sm:$0xff]
      %v1293 = vld [vmem:[%s4 + $0xe0] sm:$0xff]
      %v1294 = vld [vmem:[%s4 + $0xe8] sm:$0xff]
      %v1295 = vld [vmem:[%s4 + $0xf0] sm:$0xff]
      %v1296 = vld [vmem:[%s4 + $0xf8] sm:$0xff]
      %v1297 = vld [vmem:[%s4 + $0x100] sm:$0xff]
      %v1298 = vld [vmem:[%s4 + $0x108] sm:$0xff]
      %v1299 = vld [vmem:[%s4 + $0x110] sm:$0xff]
      %v1300 = vld [vmem:[%s4 + $0x118] sm:$0xff]
      %v1301 = vld [vmem:[%s4 + $0x120] sm:$0xff]
      %v1302 = vld [vmem:[%s4 + $0x128] sm:$0xff]
      %v1303 = vld [vmem:[%s4 + $0x130] sm:$0xff]
      %v1304 = vld [vmem:[%s4 + $0x138] sm:$0xff]
      %v1305 = vld [vmem:[%s4 + $0x140] sm:$0xff]
      %v1306 = vld [vmem:[%s4 + $0x148] sm:$0xff]
      %v1307 = vld [vmem:[%s4 + $0x150] sm:$0xff]
      %v1308 = vld [vmem:[%s4 + $0x158] sm:$0xff]
      %v1309 = vld [vmem:[%s4 + $0x160] sm:$0xff]
      %v1310 = vld [vmem:[%s4 + $0x168] sm:$0xff]
      %v1311 = vld [vmem:[%s4 + $0x170] sm:$0xff]
      %v1312 = vld [vmem:[%s4 + $0x178] sm:$0xff]
      %1314 = vset.pattern.permute.xlu0 0
      %1315 = vperm.xlu0 %1314, %v1265
      %v1316 = vpop.permute.xlu0 %1315
      %1319 = vset.pattern.permute.xlu0 0
      %1320 = vperm.xlu0 %1319, %v1266
      %v1321 = vpop.permute.xlu0 %1320
      %1324 = vset.pattern.permute.xlu0 0
      %1325 = vperm.xlu0 %1324, %v1267
      %v1326 = vpop.permute.xlu0 %1325
      %1329 = vset.pattern.permute.xlu0 0
      %1330 = vperm.xlu0 %1329, %v1268
      %v1331 = vpop.permute.xlu0 %1330
      %1334 = vset.pattern.permute.xlu0 0
      %1335 = vperm.xlu0 %1334, %v1269
      %v1336 = vpop.permute.xlu0 %1335
      %1339 = vset.pattern.permute.xlu0 0
      %1340 = vperm.xlu0 %1339, %v1270
      %v1341 = vpop.permute.xlu0 %1340
      %1344 = vset.pattern.permute.xlu0 0
      %1345 = vperm.xlu0 %1344, %v1271
      %v1346 = vpop.permute.xlu0 %1345
      %1349 = vset.pattern.permute.xlu0 0
      %1350 = vperm.xlu0 %1349, %v1272
      %v1351 = vpop.permute.xlu0 %1350
      %1354 = vset.pattern.permute.xlu0 0
      %1355 = vperm.xlu0 %1354, %v1273
      %v1356 = vpop.permute.xlu0 %1355
      %1359 = vset.pattern.permute.xlu0 0
      %1360 = vperm.xlu0 %1359, %v1274
      %v1361 = vpop.permute.xlu0 %1360
      %1364 = vset.pattern.permute.xlu0 0
      %1365 = vperm.xlu0 %1364, %v1275
      %v1366 = vpop.permute.xlu0 %1365
      %1369 = vset.pattern.permute.xlu0 0
      %1370 = vperm.xlu0 %1369, %v1276
      %v1371 = vpop.permute.xlu0 %1370
      %1374 = vset.pattern.permute.xlu0 0
      %1375 = vperm.xlu0 %1374, %v1277
      %v1376 = vpop.permute.xlu0 %1375
      %1379 = vset.pattern.permute.xlu0 0
      %1380 = vperm.xlu0 %1379, %v1278
      %v1381 = vpop.permute.xlu0 %1380
      %1384 = vset.pattern.permute.xlu0 0
      %1385 = vperm.xlu0 %1384, %v1279
      %v1386 = vpop.permute.xlu0 %1385
      %1389 = vset.pattern.permute.xlu0 0
      %1390 = vperm.xlu0 %1389, %v1280
      %v1391 = vpop.permute.xlu0 %1390
      %1394 = vset.pattern.permute.xlu0 0
      %1395 = vperm.xlu0 %1394, %v1281
      %v1396 = vpop.permute.xlu0 %1395
      %1399 = vset.pattern.permute.xlu0 0
      %1400 = vperm.xlu0 %1399, %v1282
      %v1401 = vpop.permute.xlu0 %1400
      %1404 = vset.pattern.permute.xlu0 0
      %1405 = vperm.xlu0 %1404, %v1283
      %v1406 = vpop.permute.xlu0 %1405
      %1409 = vset.pattern.permute.xlu0 0
      %1410 = vperm.xlu0 %1409, %v1284
      %v1411 = vpop.permute.xlu0 %1410
      %1414 = vset.pattern.permute.xlu0 0
      %1415 = vperm.xlu0 %1414, %v1285
      %v1416 = vpop.permute.xlu0 %1415
      %1419 = vset.pattern.permute.xlu0 0
      %1420 = vperm.xlu0 %1419, %v1286
      %v1421 = vpop.permute.xlu0 %1420
      %1424 = vset.pattern.permute.xlu0 0
      %1425 = vperm.xlu0 %1424, %v1287
      %v1426 = vpop.permute.xlu0 %1425
      %1429 = vset.pattern.permute.xlu0 0
      %1430 = vperm.xlu0 %1429, %v1288
      %v1431 = vpop.permute.xlu0 %1430
      %1434 = vset.pattern.permute.xlu0 0
      %1435 = vperm.xlu0 %1434, %v1289
      %v1436 = vpop.permute.xlu0 %1435
      %1439 = vset.pattern.permute.xlu0 0
      %1440 = vperm.xlu0 %1439, %v1290
      %v1441 = vpop.permute.xlu0 %1440
      %1444 = vset.pattern.permute.xlu0 0
      %1445 = vperm.xlu0 %1444, %v1291
      %v1446 = vpop.permute.xlu0 %1445
      %1449 = vset.pattern.permute.xlu0 0
      %1450 = vperm.xlu0 %1449, %v1292
      %v1451 = vpop.permute.xlu0 %1450
      %1454 = vset.pattern.permute.xlu0 0
      %1455 = vperm.xlu0 %1454, %v1293
      %v1456 = vpop.permute.xlu0 %1455
      %1459 = vset.pattern.permute.xlu0 0
      %1460 = vperm.xlu0 %1459, %v1294
      %v1461 = vpop.permute.xlu0 %1460
      %1464 = vset.pattern.permute.xlu0 0
      %1465 = vperm.xlu0 %1464, %v1295
      %v1466 = vpop.permute.xlu0 %1465
      %1469 = vset.pattern.permute.xlu0 0
      %1470 = vperm.xlu0 %1469, %v1296
      %v1471 = vpop.permute.xlu0 %1470
      %1474 = vset.pattern.permute.xlu0 0
      %1475 = vperm.xlu0 %1474, %v1297
      %v1476 = vpop.permute.xlu0 %1475
      %1479 = vset.pattern.permute.xlu0 0
      %1480 = vperm.xlu0 %1479, %v1298
      %v1481 = vpop.permute.xlu0 %1480
      %1484 = vset.pattern.permute.xlu0 0
      %1485 = vperm.xlu0 %1484, %v1299
      %v1486 = vpop.permute.xlu0 %1485
      %1489 = vset.pattern.permute.xlu0 0
      %1490 = vperm.xlu0 %1489, %v1300
      %v1491 = vpop.permute.xlu0 %1490
      %1494 = vset.pattern.permute.xlu0 0
      %1495 = vperm.xlu0 %1494, %v1301
      %v1496 = vpop.permute.xlu0 %1495
      %1499 = vset.pattern.permute.xlu0 0
      %1500 = vperm.xlu0 %1499, %v1302
      %v1501 = vpop.permute.xlu0 %1500
      %1504 = vset.pattern.permute.xlu0 0
      %1505 = vperm.xlu0 %1504, %v1303
      %v1506 = vpop.permute.xlu0 %1505
      %1509 = vset.pattern.permute.xlu0 0
      %1510 = vperm.xlu0 %1509, %v1304
      %v1511 = vpop.permute.xlu0 %1510
      %1514 = vset.pattern.permute.xlu0 0
      %1515 = vperm.xlu0 %1514, %v1305
      %v1516 = vpop.permute.xlu0 %1515
      %1519 = vset.pattern.permute.xlu0 0
      %1520 = vperm.xlu0 %1519, %v1306
      %v1521 = vpop.permute.xlu0 %1520
      %1524 = vset.pattern.permute.xlu0 0
      %1525 = vperm.xlu0 %1524, %v1307
      %v1526 = vpop.permute.xlu0 %1525
      %1529 = vset.pattern.permute.xlu0 0
      %1530 = vperm.xlu0 %1529, %v1308
      %v1531 = vpop.permute.xlu0 %1530
      %1534 = vset.pattern.permute.xlu0 0
      %1535 = vperm.xlu0 %1534, %v1309
      %v1536 = vpop.permute.xlu0 %1535
      %1539 = vset.pattern.permute.xlu0 0
      %1540 = vperm.xlu0 %1539, %v1310
      %v1541 = vpop.permute.xlu0 %1540
      %1544 = vset.pattern.permute.xlu0 0
      %1545 = vperm.xlu0 %1544, %v1311
      %v1546 = vpop.permute.xlu0 %1545
      %1549 = vset.pattern.permute.xlu0 0
      %1550 = vperm.xlu0 %1549, %v1312
      %v1551 = vpop.permute.xlu0 %1550
      %v1649 = vunpack.c.l.b16 %v1169
      %v1650 = vunpack.c.h.b16 %v1169
      %v1651 = vunpack.c.l.b16 %v1170
      %v1652 = vunpack.c.l.b16 %v1171
      %v1653 = vunpack.c.h.b16 %v1171
      %v1654 = vunpack.c.l.b16 %v1172
      %v1655 = vunpack.c.l.b16 %v1173
      %v1656 = vunpack.c.h.b16 %v1173
      %v1657 = vunpack.c.l.b16 %v1174
      %v1658 = vunpack.c.l.b16 %v1175
      %v1659 = vunpack.c.h.b16 %v1175
      %v1660 = vunpack.c.l.b16 %v1176
      %v1661 = vunpack.c.l.b16 %v1177
      %v1662 = vunpack.c.h.b16 %v1177
      %v1663 = vunpack.c.l.b16 %v1178
      %v1664 = vunpack.c.l.b16 %v1179
      %v1665 = vunpack.c.h.b16 %v1179
      %v1666 = vunpack.c.l.b16 %v1180
      %v1667 = vunpack.c.l.b16 %v1181
      %v1668 = vunpack.c.h.b16 %v1181
      %v1669 = vunpack.c.l.b16 %v1182
      %v1670 = vunpack.c.l.b16 %v1183
      %v1671 = vunpack.c.h.b16 %v1183
      %v1672 = vunpack.c.l.b16 %v1184
      %v1673 = vunpack.c.l.b16 %v1185
      %v1674 = vunpack.c.h.b16 %v1185
      %v1675 = vunpack.c.l.b16 %v1186
      %v1676 = vunpack.c.l.b16 %v1187
      %v1677 = vunpack.c.h.b16 %v1187
      %v1678 = vunpack.c.l.b16 %v1188
      %v1679 = vunpack.c.l.b16 %v1189
      %v1680 = vunpack.c.h.b16 %v1189
      %v1681 = vunpack.c.l.b16 %v1190
      %v1682 = vunpack.c.l.b16 %v1191
      %v1683 = vunpack.c.h.b16 %v1191
      %v1684 = vunpack.c.l.b16 %v1192
      %v1685 = vunpack.c.l.b16 %v1193
      %v1686 = vunpack.c.h.b16 %v1193
      %v1687 = vunpack.c.l.b16 %v1194
      %v1688 = vunpack.c.l.b16 %v1195
      %v1689 = vunpack.c.h.b16 %v1195
      %v1690 = vunpack.c.l.b16 %v1196
      %v1691 = vunpack.c.l.b16 %v1197
      %v1692 = vunpack.c.h.b16 %v1197
      %v1693 = vunpack.c.l.b16 %v1198
      %v1694 = vunpack.c.l.b16 %v1199
      %v1695 = vunpack.c.h.b16 %v1199
      %v1696 = vunpack.c.l.b16 %v1200
      %v1697 = vunpack.c.l.b16 %v1201
      %v1698 = vunpack.c.h.b16 %v1201
      %v1699 = vunpack.c.l.b16 %v1202
      %v1700 = vunpack.c.l.b16 %v1203
      %v1701 = vunpack.c.h.b16 %v1203
      %v1702 = vunpack.c.l.b16 %v1204
      %v1703 = vunpack.c.l.b16 %v1205
      %v1704 = vunpack.c.h.b16 %v1205
      %v1705 = vunpack.c.l.b16 %v1206
      %v1706 = vunpack.c.l.b16 %v1207
      %v1707 = vunpack.c.h.b16 %v1207
      %v1708 = vunpack.c.l.b16 %v1208
      %v1709 = vunpack.c.l.b16 %v1209
      %v1710 = vunpack.c.h.b16 %v1209
      %v1711 = vunpack.c.l.b16 %v1210
      %v1712 = vunpack.c.l.b16 %v1211
      %v1713 = vunpack.c.h.b16 %v1211
      %v1714 = vunpack.c.l.b16 %v1212
      %v1715 = vunpack.c.l.b16 %v1213
      %v1716 = vunpack.c.h.b16 %v1213
      %v1717 = vunpack.c.l.b16 %v1214
      %v1718 = vunpack.c.l.b16 %v1215
      %v1719 = vunpack.c.h.b16 %v1215
      %v1720 = vunpack.c.l.b16 %v1216
      %v1721 = vunpack.c.l.b16 %v1217
      %v1722 = vunpack.c.h.b16 %v1217
      %v1723 = vunpack.c.l.b16 %v1218
      %v1724 = vunpack.c.l.b16 %v1219
      %v1725 = vunpack.c.h.b16 %v1219
      %v1726 = vunpack.c.l.b16 %v1220
      %v1727 = vunpack.c.l.b16 %v1221
      %v1728 = vunpack.c.h.b16 %v1221
      %v1729 = vunpack.c.l.b16 %v1222
      %v1730 = vunpack.c.l.b16 %v1223
      %v1731 = vunpack.c.h.b16 %v1223
      %v1732 = vunpack.c.l.b16 %v1224
      %v1733 = vunpack.c.l.b16 %v1225
      %v1734 = vunpack.c.h.b16 %v1225
      %v1735 = vunpack.c.l.b16 %v1226
      %v1736 = vunpack.c.l.b16 %v1227
      %v1737 = vunpack.c.h.b16 %v1227
      %v1738 = vunpack.c.l.b16 %v1228
      %v1739 = vunpack.c.l.b16 %v1229
      %v1740 = vunpack.c.h.b16 %v1229
      %v1741 = vunpack.c.l.b16 %v1230
      %v1742 = vunpack.c.l.b16 %v1231
      %v1743 = vunpack.c.h.b16 %v1231
      %v1744 = vunpack.c.l.b16 %v1232
      %v1745 = vunpack.c.l.b16 %v1233
      %v1746 = vunpack.c.h.b16 %v1233
      %v1747 = vunpack.c.l.b16 %v1234
      %v1748 = vunpack.c.l.b16 %v1235
      %v1749 = vunpack.c.h.b16 %v1235
      %v1750 = vunpack.c.l.b16 %v1236
      %v1751 = vunpack.c.l.b16 %v1237
      %v1752 = vunpack.c.h.b16 %v1237
      %v1753 = vunpack.c.l.b16 %v1238
      %v1754 = vunpack.c.l.b16 %v1239
      %v1755 = vunpack.c.h.b16 %v1239
      %v1756 = vunpack.c.l.b16 %v1240
      %v1757 = vunpack.c.l.b16 %v1241
      %v1758 = vunpack.c.h.b16 %v1241
      %v1759 = vunpack.c.l.b16 %v1242
      %v1760 = vunpack.c.l.b16 %v1243
      %v1761 = vunpack.c.h.b16 %v1243
      %v1762 = vunpack.c.l.b16 %v1244
      %v1763 = vunpack.c.l.b16 %v1245
      %v1764 = vunpack.c.h.b16 %v1245
      %v1765 = vunpack.c.l.b16 %v1246
      %v1766 = vunpack.c.l.b16 %v1247
      %v1767 = vunpack.c.h.b16 %v1247
      %v1768 = vunpack.c.l.b16 %v1248
      %v1769 = vunpack.c.l.b16 %v1249
      %v1770 = vunpack.c.h.b16 %v1249
      %v1771 = vunpack.c.l.b16 %v1250
      %v1772 = vunpack.c.l.b16 %v1251
      %v1773 = vunpack.c.h.b16 %v1251
      %v1774 = vunpack.c.l.b16 %v1252
      %v1775 = vunpack.c.l.b16 %v1253
      %v1776 = vunpack.c.h.b16 %v1253
      %v1777 = vunpack.c.l.b16 %v1254
      %v1778 = vunpack.c.l.b16 %v1255
      %v1779 = vunpack.c.h.b16 %v1255
      %v1780 = vunpack.c.l.b16 %v1256
      %v1781 = vunpack.c.l.b16 %v1257
      %v1782 = vunpack.c.h.b16 %v1257
      %v1783 = vunpack.c.l.b16 %v1258
      %v1784 = vunpack.c.l.b16 %v1259
      %v1785 = vunpack.c.h.b16 %v1259
      %v1786 = vunpack.c.l.b16 %v1260
      %v1787 = vunpack.c.l.b16 %v1261
      %v1788 = vunpack.c.h.b16 %v1261
      %v1789 = vunpack.c.l.b16 %v1262
      %v1790 = vunpack.c.l.b16 %v1263
      %v1791 = vunpack.c.h.b16 %v1263
      %v1792 = vunpack.c.l.b16 %v1264
      %v1793 = vpack.c.b16 %v1652, %v1649
      %v1794 = vpack.c.b16 %v1653, %v1650
      %v1795 = vpack.c.b16 %v1654, %v1651
      %v1796 = vpack.c.b16 %v1658, %v1655
      %v1797 = vpack.c.b16 %v1659, %v1656
      %v1798 = vpack.c.b16 %v1660, %v1657
      %v1799 = vpack.c.b16 %v1664, %v1661
      %v1800 = vpack.c.b16 %v1665, %v1662
      %v1801 = vpack.c.b16 %v1666, %v1663
      %v1802 = vpack.c.b16 %v1670, %v1667
      %v1803 = vpack.c.b16 %v1671, %v1668
      %v1804 = vpack.c.b16 %v1672, %v1669
      %v1805 = vpack.c.b16 %v1676, %v1673
      %v1806 = vpack.c.b16 %v1677, %v1674
      %v1807 = vpack.c.b16 %v1678, %v1675
      %v1808 = vpack.c.b16 %v1682, %v1679
      %v1809 = vpack.c.b16 %v1683, %v1680
      %v1810 = vpack.c.b16 %v1684, %v1681
      %v1811 = vpack.c.b16 %v1688, %v1685
      %v1812 = vpack.c.b16 %v1689, %v1686
      %v1813 = vpack.c.b16 %v1690, %v1687
      %v1814 = vpack.c.b16 %v1694, %v1691
      %v1815 = vpack.c.b16 %v1695, %v1692
      %v1816 = vpack.c.b16 %v1696, %v1693
      %v1817 = vpack.c.b16 %v1700, %v1697
      %v1818 = vpack.c.b16 %v1701, %v1698
      %v1819 = vpack.c.b16 %v1702, %v1699
      %v1820 = vpack.c.b16 %v1706, %v1703
      %v1821 = vpack.c.b16 %v1707, %v1704
      %v1822 = vpack.c.b16 %v1708, %v1705
      %v1823 = vpack.c.b16 %v1712, %v1709
      %v1824 = vpack.c.b16 %v1713, %v1710
      %v1825 = vpack.c.b16 %v1714, %v1711
      %v1826 = vpack.c.b16 %v1718, %v1715
      %v1827 = vpack.c.b16 %v1719, %v1716
      %v1828 = vpack.c.b16 %v1720, %v1717
      %v1829 = vpack.c.b16 %v1724, %v1721
      %v1830 = vpack.c.b16 %v1725, %v1722
      %v1831 = vpack.c.b16 %v1726, %v1723
      %v1832 = vpack.c.b16 %v1730, %v1727
      %v1833 = vpack.c.b16 %v1731, %v1728
      %v1834 = vpack.c.b16 %v1732, %v1729
      %v1835 = vpack.c.b16 %v1736, %v1733
      %v1836 = vpack.c.b16 %v1737, %v1734
      %v1837 = vpack.c.b16 %v1738, %v1735
      %v1838 = vpack.c.b16 %v1742, %v1739
      %v1839 = vpack.c.b16 %v1743, %v1740
      %v1840 = vpack.c.b16 %v1744, %v1741
      %v1841 = vpack.c.b16 %v1748, %v1745
      %v1842 = vpack.c.b16 %v1749, %v1746
      %v1843 = vpack.c.b16 %v1750, %v1747
      %v1844 = vpack.c.b16 %v1754, %v1751
      %v1845 = vpack.c.b16 %v1755, %v1752
      %v1846 = vpack.c.b16 %v1756, %v1753
      %v1847 = vpack.c.b16 %v1760, %v1757
      %v1848 = vpack.c.b16 %v1761, %v1758
      %v1849 = vpack.c.b16 %v1762, %v1759
      %v1850 = vpack.c.b16 %v1766, %v1763
      %v1851 = vpack.c.b16 %v1767, %v1764
      %v1852 = vpack.c.b16 %v1768, %v1765
      %v1853 = vpack.c.b16 %v1772, %v1769
      %v1854 = vpack.c.b16 %v1773, %v1770
      %v1855 = vpack.c.b16 %v1774, %v1771
      %v1856 = vpack.c.b16 %v1778, %v1775
      %v1857 = vpack.c.b16 %v1779, %v1776
      %v1858 = vpack.c.b16 %v1780, %v1777
      %v1859 = vpack.c.b16 %v1784, %v1781
      %v1860 = vpack.c.b16 %v1785, %v1782
      %v1861 = vpack.c.b16 %v1786, %v1783
      %v1862 = vpack.c.b16 %v1790, %v1787
      %v1863 = vpack.c.b16 %v1791, %v1788
      %v1864 = vpack.c.b16 %v1792, %v1789
      %1937 = vmatprep.subr.bf16.mxu0 0
      %1938 = vmatpush1.bf16.msra.mxu0 %v1152
      %1939 = vmatprep.subr.bf16.mxu0 0
      %1940 = vmatpush1.bf16.msra.mxu0 %v1151
      %1941 = vmatprep.subr.bf16.mxu0 0
      %1942 = vmatpush1.bf16.msra.mxu0 %v1150
      %1943 = vmatprep.subr.bf16.mxu0 0
      %1944 = vmatpush1.bf16.msra.mxu0 %v1149
      %1945 = vmatprep.subr.bf16.mxu0 0
      %1946 = vmatpush1.bf16.msra.mxu0 %v1148
      %1947 = vmatprep.subr.bf16.mxu0 0
      %1948 = vmatpush1.bf16.msra.mxu0 %v1147
      %1949 = vmatprep.subr.bf16.mxu0 0
      %1950 = vmatpush1.bf16.msra.mxu0 %v1146
      %1951 = vmatprep.subr.bf16.mxu0 0
      %1952 = vmatpush1.bf16.msra.mxu0 %v1145
      %1953 = vmatprep.subr.bf16.mxu0 0
      %1954 = vmatpush2.bf16.msra.mxu0 %v1160
      %1955 = vmatprep.subr.bf16.mxu0 0
      %1956 = vmatpush2.bf16.msra.mxu0 %v1159
      %1957 = vmatprep.subr.bf16.mxu0 0
      %1958 = vmatpush2.bf16.msra.mxu0 %v1158
      %1959 = vmatprep.subr.bf16.mxu0 0
      %1960 = vmatpush2.bf16.msra.mxu0 %v1157
      %1961 = vmatprep.subr.bf16.mxu0 0
      %1962 = vmatpush2.bf16.msra.mxu0 %v1156
      %1963 = vmatprep.subr.bf16.mxu0 0
      %1964 = vmatpush2.bf16.msra.mxu0 %v1155
      %1965 = vmatprep.subr.bf16.mxu0 0
      %1966 = vmatpush2.bf16.msra.mxu0 %v1154
      %1967 = vmatprep.subr.bf16.mxu0 0
      %1968 = vmatpush2.bf16.msra.mxu0 %v1153
      %1969 = vmatprep.mubr.bf16.mxu0 %v1794
      %1970 = vmatmul.mubr.bf16.gmra.mxu0 %v1793
      %v1971 = vpop.f32.mrf.mxu0
      %v1972 = vadd.f32 %v1316, %v1971
      %v1973 = vpop.f32.mrf.mxu0
      %v1974 = vpop.f32.mrf.mxu0
      %v1975 = vadd.f32 %v1321, %v1974
      %v1976 = vpop.f32.mrf.mxu0
      %1977 = vmatprep.mubr.bf16.mxu0 %v1797
      %1978 = vmatmul.mubr.bf16.gmra.mxu0 %v1796
      %v1979 = vpop.f32.mrf.mxu0
      %v1980 = vadd.f32 %v1326, %v1979
      %v1981 = vpop.f32.mrf.mxu0
      %v1982 = vpop.f32.mrf.mxu0
      %v1983 = vadd.f32 %v1331, %v1982
      %v1984 = vpop.f32.mrf.mxu0
      %1985 = vmatprep.mubr.bf16.mxu0 %v1800
      %1986 = vmatmul.mubr.bf16.gmra.mxu0 %v1799
      %v1987 = vpop.f32.mrf.mxu0
      %v1988 = vadd.f32 %v1336, %v1987
      %v1989 = vpop.f32.mrf.mxu0
      %v1990 = vpop.f32.mrf.mxu0
      %v1991 = vadd.f32 %v1341, %v1990
      %v1992 = vpop.f32.mrf.mxu0
      %1993 = vmatprep.mubr.bf16.mxu0 %v1803
      %1994 = vmatmul.mubr.bf16.gmra.mxu0 %v1802
      %v1995 = vpop.f32.mrf.mxu0
      %v1996 = vadd.f32 %v1346, %v1995
      %v1997 = vpop.f32.mrf.mxu0
      %v1998 = vpop.f32.mrf.mxu0
      %v1999 = vadd.f32 %v1351, %v1998
      %v2000 = vpop.f32.mrf.mxu0
      %2001 = vmatprep.mubr.bf16.mxu0 %v1806
      %2002 = vmatmul.mubr.bf16.gmra.mxu0 %v1805
      %v2003 = vpop.f32.mrf.mxu0
      %v2004 = vadd.f32 %v1356, %v2003
      %v2005 = vpop.f32.mrf.mxu0
      %v2006 = vpop.f32.mrf.mxu0
      %v2007 = vadd.f32 %v1361, %v2006
      %v2008 = vpop.f32.mrf.mxu0
      %2009 = vmatprep.mubr.bf16.mxu0 %v1809
      %2010 = vmatmul.mubr.bf16.gmra.mxu0 %v1808
      %v2011 = vpop.f32.mrf.mxu0
      %v2012 = vadd.f32 %v1366, %v2011
      %v2013 = vpop.f32.mrf.mxu0
      %v2014 = vpop.f32.mrf.mxu0
      %v2015 = vadd.f32 %v1371, %v2014
      %v2016 = vpop.f32.mrf.mxu0
      %2017 = vmatprep.mubr.bf16.mxu0 %v1812
      %2018 = vmatmul.mubr.bf16.gmra.mxu0 %v1811
      %v2019 = vpop.f32.mrf.mxu0
      %v2020 = vadd.f32 %v1376, %v2019
      %v2021 = vpop.f32.mrf.mxu0
      %v2022 = vpop.f32.mrf.mxu0
      %v2023 = vadd.f32 %v1381, %v2022
      %v2024 = vpop.f32.mrf.mxu0
      %2025 = vmatprep.mubr.bf16.mxu0 %v1815
      %2026 = vmatmul.mubr.bf16.gmra.mxu0 %v1814
      %v2027 = vpop.f32.mrf.mxu0
      %v2028 = vadd.f32 %v1386, %v2027
      %v2029 = vpop.f32.mrf.mxu0
      %v2030 = vpop.f32.mrf.mxu0
      %v2031 = vadd.f32 %v1391, %v2030
      %v2032 = vpop.f32.mrf.mxu0
      %2033 = vmatprep.mubr.bf16.mxu0 %v1818
      %2034 = vmatmul.mubr.bf16.gmra.mxu0 %v1817
      %v2035 = vpop.f32.mrf.mxu0
      %v2036 = vadd.f32 %v1396, %v2035
      %v2037 = vpop.f32.mrf.mxu0
      %v2038 = vpop.f32.mrf.mxu0
      %v2039 = vadd.f32 %v1401, %v2038
      %v2040 = vpop.f32.mrf.mxu0
      %2041 = vmatprep.mubr.bf16.mxu0 %v1821
      %2042 = vmatmul.mubr.bf16.gmra.mxu0 %v1820
      %v2043 = vpop.f32.mrf.mxu0
      %v2044 = vadd.f32 %v1406, %v2043
      %v2045 = vpop.f32.mrf.mxu0
      %v2046 = vpop.f32.mrf.mxu0
      %v2047 = vadd.f32 %v1411, %v2046
      %v2048 = vpop.f32.mrf.mxu0
      %2049 = vmatprep.mubr.bf16.mxu0 %v1824
      %2050 = vmatmul.mubr.bf16.gmra.mxu0 %v1823
      %v2051 = vpop.f32.mrf.mxu0
      %v2052 = vadd.f32 %v1416, %v2051
      %v2053 = vpop.f32.mrf.mxu0
      %v2054 = vpop.f32.mrf.mxu0
      %v2055 = vadd.f32 %v1421, %v2054
      %v2056 = vpop.f32.mrf.mxu0
      %2057 = vmatprep.mubr.bf16.mxu0 %v1827
      %2058 = vmatmul.mubr.bf16.gmra.mxu0 %v1826
      %v2059 = vpop.f32.mrf.mxu0
      %v2060 = vadd.f32 %v1426, %v2059
      %v2061 = vpop.f32.mrf.mxu0
      %v2062 = vpop.f32.mrf.mxu0
      %v2063 = vadd.f32 %v1431, %v2062
      %v2064 = vpop.f32.mrf.mxu0
      %2065 = vmatprep.mubr.bf16.mxu0 %v1830
      %2066 = vmatmul.mubr.bf16.gmra.mxu0 %v1829
      %v2067 = vpop.f32.mrf.mxu0
      %v2068 = vadd.f32 %v1436, %v2067
      %v2069 = vpop.f32.mrf.mxu0
      %v2070 = vpop.f32.mrf.mxu0
      %v2071 = vadd.f32 %v1441, %v2070
      %v2072 = vpop.f32.mrf.mxu0
      %2073 = vmatprep.mubr.bf16.mxu0 %v1833
      %2074 = vmatmul.mubr.bf16.gmra.mxu0 %v1832
      %v2075 = vpop.f32.mrf.mxu0
      %v2076 = vadd.f32 %v1446, %v2075
      %v2077 = vpop.f32.mrf.mxu0
      %v2078 = vpop.f32.mrf.mxu0
      %v2079 = vadd.f32 %v1451, %v2078
      %v2080 = vpop.f32.mrf.mxu0
      %2081 = vmatprep.mubr.bf16.mxu0 %v1836
      %2082 = vmatmul.mubr.bf16.gmra.mxu0 %v1835
      %v2083 = vpop.f32.mrf.mxu0
      %v2084 = vadd.f32 %v1456, %v2083
      %v2085 = vpop.f32.mrf.mxu0
      %v2086 = vpop.f32.mrf.mxu0
      %v2087 = vadd.f32 %v1461, %v2086
      %v2088 = vpop.f32.mrf.mxu0
      %2089 = vmatprep.mubr.bf16.mxu0 %v1839
      %2090 = vmatmul.mubr.bf16.gmra.mxu0 %v1838
      %v2091 = vpop.f32.mrf.mxu0
      %v2092 = vadd.f32 %v1466, %v2091
      %v2093 = vpop.f32.mrf.mxu0
      %v2094 = vpop.f32.mrf.mxu0
      %v2095 = vadd.f32 %v1471, %v2094
      %v2096 = vpop.f32.mrf.mxu0
      %2097 = vmatprep.mubr.bf16.mxu0 %v1842
      %2098 = vmatmul.mubr.bf16.gmra.mxu0 %v1841
      %v2099 = vpop.f32.mrf.mxu0
      %v2100 = vadd.f32 %v1476, %v2099
      %v2101 = vpop.f32.mrf.mxu0
      %v2102 = vpop.f32.mrf.mxu0
      %v2103 = vadd.f32 %v1481, %v2102
      %v2104 = vpop.f32.mrf.mxu0
      %2105 = vmatprep.mubr.bf16.mxu0 %v1845
      %2106 = vmatmul.mubr.bf16.gmra.mxu0 %v1844
      %v2107 = vpop.f32.mrf.mxu0
      %v2108 = vadd.f32 %v1486, %v2107
      %v2109 = vpop.f32.mrf.mxu0
      %v2110 = vpop.f32.mrf.mxu0
      %v2111 = vadd.f32 %v1491, %v2110
      %v2112 = vpop.f32.mrf.mxu0
      %2113 = vmatprep.mubr.bf16.mxu0 %v1848
      %2114 = vmatmul.mubr.bf16.gmra.mxu0 %v1847
      %v2115 = vpop.f32.mrf.mxu0
      %v2116 = vadd.f32 %v1496, %v2115
      %v2117 = vpop.f32.mrf.mxu0
      %v2118 = vpop.f32.mrf.mxu0
      %v2119 = vadd.f32 %v1501, %v2118
      %v2120 = vpop.f32.mrf.mxu0
      %2121 = vmatprep.mubr.bf16.mxu0 %v1851
      %2122 = vmatmul.mubr.bf16.gmra.mxu0 %v1850
      %v2123 = vpop.f32.mrf.mxu0
      %v2124 = vadd.f32 %v1506, %v2123
      %v2125 = vpop.f32.mrf.mxu0
      %v2126 = vpop.f32.mrf.mxu0
      %v2127 = vadd.f32 %v1511, %v2126
      %v2128 = vpop.f32.mrf.mxu0
      %2129 = vmatprep.mubr.bf16.mxu0 %v1854
      %2130 = vmatmul.mubr.bf16.gmra.mxu0 %v1853
      %v2131 = vpop.f32.mrf.mxu0
      %v2132 = vadd.f32 %v1516, %v2131
      %v2133 = vpop.f32.mrf.mxu0
      %v2134 = vpop.f32.mrf.mxu0
      %v2135 = vadd.f32 %v1521, %v2134
      %v2136 = vpop.f32.mrf.mxu0
      %2137 = vmatprep.mubr.bf16.mxu0 %v1857
      %2138 = vmatmul.mubr.bf16.gmra.mxu0 %v1856
      %v2139 = vpop.f32.mrf.mxu0
      %v2140 = vadd.f32 %v1526, %v2139
      %v2141 = vpop.f32.mrf.mxu0
      %v2142 = vpop.f32.mrf.mxu0
      %v2143 = vadd.f32 %v1531, %v2142
      %v2144 = vpop.f32.mrf.mxu0
      %2145 = vmatprep.mubr.bf16.mxu0 %v1860
      %2146 = vmatmul.mubr.bf16.gmra.mxu0 %v1859
      %v2147 = vpop.f32.mrf.mxu0
      %v2148 = vadd.f32 %v1536, %v2147
      %v2149 = vpop.f32.mrf.mxu0
      %v2150 = vpop.f32.mrf.mxu0
      %v2151 = vadd.f32 %v1541, %v2150
      %v2152 = vpop.f32.mrf.mxu0
      %2153 = vmatprep.mubr.bf16.mxu0 %v1863
      %2154 = vmatmul.mubr.bf16.gmra.mxu0 %v1862
      %v2155 = vpop.f32.mrf.mxu0
      %v2156 = vadd.f32 %v1546, %v2155
      %v2157 = vpop.f32.mrf.mxu0
      %v2158 = vpop.f32.mrf.mxu0
      %v2159 = vadd.f32 %v1551, %v2158
      %v2160 = vpop.f32.mrf.mxu0
      %2161 = vdwg.mxu0
      %2162 = vmatprep.subr.bf16.mxu0 0
      %2163 = vmatpush1.bf16.msra.mxu0 %v1168
      %2164 = vmatprep.subr.bf16.mxu0 0
      %2165 = vmatpush1.bf16.msra.mxu0 %v1167
      %2166 = vmatprep.subr.bf16.mxu0 0
      %2167 = vmatpush1.bf16.msra.mxu0 %v1166
      %2168 = vmatprep.subr.bf16.mxu0 0
      %2169 = vmatpush1.bf16.msra.mxu0 %v1165
      %2170 = vmatprep.subr.bf16.mxu0 0
      %2171 = vmatpush1.bf16.msra.mxu0 %v1164
      %2172 = vmatprep.subr.bf16.mxu0 0
      %2173 = vmatpush1.bf16.msra.mxu0 %v1163
      %2174 = vmatprep.subr.bf16.mxu0 0
      %2175 = vmatpush1.bf16.msra.mxu0 %v1162
      %2176 = vmatprep.subr.bf16.mxu0 0
      %2177 = vmatpush1.bf16.msra.mxu0 %v1161
      %2178 = vmatprep.subr.bf16.mxu0 0
      %2179 = vmatpush2.bf16.msra.mxu0 0
      %2180 = vmatprep.subr.bf16.mxu0 0
      %2181 = vmatpush2.bf16.msra.mxu0 0
      %2182 = vmatprep.subr.bf16.mxu0 0
      %2183 = vmatpush2.bf16.msra.mxu0 0
      %2184 = vmatprep.subr.bf16.mxu0 0
      %2185 = vmatpush2.bf16.msra.mxu0 0
      %2186 = vmatprep.subr.bf16.mxu0 0
      %2187 = vmatpush2.bf16.msra.mxu0 0
      %2188 = vmatprep.subr.bf16.mxu0 0
      %2189 = vmatpush2.bf16.msra.mxu0 0
      %2190 = vmatprep.subr.bf16.mxu0 0
      %2191 = vmatpush2.bf16.msra.mxu0 0
      %2192 = vmatprep.subr.bf16.mxu0 0
      %2193 = vmatpush2.bf16.msra.mxu0 0
      %2194 = vmatprep.mubr.bf16.mxu0 0
      %2195 = vmatmul.mubr.bf16.gmra.mxu0 %v1795
      %v2196 = vpop.f32.mrf.mxu0
      %v2197 = vadd.f32 %v1972, %v2196
      %v2198 = vpop.f32.mrf.mxu0
      %v2199 = vpop.f32.mrf.mxu0
      %v2200 = vadd.f32 %v1975, %v2199
      %v2201 = vpop.f32.mrf.mxu0
      %2202 = vmatprep.mubr.bf16.mxu0 0
      %2203 = vmatmul.mubr.bf16.gmra.mxu0 %v1798
      %v2204 = vpop.f32.mrf.mxu0
      %v2205 = vadd.f32 %v1980, %v2204
      %v2206 = vpop.f32.mrf.mxu0
      %v2207 = vpop.f32.mrf.mxu0
      %v2208 = vadd.f32 %v1983, %v2207
      %v2209 = vpop.f32.mrf.mxu0
      %2210 = vmatprep.mubr.bf16.mxu0 0
      %2211 = vmatmul.mubr.bf16.gmra.mxu0 %v1801
      %v2212 = vpop.f32.mrf.mxu0
      %v2213 = vadd.f32 %v1988, %v2212
      %v2214 = vpop.f32.mrf.mxu0
      %v2215 = vpop.f32.mrf.mxu0
      %v2216 = vadd.f32 %v1991, %v2215
      %v2217 = vpop.f32.mrf.mxu0
      %2218 = vmatprep.mubr.bf16.mxu0 0
      %2219 = vmatmul.mubr.bf16.gmra.mxu0 %v1804
      %v2220 = vpop.f32.mrf.mxu0
      %v2221 = vadd.f32 %v1996, %v2220
      %v2222 = vpop.f32.mrf.mxu0
      %v2223 = vpop.f32.mrf.mxu0
      %v2224 = vadd.f32 %v1999, %v2223
      %v2225 = vpop.f32.mrf.mxu0
      %2226 = vmatprep.mubr.bf16.mxu0 0
      %2227 = vmatmul.mubr.bf16.gmra.mxu0 %v1807
      %v2228 = vpop.f32.mrf.mxu0
      %v2229 = vadd.f32 %v2004, %v2228
      %v2230 = vpop.f32.mrf.mxu0
      %v2231 = vpop.f32.mrf.mxu0
      %v2232 = vadd.f32 %v2007, %v2231
      %v2233 = vpop.f32.mrf.mxu0
      %2234 = vmatprep.mubr.bf16.mxu0 0
      %2235 = vmatmul.mubr.bf16.gmra.mxu0 %v1810
      %v2236 = vpop.f32.mrf.mxu0
      %v2237 = vadd.f32 %v2012, %v2236
      %v2238 = vpop.f32.mrf.mxu0
      %v2239 = vpop.f32.mrf.mxu0
      %v2240 = vadd.f32 %v2015, %v2239
      %v2241 = vpop.f32.mrf.mxu0
      %2242 = vmatprep.mubr.bf16.mxu0 0
      %2243 = vmatmul.mubr.bf16.gmra.mxu0 %v1813
      %v2244 = vpop.f32.mrf.mxu0
      %v2245 = vadd.f32 %v2020, %v2244
      %v2246 = vpop.f32.mrf.mxu0
      %v2247 = vpop.f32.mrf.mxu0
      %v2248 = vadd.f32 %v2023, %v2247
      %v2249 = vpop.f32.mrf.mxu0
      %2250 = vmatprep.mubr.bf16.mxu0 0
      %2251 = vmatmul.mubr.bf16.gmra.mxu0 %v1816
      %v2252 = vpop.f32.mrf.mxu0
      %v2253 = vadd.f32 %v2028, %v2252
      %v2254 = vpop.f32.mrf.mxu0
      %v2255 = vpop.f32.mrf.mxu0
      %v2256 = vadd.f32 %v2031, %v2255
      %v2257 = vpop.f32.mrf.mxu0
      %2258 = vmatprep.mubr.bf16.mxu0 0
      %2259 = vmatmul.mubr.bf16.gmra.mxu0 %v1819
      %v2260 = vpop.f32.mrf.mxu0
      %v2261 = vadd.f32 %v2036, %v2260
      %v2262 = vpop.f32.mrf.mxu0
      %v2263 = vpop.f32.mrf.mxu0
      %v2264 = vadd.f32 %v2039, %v2263
      %v2265 = vpop.f32.mrf.mxu0
      %2266 = vmatprep.mubr.bf16.mxu0 0
      %2267 = vmatmul.mubr.bf16.gmra.mxu0 %v1822
      %v2268 = vpop.f32.mrf.mxu0
      %v2269 = vadd.f32 %v2044, %v2268
      %v2270 = vpop.f32.mrf.mxu0
      %v2271 = vpop.f32.mrf.mxu0
      %v2272 = vadd.f32 %v2047, %v2271
      %v2273 = vpop.f32.mrf.mxu0
      %2274 = vmatprep.mubr.bf16.mxu0 0
      %2275 = vmatmul.mubr.bf16.gmra.mxu0 %v1825
      %v2276 = vpop.f32.mrf.mxu0
      %v2277 = vadd.f32 %v2052, %v2276
      %v2278 = vpop.f32.mrf.mxu0
      %v2279 = vpop.f32.mrf.mxu0
      %v2280 = vadd.f32 %v2055, %v2279
      %v2281 = vpop.f32.mrf.mxu0
      %2282 = vmatprep.mubr.bf16.mxu0 0
      %2283 = vmatmul.mubr.bf16.gmra.mxu0 %v1828
      %v2284 = vpop.f32.mrf.mxu0
      %v2285 = vadd.f32 %v2060, %v2284
      %v2286 = vpop.f32.mrf.mxu0
      %v2287 = vpop.f32.mrf.mxu0
      %v2288 = vadd.f32 %v2063, %v2287
      %v2289 = vpop.f32.mrf.mxu0
      %2290 = vmatprep.mubr.bf16.mxu0 0
      %2291 = vmatmul.mubr.bf16.gmra.mxu0 %v1831
      %v2292 = vpop.f32.mrf.mxu0
      %v2293 = vadd.f32 %v2068, %v2292
      %v2294 = vpop.f32.mrf.mxu0
      %v2295 = vpop.f32.mrf.mxu0
      %v2296 = vadd.f32 %v2071, %v2295
      %v2297 = vpop.f32.mrf.mxu0
      %2298 = vmatprep.mubr.bf16.mxu0 0
      %2299 = vmatmul.mubr.bf16.gmra.mxu0 %v1834
      %v2300 = vpop.f32.mrf.mxu0
      %v2301 = vadd.f32 %v2076, %v2300
      %v2302 = vpop.f32.mrf.mxu0
      %v2303 = vpop.f32.mrf.mxu0
      %v2304 = vadd.f32 %v2079, %v2303
      %v2305 = vpop.f32.mrf.mxu0
      %2306 = vmatprep.mubr.bf16.mxu0 0
      %2307 = vmatmul.mubr.bf16.gmra.mxu0 %v1837
      %v2308 = vpop.f32.mrf.mxu0
      %v2309 = vadd.f32 %v2084, %v2308
      %v2310 = vpop.f32.mrf.mxu0
      %v2311 = vpop.f32.mrf.mxu0
      %v2312 = vadd.f32 %v2087, %v2311
      %v2313 = vpop.f32.mrf.mxu0
      %2314 = vmatprep.mubr.bf16.mxu0 0
      %2315 = vmatmul.mubr.bf16.gmra.mxu0 %v1840
      %v2316 = vpop.f32.mrf.mxu0
      %v2317 = vadd.f32 %v2092, %v2316
      %v2318 = vpop.f32.mrf.mxu0
      %v2319 = vpop.f32.mrf.mxu0
      %v2320 = vadd.f32 %v2095, %v2319
      %v2321 = vpop.f32.mrf.mxu0
      %2322 = vmatprep.mubr.bf16.mxu0 0
      %2323 = vmatmul.mubr.bf16.gmra.mxu0 %v1843
      %v2324 = vpop.f32.mrf.mxu0
      %v2325 = vadd.f32 %v2100, %v2324
      %v2326 = vpop.f32.mrf.mxu0
      %v2327 = vpop.f32.mrf.mxu0
      %v2328 = vadd.f32 %v2103, %v2327
      %v2329 = vpop.f32.mrf.mxu0
      %2330 = vmatprep.mubr.bf16.mxu0 0
      %2331 = vmatmul.mubr.bf16.gmra.mxu0 %v1846
      %v2332 = vpop.f32.mrf.mxu0
      %v2333 = vadd.f32 %v2108, %v2332
      %v2334 = vpop.f32.mrf.mxu0
      %v2335 = vpop.f32.mrf.mxu0
      %v2336 = vadd.f32 %v2111, %v2335
      %v2337 = vpop.f32.mrf.mxu0
      %2338 = vmatprep.mubr.bf16.mxu0 0
      %2339 = vmatmul.mubr.bf16.gmra.mxu0 %v1849
      %v2340 = vpop.f32.mrf.mxu0
      %v2341 = vadd.f32 %v2116, %v2340
      %v2342 = vpop.f32.mrf.mxu0
      %v2343 = vpop.f32.mrf.mxu0
      %v2344 = vadd.f32 %v2119, %v2343
      %v2345 = vpop.f32.mrf.mxu0
      %2346 = vmatprep.mubr.bf16.mxu0 0
      %2347 = vmatmul.mubr.bf16.gmra.mxu0 %v1852
      %v2348 = vpop.f32.mrf.mxu0
      %v2349 = vadd.f32 %v2124, %v2348
      %v2350 = vpop.f32.mrf.mxu0
      %v2351 = vpop.f32.mrf.mxu0
      %v2352 = vadd.f32 %v2127, %v2351
      %v2353 = vpop.f32.mrf.mxu0
      %2354 = vmatprep.mubr.bf16.mxu0 0
      %2355 = vmatmul.mubr.bf16.gmra.mxu0 %v1855
      %v2356 = vpop.f32.mrf.mxu0
      %v2357 = vadd.f32 %v2132, %v2356
      %v2358 = vpop.f32.mrf.mxu0
      %v2359 = vpop.f32.mrf.mxu0
      %v2360 = vadd.f32 %v2135, %v2359
      %v2361 = vpop.f32.mrf.mxu0
      %2362 = vmatprep.mubr.bf16.mxu0 0
      %2363 = vmatmul.mubr.bf16.gmra.mxu0 %v1858
      %v2364 = vpop.f32.mrf.mxu0
      %v2365 = vadd.f32 %v2140, %v2364
      %v2366 = vpop.f32.mrf.mxu0
      %v2367 = vpop.f32.mrf.mxu0
      %v2368 = vadd.f32 %v2143, %v2367
      %v2369 = vpop.f32.mrf.mxu0
      %2370 = vmatprep.mubr.bf16.mxu0 0
      %2371 = vmatmul.mubr.bf16.gmra.mxu0 %v1861
      %v2372 = vpop.f32.mrf.mxu0
      %v2373 = vadd.f32 %v2148, %v2372
      %v2374 = vpop.f32.mrf.mxu0
      %v2375 = vpop.f32.mrf.mxu0
      %v2376 = vadd.f32 %v2151, %v2375
      %v2377 = vpop.f32.mrf.mxu0
      %2378 = vmatprep.mubr.bf16.mxu0 0
      %2379 = vmatmul.mubr.bf16.gmra.mxu0 %v1864
      %v2380 = vpop.f32.mrf.mxu0
      %v2381 = vadd.f32 %v2156, %v2380
      %v2382 = vpop.f32.mrf.mxu0
      %v2383 = vpop.f32.mrf.mxu0
      %v2384 = vadd.f32 %v2159, %v2383
      %v2385 = vpop.f32.mrf.mxu0
      %2386 = vdwg.mxu0
      %v2387 = vmax.f32 %v2197, 0.0
      %v2388 = vmax.f32 %v2200, 0.0
      %v2389 = vmax.f32 %v2205, 0.0
      %v2390 = vmax.f32 %v2208, 0.0
      %v2391 = vmax.f32 %v2213, 0.0
      %v2392 = vmax.f32 %v2216, 0.0
      %v2393 = vmax.f32 %v2221, 0.0
      %v2394 = vmax.f32 %v2224, 0.0
      %v2395 = vmax.f32 %v2229, 0.0
      %v2396 = vmax.f32 %v2232, 0.0
      %v2397 = vmax.f32 %v2237, 0.0
      %v2398 = vmax.f32 %v2240, 0.0
      %v2399 = vmax.f32 %v2245, 0.0
      %v2400 = vmax.f32 %v2248, 0.0
      %v2401 = vmax.f32 %v2253, 0.0
      %v2402 = vmax.f32 %v2256, 0.0
      %v2403 = vmax.f32 %v2261, 0.0
      %v2404 = vmax.f32 %v2264, 0.0
      %v2405 = vmax.f32 %v2269, 0.0
      %v2406 = vmax.f32 %v2272, 0.0
      %v2407 = vmax.f32 %v2277, 0.0
      %v2408 = vmax.f32 %v2280, 0.0
      %v2409 = vmax.f32 %v2285, 0.0
      %v2410 = vmax.f32 %v2288, 0.0
      %v2411 = vmax.f32 %v2293, 0.0
      %v2412 = vmax.f32 %v2296, 0.0
      %v2413 = vmax.f32 %v2301, 0.0
      %v2414 = vmax.f32 %v2304, 0.0
      %v2415 = vmax.f32 %v2309, 0.0
      %v2416 = vmax.f32 %v2312, 0.0
      %v2417 = vmax.f32 %v2317, 0.0
      %v2418 = vmax.f32 %v2320, 0.0
      %v2419 = vmax.f32 %v2325, 0.0
      %v2420 = vmax.f32 %v2328, 0.0
      %v2421 = vmax.f32 %v2333, 0.0
      %v2422 = vmax.f32 %v2336, 0.0
      %v2423 = vmax.f32 %v2341, 0.0
      %v2424 = vmax.f32 %v2344, 0.0
      %v2425 = vmax.f32 %v2349, 0.0
      %v2426 = vmax.f32 %v2352, 0.0
      %v2427 = vmax.f32 %v2357, 0.0
      %v2428 = vmax.f32 %v2360, 0.0
      %v2429 = vmax.f32 %v2365, 0.0
      %v2430 = vmax.f32 %v2368, 0.0
      %v2431 = vmax.f32 %v2373, 0.0
      %v2432 = vmax.f32 %v2376, 0.0
      %v2433 = vmax.f32 %v2381, 0.0
      %v2434 = vmax.f32 %v2384, 0.0
      %v2435 = vpack.c.bf16 %v2388, %v2387
      %v2436 = vpack.c.bf16 %v2390, %v2389
      %v2437 = vpack.c.bf16 %v2392, %v2391
      %v2438 = vpack.c.bf16 %v2394, %v2393
      %v2439 = vpack.c.bf16 %v2396, %v2395
      %v2440 = vpack.c.bf16 %v2398, %v2397
      %v2441 = vpack.c.bf16 %v2400, %v2399
      %v2442 = vpack.c.bf16 %v2402, %v2401
      %v2443 = vpack.c.bf16 %v2404, %v2403
      %v2444 = vpack.c.bf16 %v2406, %v2405
      %v2445 = vpack.c.bf16 %v2408, %v2407
      %v2446 = vpack.c.bf16 %v2410, %v2409
      %v2447 = vpack.c.bf16 %v2412, %v2411
      %v2448 = vpack.c.bf16 %v2414, %v2413
      %v2449 = vpack.c.bf16 %v2416, %v2415
      %v2450 = vpack.c.bf16 %v2418, %v2417
      %v2451 = vpack.c.bf16 %v2420, %v2419
      %v2452 = vpack.c.bf16 %v2422, %v2421
      %v2453 = vpack.c.bf16 %v2424, %v2423
      %v2454 = vpack.c.bf16 %v2426, %v2425
      %v2455 = vpack.c.bf16 %v2428, %v2427
      %v2456 = vpack.c.bf16 %v2430, %v2429
      %v2457 = vpack.c.bf16 %v2432, %v2431
      %v2458 = vpack.c.bf16 %v2434, %v2433
      %v2459 = vld [vmem:[%s5] sm:$0xff]
      %v2460 = vld [vmem:[%s5 + $0x8] sm:$0xf]
      %v2461 = vld [vmem:[%s5 + $0xc] sm:$0xff]
      %v2462 = vld [vmem:[%s5 + $0x14] sm:$0xf]
      %v2463 = vld [vmem:[%s5 + $0x18] sm:$0xff]
      %v2464 = vld [vmem:[%s5 + $0x20] sm:$0xf]
      %v2465 = vld [vmem:[%s5 + $0x24] sm:$0xff]
      %v2466 = vld [vmem:[%s5 + $0x2c] sm:$0xf]
      %v2467 = vld [vmem:[%s6] sm:$0xff]
      %v2468 = vld [vmem:[%s6 + $0x8] sm:$0xff]
      %v2469 = vld [vmem:[%s6 + $0x10] sm:$0xff]
      %v2470 = vld [vmem:[%s6 + $0x18] sm:$0xff]
      %2472 = vset.pattern.permute.xlu0 0
      %2473 = vperm.xlu0 %2472, %v2467
      %v2474 = vpop.permute.xlu0 %2473
      %2477 = vset.pattern.permute.xlu0 0
      %2478 = vperm.xlu0 %2477, %v2468
      %v2479 = vpop.permute.xlu0 %2478
      %2482 = vset.pattern.permute.xlu0 0
      %2483 = vperm.xlu0 %2482, %v2469
      %v2484 = vpop.permute.xlu0 %2483
      %2487 = vset.pattern.permute.xlu0 0
      %2488 = vperm.xlu0 %2487, %v2470
      %v2489 = vpop.permute.xlu0 %2488
      %v2499 = vunpack.c.l.b16 %v2459
      %v2500 = vunpack.c.h.b16 %v2459
      %v2501 = vunpack.c.l.b16 %v2460
      %v2502 = vunpack.c.l.b16 %v2461
      %v2503 = vunpack.c.h.b16 %v2461
      %v2504 = vunpack.c.l.b16 %v2462
      %v2505 = vunpack.c.l.b16 %v2463
      %v2506 = vunpack.c.h.b16 %v2463
      %v2507 = vunpack.c.l.b16 %v2464
      %v2508 = vunpack.c.l.b16 %v2465
      %v2509 = vunpack.c.h.b16 %v2465
      %v2510 = vunpack.c.l.b16 %v2466
      %v2511 = vpack.c.b16 %v2502, %v2499
      %v2512 = vpack.c.b16 %v2503, %v2500
      %v2513 = vpack.c.b16 %v2504, %v2501
      %v2514 = vpack.c.b16 %v2508, %v2505
      %v2515 = vpack.c.b16 %v2509, %v2506
      %v2516 = vpack.c.b16 %v2510, %v2507
      %2523 = vmatprep.subr.bf16.mxu0 0
      %2524 = vmatpush1.bf16.msra.mxu0 %v2442
      %2525 = vmatprep.subr.bf16.mxu0 0
      %2526 = vmatpush1.bf16.msra.mxu0 %v2441
      %2527 = vmatprep.subr.bf16.mxu0 0
      %2528 = vmatpush1.bf16.msra.mxu0 %v2440
      %2529 = vmatprep.subr.bf16.mxu0 0
      %2530 = vmatpush1.bf16.msra.mxu0 %v2439
      %2531 = vmatprep.subr.bf16.mxu0 0
      %2532 = vmatpush1.bf16.msra.mxu0 %v2438
      %2533 = vmatprep.subr.bf16.mxu0 0
      %2534 = vmatpush1.bf16.msra.mxu0 %v2437
      %2535 = vmatprep.subr.bf16.mxu0 0
      %2536 = vmatpush1.bf16.msra.mxu0 %v2436
      %2537 = vmatprep.subr.bf16.mxu0 0
      %2538 = vmatpush1.bf16.msra.mxu0 %v2435
      %2539 = vmatprep.subr.bf16.mxu0 0
      %2540 = vmatpush2.bf16.msra.mxu0 %v2450
      %2541 = vmatprep.subr.bf16.mxu0 0
      %2542 = vmatpush2.bf16.msra.mxu0 %v2449
      %2543 = vmatprep.subr.bf16.mxu0 0
      %2544 = vmatpush2.bf16.msra.mxu0 %v2448
      %2545 = vmatprep.subr.bf16.mxu0 0
      %2546 = vmatpush2.bf16.msra.mxu0 %v2447
      %2547 = vmatprep.subr.bf16.mxu0 0
      %2548 = vmatpush2.bf16.msra.mxu0 %v2446
      %2549 = vmatprep.subr.bf16.mxu0 0
      %2550 = vmatpush2.bf16.msra.mxu0 %v2445
      %2551 = vmatprep.subr.bf16.mxu0 0
      %2552 = vmatpush2.bf16.msra.mxu0 %v2444
      %2553 = vmatprep.subr.bf16.mxu0 0
      %2554 = vmatpush2.bf16.msra.mxu0 %v2443
      %2555 = vmatprep.mubr.bf16.mxu0 %v2512
      %2556 = vmatmul.mubr.bf16.gmra.mxu0 %v2511
      %v2557 = vpop.f32.mrf.mxu0
      %v2558 = vadd.f32 %v2474, %v2557
      %v2559 = vpop.f32.mrf.mxu0
      %v2560 = vpop.f32.mrf.mxu0
      %v2561 = vadd.f32 %v2479, %v2560
      %v2562 = vpop.f32.mrf.mxu0
      %2563 = vmatprep.mubr.bf16.mxu0 %v2515
      %2564 = vmatmul.mubr.bf16.gmra.mxu0 %v2514
      %v2565 = vpop.f32.mrf.mxu0
      %v2566 = vadd.f32 %v2484, %v2565
      %v2567 = vpop.f32.mrf.mxu0
      %v2568 = vpop.f32.mrf.mxu0
      %v2569 = vadd.f32 %v2489, %v2568
      %v2570 = vpop.f32.mrf.mxu0
      %2571 = vdwg.mxu0
      %2572 = vmatprep.subr.bf16.mxu0 0
      %2573 = vmatpush1.bf16.msra.mxu0 %v2458
      %2574 = vmatprep.subr.bf16.mxu0 0
      %2575 = vmatpush1.bf16.msra.mxu0 %v2457
      %2576 = vmatprep.subr.bf16.mxu0 0
      %2577 = vmatpush1.bf16.msra.mxu0 %v2456
      %2578 = vmatprep.subr.bf16.mxu0 0
      %2579 = vmatpush1.bf16.msra.mxu0 %v2455
      %2580 = vmatprep.subr.bf16.mxu0 0
      %2581 = vmatpush1.bf16.msra.mxu0 %v2454
      %2582 = vmatprep.subr.bf16.mxu0 0
      %2583 = vmatpush1.bf16.msra.mxu0 %v2453
      %2584 = vmatprep.subr.bf16.mxu0 0
      %2585 = vmatpush1.bf16.msra.mxu0 %v2452
      %2586 = vmatprep.subr.bf16.mxu0 0
      %2587 = vmatpush1.bf16.msra.mxu0 %v2451
      %2588 = vmatprep.subr.bf16.mxu0 0
      %2589 = vmatpush2.bf16.msra.mxu0 0
      %2590 = vmatprep.subr.bf16.mxu0 0
      %2591 = vmatpush2.bf16.msra.mxu0 0
      %2592 = vmatprep.subr.bf16.mxu0 0
      %2593 = vmatpush2.bf16.msra.mxu0 0
      %2594 = vmatprep.subr.bf16.mxu0 0
      %2595 = vmatpush2.bf16.msra.mxu0 0
      %2596 = vmatprep.subr.bf16.mxu0 0
      %2597 = vmatpush2.bf16.msra.mxu0 0
      %2598 = vmatprep.subr.bf16.mxu0 0
      %2599 = vmatpush2.bf16.msra.mxu0 0
      %2600 = vmatprep.subr.bf16.mxu0 0
      %2601 = vmatpush2.bf16.msra.mxu0 0
      %2602 = vmatprep.subr.bf16.mxu0 0
      %2603 = vmatpush2.bf16.msra.mxu0 0
      %2604 = vmatprep.mubr.bf16.mxu0 0
      %2605 = vmatmul.mubr.bf16.gmra.mxu0 %v2513
      %v2606 = vpop.f32.mrf.mxu0
      %v2607 = vadd.f32 %v2558, %v2606
      %v2608 = vpop.f32.mrf.mxu0
      %v2609 = vpop.f32.mrf.mxu0
      %v2610 = vadd.f32 %v2561, %v2609
      %v2611 = vpop.f32.mrf.mxu0
      %2612 = vmatprep.mubr.bf16.mxu0 0
      %2613 = vmatmul.mubr.bf16.gmra.mxu0 %v2516
      %v2614 = vpop.f32.mrf.mxu0
      %v2615 = vadd.f32 %v2566, %v2614
      %v2616 = vpop.f32.mrf.mxu0
      %v2617 = vpop.f32.mrf.mxu0
      %v2618 = vadd.f32 %v2569, %v2617
      %v2619 = vpop.f32.mrf.mxu0
      %2620 = vdwg.mxu0
      %v2621 = vpack.c.bf16 %v2610, %v2607
      %v2622 = vpack.c.bf16 %v2618, %v2615
      %v2625 = vunpack.c.l.b16 %v2621
      %v2626 = vunpack.c.h.b16 %v2621
      %v2627 = vunpack.c.l.b16 %v2622
      %v2628 = vunpack.c.h.b16 %v2622
      %v2629 = vpack.c.b16 %v2625, %v2625
      %v2630 = vpack.c.b16 %v2626, %v2626
      %v2631 = vpack.c.b16 %v2627, %v2627
      %v2632 = vpack.c.b16 %v2628, %v2628
      %vm2637 = vcmask 125952
      %2638 = vst.msk [vmem:[%s309] sm:$0xf] %vm2637, %v2629
      %2639 = vst.msk [vmem:[%s309 + $0x4] sm:$0xf] %vm2637, %v2630
      %2640 = vst.msk [vmem:[%s309 + $0x8] sm:$0xf] %vm2637, %v2631
      %2641 = vst.msk [vmem:[%s309 + $0xc] sm:$0xf] %vm2637, %v2632
      %p2642 = scmp.lt.s32.totalorder %s22, 1
      %s2643 = scalar_select %p2642, %s22, 1
      %p2644 = scmp.lt.s32.totalorder %s23, 0
      %s2645 = scalar_select %p2644, %s23, 0
      %s2646 = smul.addr %s2643, 4
      %s2647 = sadd.s32 %s2645, %s2646
      %s2648 = smul.addr %s2647, 4
      %s2649 = scalar_lea.vmem %s7, %s2648
      // Predicated region
      $region49: #{uhrnet_forward.2} parent=47 // pred_check
        %p2650 = pneg %p204
      $region50: #{uhrnet_forward.2} parent=47 // pred_check_branch
        %2652 = sbr.rel (%p2650) target = $region52
      $region51: #{uhrnet_forward.2} parent=47 // pred_region
        _
      $region52: #{uhrnet_forward.2} parent=47 // pred_fallthru
        _
    $region48: #{uhrnet_forward.2} parent=5 // pred_fallthru
      _
    %p2653 = scmp.le.s32.totalorder 2, %s13
    // Predicated region
    $region53: #{uhrnet_forward.2} parent=5 // pred_check
      %p2654 = pneg %p2653
    $region54: #{uhrnet_forward.2} parent=5 // pred_check_branch
      %2656 = sbr.rel (%p2654) target = $region56
    $region55: #{uhrnet_forward.2} parent=5 // pred_region
      %s2657 = ssub.s32 %s13, 2
      // Predicated region
      $region57: #{uhrnet_forward.2} parent=55 // pred_check
        %p2658 = pneg %p210
      $region58: #{uhrnet_forward.2} parent=55 // pred_check_branch
        %2660 = sbr.rel (%p2658) target = $region60
      $region59: #{uhrnet_forward.2} parent=55 // pred_region
        %p2661 = scmp.lt.s32.totalorder %s24, 1
        %s2662 = scalar_select %p2661, %s24, 1
        %p2663 = scmp.lt.s32.totalorder %s25, 0
        %s2664 = scalar_select %p2663, %s25, 0
        %s2665 = smul.addr %s2662, 4
        %s2666 = sadd.s32 %s2664, %s2665
        %s2667 = smul.addr %s2666, 4
        %s2668 = scalar_lea.vmem %s7, %s2667
      $region60: #{uhrnet_forward.2} parent=55 // pred_fallthru
        _
    $region56: #{uhrnet_forward.2} parent=5 // pred_fallthru
      _
  $region6: #{uhrnet_forward.2} parent=0 // loop_footer
    %s17 = sadd.s32 1, %s13
  $region7: #{uhrnet_forward.2} parent=0 // loop_footer_branch
    %12 = sbr.rel target = $region3
  $region8: #{uhrnet_forward.2} parent=0 // loop_exit
    _

</llo_original>
